<compile_context>
chip_gen: v6e
topology: v6e:2x2x1
jax: 0.10.0
libtpu: 0.0.40
codegen_flags: <defaults>
</compile_context>

<pallas_src>
import jax
import jax.numpy as jnp
from jax.experimental import pallas as pl
from jax.experimental.pallas import tpu as pltpu

V = 64   # output_size (vocab)
H = 32   # hidden_size
L = 10   # max_length

# --- weight-slab row offsets -------------------------------------------------
# Embedding: vocab row v lives at slab row v*8 (8-row aligned), lanes 0:H.
ROW_EMB    = 0
ROW_HFUSE  = V * 8              # (H,128): [ATTN_H(0:L) | pad | W_HR.T(32:64) | W_HZ.T(64:96) | W_HN.T(96:128)]
ROW_EFUSE  = ROW_HFUSE + H      # (H, 64): [ATTN_E(0:L) | pad | COMB_E.T(32:64)]
ROW_XFUSE  = ROW_EFUSE + H      # (H, 96): [W_IR.T(0:32) | W_IZ.T(32:64) | W_IN.T(64:96)]
ROW_COMB_A = ROW_XFUSE + H      # (H, H):  attn_combine, attn_applied half
ROW_OUT_W  = ROW_COMB_A + H     # (H, V):  output projection
ROW_BIAS_H = ROW_OUT_W + H      # [attn_b(0:L) | b_hh_r(32:64) | b_hh_z(64:96) | b_hh_n(96:128)]
ROW_BIAS_E = ROW_BIAS_H + 8     # [zeros(0:L) | comb_b(32:64)]
ROW_BIAS_X = ROW_BIAS_E + 8     # [b_ih_r(0:32) | b_ih_z(32:64) | b_ih_n(64:96)]
ROW_BIAS_O = ROW_BIAS_X + 8     # [out_b(0:V)]
SLAB_ROWS  = ROW_BIAS_O + 8     # = 704 rows -> ~352 KiB, trivially VMEM-resident


def attn_decoder_kernel(tok_ref, hid0_ref, enc_ref, slab_ref, out_ref):
    T = out_ref.shape[0]

    # zero-init the packed output block once (clears the pad lanes)
    out_ref[...] = jnp.zeros_like(out_ref)

    enc = enc_ref[...]                                              # (L, H)

    # loop-invariant weight/bias reads, hoisted out of the unrolled loop
    w_h   = slab_ref[ROW_HFUSE:ROW_HFUSE + H, :]                    # (H, 128)
    w_e   = slab_ref[ROW_EFUSE:ROW_EFUSE + H, 0:2 * H]              # (H, 64)
    w_x   = slab_ref[ROW_XFUSE:ROW_XFUSE + H, 0:3 * H]              # (H, 96)
    w_ca  = slab_ref[ROW_COMB_A:ROW_COMB_A + H, 0:H]                # (H, H)
    w_out = slab_ref[ROW_OUT_W:ROW_OUT_W + H, 0:V]                  # (H, V)
    b_h   = slab_ref[ROW_BIAS_H:ROW_BIAS_H + 1, :]                  # (1, 128)
    b_e   = slab_ref[ROW_BIAS_E:ROW_BIAS_E + 1, 0:2 * H]            # (1, 64)
    b_x   = slab_ref[ROW_BIAS_X:ROW_BIAS_X + 1, 0:3 * H]            # (1, 96)
    b_out = slab_ref[ROW_BIAS_O:ROW_BIAS_O + 1, 0:V]                # (1, V)

    h = hid0_ref[...]                                               # (1, H)

    for t in range(T):                                              # static unroll over T
        # --- embedding lookup: 8-row-aligned dynamic slice of the slab ---
        # TODO(synk): PyTorch nn.Embedding raises on out-of-range ids; we clamp instead.
        tok = jnp.clip(tok_ref[t], 0, V - 1)
        row = pl.multiple_of(tok * 8, 8)
        embedded = slab_ref[pl.ds(row, 1), 0:H]                     # (1, H)
        # TODO(synk): nn.Dropout(p=0.2) is eval-mode identity here (no RNG mask applied).

        # --- fused matmuls (shared LHS -> lane-packed RHS) ---
        res_e = jnp.dot(embedded, w_e, preferred_element_type=jnp.float32) + b_e   # (1, 64)
        res_h = jnp.dot(h, w_h, preferred_element_type=jnp.float32) + b_h          # (1, 128)

        # attention weights = softmax(attn(cat([embedded, h]))); attn_b lives in b_h[0:L]
        attn_logits = res_e[:, 0:L] + res_h[:, 0:L]                 # (1, L)
        m = jnp.max(attn_logits, axis=-1, keepdims=True)
        ex = jnp.exp(attn_logits - m)
        attn_w = ex / jnp.sum(ex, axis=-1, keepdims=True)           # exact normalization

        attn_applied = jnp.dot(attn_w, enc,
                               preferred_element_type=jnp.float32)  # (1, H)

        # attn_combine + relu (comb_b already inside res_e lanes 32:64)
        x = jnp.maximum(
            res_e[:, H:2 * H]
            + jnp.dot(attn_applied, w_ca, preferred_element_type=jnp.float32),
            0.0)                                                    # (1, H)

        # --- single-step GRU, gate order r, z, n (PyTorch) ---
        res_x = jnp.dot(x, w_x, preferred_element_type=jnp.float32) + b_x          # (1, 96)
        r = jax.nn.sigmoid(res_x[:, 0:H]       + res_h[:, H:2 * H])
        z = jax.nn.sigmoid(res_x[:, H:2 * H]   + res_h[:, 2 * H:3 * H])
        n = jnp.tanh(res_x[:, 2 * H:3 * H] + r * res_h[:, 3 * H:4 * H])
        h = (1.0 - z) * n + z * h                                   # (1, H)

        # --- output projection + log_softmax ---
        logits = jnp.dot(h, w_out, preferred_element_type=jnp.float32) + b_out     # (1, V)
        shifted = logits - jnp.max(logits, axis=-1, keepdims=True)
        logp = shifted - jnp.log(jnp.sum(jnp.exp(shifted), axis=-1, keepdims=True))

        # direct static lane-range stores into row t of the resident (T,128) block
        out_ref[t:t + 1, 0:V] = logp
        out_ref[t:t + 1, V:V + H] = h
        out_ref[t:t + 1, V + H:V + H + L] = attn_w


def attn_decoder_decode(slab, tokens, hidden, encoder_outputs):
    """Fused T-step decode (teacher-forced tokens) in a single pallas_call.

    tokens: (T,) int32; hidden: (1,1,H) f32; encoder_outputs: (L,H) f32.
    Returns (logp_seq (T,V), hidden_seq (T,H), attn_seq (T,L)); each step is exactly
    AttnDecoderRNN.forward with the hidden state carried forward.
    """
    T = int(tokens.shape[0])
    tokens = jnp.asarray(tokens, jnp.int32).reshape(T)
    hid0 = jnp.asarray(hidden, jnp.float32).reshape(1, H)
    enc = jnp.asarray(encoder_outputs, jnp.float32)

    grid_spec = pltpu.PrefetchScalarGridSpec(
        num_scalar_prefetch=1,                                      # tokens -> SMEM
        grid=(1,),                                                  # single invocation; loop is in-kernel
        in_specs=[
            pl.BlockSpec((1, H), lambda i, tok: (0, 0)),            # initial hidden
            pl.BlockSpec((L, H), lambda i, tok: (0, 0)),            # encoder outputs
            pl.BlockSpec((SLAB_ROWS, 128), lambda i, tok: (0, 0)),  # weight slab (resident)
        ],
        out_specs=pl.BlockSpec((T, 128), lambda i, tok: (0, 0)),    # full packed output block
    )

    packed = pl.pallas_call(
        attn_decoder_kernel,
        out_shape=jax.ShapeDtypeStruct((T, 128), jnp.float32),
        grid_spec=grid_spec,
        compiler_params=pltpu.CompilerParams(dimension_semantics=("arbitrary",)),
    )(tokens, hid0, enc, slab)

    logp_seq = packed[:, 0:V]
    hid_seq = packed[:, V:V + H]
    attn_seq = packed[:, V + H:V + H + L]
    return logp_seq, hid_seq, attn_seq


def attn_decoder_forward(slab, token, hidden, encoder_outputs):
    """Single step matching AttnDecoderRNN.forward: (logp (1,V), hidden (1,1,H), attn_w (1,L))."""
    tokens = jnp.asarray(token, jnp.int32).reshape(1)
    logp, hid, aw = attn_decoder_decode(slab, tokens, hidden, encoder_outputs)
    return logp, hid.reshape(1, 1, H), aw


# ------------------------- parameter handling (host side) ---------------------
def init_params(key):
    """PyTorch-layout parameters."""
    ks = jax.random.split(key, 11)
    s_h = 1.0 / jnp.sqrt(H)
    s_2h = 1.0 / jnp.sqrt(2 * H)

    def u(k, shape, s):
        return jax.random.uniform(k, shape, jnp.float32, -s, s)

    return {
        "emb":    jax.random.normal(ks[0], (V, H), jnp.float32),
        "attn_w": u(ks[1], (L, 2 * H), s_2h), "attn_b": u(ks[2], (L,), s_2h),
        "comb_w": u(ks[3], (H, 2 * H), s_2h), "comb_b": u(ks[4], (H,), s_2h),
        "w_ih":   u(ks[5], (3 * H, H), s_h),  "w_hh":   u(ks[6], (3 * H, H), s_h),
        "b_ih":   u(ks[7], (3 * H,), s_h),    "b_hh":   u(ks[8], (3 * H,), s_h),
        "out_w":  u(ks[9], (V, H), s_h),      "out_b":  u(ks[10], (V,), s_h),
    }


def pack_slab(p):
    """Pack all weights/biases into one (SLAB_ROWS, 128) f32 slab, lane-fused per LHS."""
    slab = jnp.zeros((SLAB_ROWS, 128), jnp.float32)

    def put(s, row, col, mat):
        mat = jnp.asarray(mat, jnp.float32)
        if mat.ndim == 1:
            mat = mat[None, :]
        return s.at[row:row + mat.shape[0], col:col + mat.shape[1]].set(mat)

    # embedding: vocab row v -> slab row v*8 (sublane-tile aligned)
    slab = slab.at[ROW_EMB:ROW_EMB + V * 8:8, 0:H].set(jnp.asarray(p["emb"], jnp.float32))

    # h-fused block: [ATTN_H | W_HR.T | W_HZ.T | W_HN.T]
    slab = put(slab, ROW_HFUSE, 0,  p["attn_w"][:, H:].T)
    slab = put(slab, ROW_HFUSE, 32, p["w_hh"][0:H, :].T)
    slab = put(slab, ROW_HFUSE, 64, p["w_hh"][H:2 * H, :].T)
    slab = put(slab, ROW_HFUSE, 96, p["w_hh"][2 * H:3 * H, :].T)

    # embedded-fused block: [ATTN_E | COMB_E.T]
    slab = put(slab, ROW_EFUSE, 0,  p["attn_w"][:, :H].T)
    slab = put(slab, ROW_EFUSE, 32, p["comb_w"][:, :H].T)

    # x-fused block: [W_IR.T | W_IZ.T | W_IN.T]
    slab = put(slab, ROW_XFUSE, 0,  p["w_ih"][0:H, :].T)
    slab = put(slab, ROW_XFUSE, 32, p["w_ih"][H:2 * H, :].T)
    slab = put(slab, ROW_XFUSE, 64, p["w_ih"][2 * H:3 * H, :].T)

    slab = put(slab, ROW_COMB_A, 0, p["comb_w"][:, H:].T)
    slab = put(slab, ROW_OUT_W,  0, p["out_w"].T)

    # fused bias rows (each bias added exactly once across the fused matmuls)
    slab = put(slab, ROW_BIAS_H, 0,  p["attn_b"])
    slab = put(slab, ROW_BIAS_H, 32, p["b_hh"][0:H])
    slab = put(slab, ROW_BIAS_H, 64, p["b_hh"][H:2 * H])
    slab = put(slab, ROW_BIAS_H, 96, p["b_hh"][2 * H:3 * H])
    slab = put(slab, ROW_BIAS_E, 32, p["comb_b"])
    slab = put(slab, ROW_BIAS_X, 0,  p["b_ih"][0:H])
    slab = put(slab, ROW_BIAS_X, 32, p["b_ih"][H:2 * H])
    slab = put(slab, ROW_BIAS_X, 64, p["b_ih"][2 * H:3 * H])
    slab = put(slab, ROW_BIAS_O, 0,  p["out_b"])
    return slab


# ------------------------- pure-JAX reference (correctness) -------------------
def _ref_step(p, tok, h, enc):
    emb = p["emb"][tok]
    aw = jax.nn.softmax(p["attn_w"] @ jnp.concatenate([emb, h]) + p["attn_b"])
    applied = aw @ enc
    x = jax.nn.relu(p["comb_w"] @ jnp.concatenate([emb, applied]) + p["comb_b"])
    gi = p["w_ih"] @ x + p["b_ih"]
    gh = p["w_hh"] @ h + p["b_hh"]
    r = jax.nn.sigmoid(gi[:H] + gh[:H])
    z = jax.nn.sigmoid(gi[H:2 * H] + gh[H:2 * H])
    n = jnp.tanh(gi[2 * H:] + r * gh[2 * H:])
    h_new = (1.0 - z) * n + z * h
    logp = jax.nn.log_softmax(p["out_w"] @ h_new + p["out_b"])
    return logp, h_new, aw


def _ref_decode(p, tokens, hidden, enc):
    h = hidden.reshape(H)
    lps, hs, aws = [], [], []
    for t in range(tokens.shape[0]):
        lp, h, aw = _ref_step(p, tokens[t], h, enc)
        lps.append(lp); hs.append(h); aws.append(aw)
    return jnp.stack(lps), jnp.stack(hs), jnp.stack(aws)


if __name__ == "__main__":
    key = jax.random.PRNGKey(0)
    k_par, k_hid, k_enc, k_tok = jax.random.split(key, 4)

    params = init_params(k_par)
    slab = pack_slab(params)

    T = 8
    tokens = jax.random.randint(k_tok, (T,), 0, V, dtype=jnp.int32)
    hidden0 = jax.random.normal(k_hid, (1, 1, H), jnp.float32)
    encoder_outputs = jax.random.normal(k_enc, (L, H), jnp.float32)

    # fused T-step decode in a single pallas_call invocation
    logp_seq, hid_seq, attn_seq = attn_decoder_decode(slab, tokens, hidden0, encoder_outputs)
    jax.block_until_ready((logp_seq, hid_seq, attn_seq))

    assert logp_seq.shape == (T, V) and hid_seq.shape == (T, H) and attn_seq.shape == (T, L)
    assert bool(jnp.isfinite(logp_seq).all()) and bool(jnp.isfinite(hid_seq).all())
    # attention weights sum to 1 (exact normalization now)
    assert float(jnp.max(jnp.abs(attn_seq.sum(axis=-1) - 1.0))) < 1e-4

    # numerical check against a pure-JAX reference of the same decode loop
    ref_lp, ref_h, ref_aw = _ref_decode(params, tokens, hidden0, encoder_outputs)
    assert float(jnp.max(jnp.abs(logp_seq - ref_lp))) < 5e-3
    assert float(jnp.max(jnp.abs(hid_seq - ref_h))) < 5e-3
    assert float(jnp.max(jnp.abs(attn_seq - ref_aw))) < 5e-3

    # single-step call matching the original module signature
    logp1, h1, aw1 = attn_decoder_forward(slab, jnp.array([[5]], jnp.int32), hidden0, encoder_outputs)
    jax.block_until_ready((logp1, h1, aw1))
    assert logp1.shape == (1, V) and h1.shape == (1, 1, H) and aw1.shape == (1, L)

    print("KERNEL_OK")
</pallas_src>

<mosaic_0001>
module attributes {stable_mosaic.version = 11 : i64} {
  func.func @attn_decoder_kernel(%arg0: i32, %arg1: memref<8xi32, #tpu.memory_space<smem>>, %arg2: memref<1x32xf32, #tpu.memory_space<vmem>>, %arg3: memref<10x32xf32, #tpu.memory_space<vmem>>, %arg4: memref<704x128xf32, #tpu.memory_space<vmem>>, %arg5: memref<8x128xf32, #tpu.memory_space<vmem>>) attributes {dimension_semantics = [#tpu.dimension_semantics<arbitrary>], iteration_bounds = array<i64: 1>, scalar_prefetch = 1 : i64, scratch_operands = 0 : i64, tpu.core_type = #tpu.core_type<tc>, window_params = [{pipeline_mode = #tpu.pipeline_mode<synchronous>, transform_indices = @transform_0, window_bounds = array<i64: 1, 32>}, {pipeline_mode = #tpu.pipeline_mode<synchronous>, transform_indices = @transform_1, window_bounds = array<i64: 10, 32>}, {pipeline_mode = #tpu.pipeline_mode<synchronous>, transform_indices = @transform_2, window_bounds = array<i64: 704, 128>}, {pipeline_mode = #tpu.pipeline_mode<synchronous>, transform_indices = @transform_3, window_bounds = array<i64: 8, 128>}]} {
    %cst = arith.constant 0.000000e+00 : f32
    %0 = vector.broadcast %cst : f32 to vector<8x128xf32>
    %c0 = arith.constant 0 : index
    %c0_0 = arith.constant 0 : index
    %1 = vector.load %arg5[%c0, %c0_0] : memref<8x128xf32, #tpu.memory_space<vmem>>, vector<8x128xf32>
    tpu.vector_store %arg5[%c0, %c0_0], %0 {strides = array<i32>} : memref<8x128xf32, #tpu.memory_space<vmem>>, vector<8x128xf32>,
    %c0_1 = arith.constant 0 : index
    %c0_2 = arith.constant 0 : index
    %2 = vector.load %arg3[%c0_1, %c0_2] : memref<10x32xf32, #tpu.memory_space<vmem>>, vector<10x32xf32>
    %c512 = arith.constant 512 : index
    %c0_3 = arith.constant 0 : index
    %3 = vector.load %arg4[%c512, %c0_3] : memref<704x128xf32, #tpu.memory_space<vmem>>, vector<32x128xf32>
    %c544 = arith.constant 544 : index
    %c0_4 = arith.constant 0 : index
    %4 = vector.load %arg4[%c544, %c0_4] : memref<704x128xf32, #tpu.memory_space<vmem>>, vector<32x64xf32>
    %c576 = arith.constant 576 : index
    %c0_5 = arith.constant 0 : index
    %5 = vector.load %arg4[%c576, %c0_5] : memref<704x128xf32, #tpu.memory_space<vmem>>, vector<32x96xf32>
    %c608 = arith.constant 608 : index
    %c0_6 = arith.constant 0 : index
    %6 = vector.load %arg4[%c608, %c0_6] : memref<704x128xf32, #tpu.memory_space<vmem>>, vector<32x32xf32>
    %c640 = arith.constant 640 : index
    %c0_7 = arith.constant 0 : index
    %7 = vector.load %arg4[%c640, %c0_7] : memref<704x128xf32, #tpu.memory_space<vmem>>, vector<32x64xf32>
    %c672 = arith.constant 672 : index
    %c0_8 = arith.constant 0 : index
    %8 = vector.load %arg4[%c672, %c0_8] : memref<704x128xf32, #tpu.memory_space<vmem>>, vector<1x128xf32>
    %c680 = arith.constant 680 : index
    %c0_9 = arith.constant 0 : index
    %9 = vector.load %arg4[%c680, %c0_9] : memref<704x128xf32, #tpu.memory_space<vmem>>, vector<1x64xf32>
    %c688 = arith.constant 688 : index
    %c0_10 = arith.constant 0 : index
    %10 = vector.load %arg4[%c688, %c0_10] : memref<704x128xf32, #tpu.memory_space<vmem>>, vector<1x96xf32>
    %c696 = arith.constant 696 : index
    %c0_11 = arith.constant 0 : index
    %11 = vector.load %arg4[%c696, %c0_11] : memref<704x128xf32, #tpu.memory_space<vmem>>, vector<1x64xf32>
    %c0_12 = arith.constant 0 : index
    %c0_13 = arith.constant 0 : index
    %12 = vector.load %arg2[%c0_12, %c0_13] : memref<1x32xf32, #tpu.memory_space<vmem>>, vector<1x32xf32>
    %c0_14 = arith.constant 0 : index
    %13 = memref.load %arg1[%c0_14] : memref<8xi32, #tpu.memory_space<smem>>
    %c0_i32 = arith.constant 0 : i32
    %c63_i32 = arith.constant 63 : i32
    %14 = arith.maxsi %c0_i32, %13 : i32
    %15 = arith.minsi %c63_i32, %14 : i32
    %c8_i32 = arith.constant 8 : i32
    %16 = arith.muli %15, %c8_i32 : i32
    %17 = tpu.assume_multiple %16, 8 : i32
    %18 = arith.index_cast %17 : i32 to index
    %c0_15 = arith.constant 0 : index
    %19 = vector.load %arg4[%18, %c0_15] : memref<704x128xf32, #tpu.memory_space<vmem>>, vector<1x32xf32>
    %cst_16 = arith.constant dense<0.000000e+00> : vector<1x64xf32>
    %20 = tpu.matmul %19, %4, %cst_16 {dimension_numbers = #tpu.dot_dimension_numbers<[1], [0], [0], [1], [0, 0, 1, 1], [], []>} : vector<1x32xf32>, vector<32x64xf32>, vector<1x64xf32> -> vector<1x64xf32>
    %21 = arith.addf %20, %9 : vector<1x64xf32>
    %cst_17 = arith.constant dense<0.000000e+00> : vector<1x128xf32>
    %22 = tpu.matmul %12, %3, %cst_17 {dimension_numbers = #tpu.dot_dimension_numbers<[1], [0], [0], [1], [0, 0, 1, 1], [], []>} : vector<1x32xf32>, vector<32x128xf32>, vector<1x128xf32> -> vector<1x128xf32>
    %23 = arith.addf %22, %8 : vector<1x128xf32>
    %24 = vector.extract_strided_slice %21 {offsets = [0, 0], sizes = [1, 10], strides = [1, 1]} : vector<1x64xf32> to vector<1x10xf32>
    %25 = vector.extract_strided_slice %23 {offsets = [0, 0], sizes = [1, 10], strides = [1, 1]} : vector<1x128xf32> to vector<1x10xf32>
    %26 = arith.addf %24, %25 : vector<1x10xf32>
    %cst_18 = arith.constant dense<0xFF800000> : vector<1xf32>
    %27 = vector.multi_reduction <maximumf>, %26, %cst_18 [1] : vector<1x10xf32> to vector<1xf32>
    %28 = vector.shape_cast %27 : vector<1xf32> to vector<1x1xf32>
    %29 = vector.broadcast %28 : vector<1x1xf32> to vector<1x10xf32>
    %30 = arith.subf %26, %29 : vector<1x10xf32>
    %31 = math.exp %30 : vector<1x10xf32>
    %cst_19 = arith.constant dense<0.000000e+00> : vector<1xf32>
    %32 = vector.multi_reduction <add>, %31, %cst_19 [1] : vector<1x10xf32> to vector<1xf32>
    %33 = vector.shape_cast %32 : vector<1xf32> to vector<1x1xf32>
    %34 = vector.broadcast %33 : vector<1x1xf32> to vector<1x10xf32>
    %35 = arith.divf %31, %34 : vector<1x10xf32>
    %cst_20 = arith.constant dense<0.000000e+00> : vector<1x32xf32>
    %36 = tpu.matmul %35, %2, %cst_20 {dimension_numbers = #tpu.dot_dimension_numbers<[1], [0], [0], [1], [0, 0, 1, 1], [], []>} : vector<1x10xf32>, vector<10x32xf32>, vector<1x32xf32> -> vector<1x32xf32>
    %37 = vector.extract_strided_slice %21 {offsets = [0, 32], sizes = [1, 32], strides = [1, 1]} : vector<1x64xf32> to vector<1x32xf32>
    %cst_21 = arith.constant dense<0.000000e+00> : vector<1x32xf32>
    %38 = tpu.matmul %36, %6, %cst_21 {dimension_numbers = #tpu.dot_dimension_numbers<[1], [0], [0], [1], [0, 0, 1, 1], [], []>} : vector<1x32xf32>, vector<32x32xf32>, vector<1x32xf32> -> vector<1x32xf32>
    %39 = arith.addf %37, %38 : vector<1x32xf32>
    %cst_22 = arith.constant 0.000000e+00 : f32
    %40 = vector.broadcast %cst_22 : f32 to vector<1x32xf32>
    %41 = arith.maximumf %39, %40 : vector<1x32xf32>
    %cst_23 = arith.constant dense<0.000000e+00> : vector<1x96xf32>
    %42 = tpu.matmul %41, %5, %cst_23 {dimension_numbers = #tpu.dot_dimension_numbers<[1], [0], [0], [1], [0, 0, 1, 1], [], []>} : vector<1x32xf32>, vector<32x96xf32>, vector<1x96xf32> -> vector<1x96xf32>
    %43 = arith.addf %42, %10 : vector<1x96xf32>
    %44 = vector.extract_strided_slice %43 {offsets = [0, 0], sizes = [1, 32], strides = [1, 1]} : vector<1x96xf32> to vector<1x32xf32>
    %45 = vector.extract_strided_slice %23 {offsets = [0, 32], sizes = [1, 32], strides = [1, 1]} : vector<1x128xf32> to vector<1x32xf32>
    %46 = arith.addf %44, %45 : vector<1x32xf32>
    %47 = arith.negf %46 : vector<1x32xf32>
    %48 = math.exp %47 : vector<1x32xf32>
    %cst_24 = arith.constant 1.000000e+00 : f32
    %49 = vector.broadcast %cst_24 : f32 to vector<1x32xf32>
    %50 = arith.addf %49, %48 : vector<1x32xf32>
    %51 = arith.divf %49, %50 : vector<1x32xf32>
    %52 = vector.extract_strided_slice %43 {offsets = [0, 32], sizes = [1, 32], strides = [1, 1]} : vector<1x96xf32> to vector<1x32xf32>
    %53 = vector.extract_strided_slice %23 {offsets = [0, 64], sizes = [1, 32], strides = [1, 1]} : vector<1x128xf32> to vector<1x32xf32>
    %54 = arith.addf %52, %53 : vector<1x32xf32>
    %55 = arith.negf %54 : vector<1x32xf32>
    %56 = math.exp %55 : vector<1x32xf32>
    %cst_25 = arith.constant 1.000000e+00 : f32
    %57 = vector.broadcast %cst_25 : f32 to vector<1x32xf32>
    %58 = arith.addf %57, %56 : vector<1x32xf32>
    %59 = arith.divf %57, %58 : vector<1x32xf32>
    %60 = vector.extract_strided_slice %43 {offsets = [0, 64], sizes = [1, 32], strides = [1, 1]} : vector<1x96xf32> to vector<1x32xf32>
    %61 = vector.extract_strided_slice %23 {offsets = [0, 96], sizes = [1, 32], strides = [1, 1]} : vector<1x128xf32> to vector<1x32xf32>
    %62 = arith.mulf %51, %61 : vector<1x32xf32>
    %63 = arith.addf %60, %62 : vector<1x32xf32>
    %64 = math.tanh %63 : vector<1x32xf32>
    %cst_26 = arith.constant 1.000000e+00 : f32
    %65 = vector.broadcast %cst_26 : f32 to vector<1x32xf32>
    %66 = arith.subf %65, %59 : vector<1x32xf32>
    %67 = arith.mulf %66, %64 : vector<1x32xf32>
    %68 = arith.mulf %59, %12 : vector<1x32xf32>
    %69 = arith.addf %67, %68 : vector<1x32xf32>
    %cst_27 = arith.constant dense<0.000000e+00> : vector<1x64xf32>
    %70 = tpu.matmul %69, %7, %cst_27 {dimension_numbers = #tpu.dot_dimension_numbers<[1], [0], [0], [1], [0, 0, 1, 1], [], []>} : vector<1x32xf32>, vector<32x64xf32>, vector<1x64xf32> -> vector<1x64xf32>
    %71 = arith.addf %70, %11 : vector<1x64xf32>
    %cst_28 = arith.constant dense<0xFF800000> : vector<1xf32>
    %72 = vector.multi_reduction <maximumf>, %71, %cst_28 [1] : vector<1x64xf32> to vector<1xf32>
    %73 = vector.shape_cast %72 : vector<1xf32> to vector<1x1xf32>
    %74 = vector.broadcast %73 : vector<1x1xf32> to vector<1x64xf32>
    %75 = arith.subf %71, %74 : vector<1x64xf32>
    %76 = math.exp %75 : vector<1x64xf32>
    %cst_29 = arith.constant dense<0.000000e+00> : vector<1xf32>
    %77 = vector.multi_reduction <add>, %76, %cst_29 [1] : vector<1x64xf32> to vector<1xf32>
    %78 = vector.shape_cast %77 : vector<1xf32> to vector<1x1xf32>
    %79 = math.log %78 : vector<1x1xf32>
    %80 = vector.broadcast %79 : vector<1x1xf32> to vector<1x64xf32>
    %81 = arith.subf %75, %80 : vector<1x64xf32>
    %c0_30 = arith.constant 0 : index
    %c0_31 = arith.constant 0 : index
    %82 = vector.load %arg5[%c0_30, %c0_31] : memref<8x128xf32, #tpu.memory_space<vmem>>, vector<1x64xf32>
    tpu.vector_store %arg5[%c0_30, %c0_31], %81 {strides = array<i32>} : memref<8x128xf32, #tpu.memory_space<vmem>>, vector<1x64xf32>,
    %c0_32 = arith.constant 0 : index
    %c64 = arith.constant 64 : index
    %83 = vector.load %arg5[%c0_32, %c64] : memref<8x128xf32, #tpu.memory_space<vmem>>, vector<1x32xf32>
    tpu.vector_store %arg5[%c0_32, %c64], %69 {strides = array<i32>} : memref<8x128xf32, #tpu.memory_space<vmem>>, vector<1x32xf32>,
    %c0_33 = arith.constant 0 : index
    %c96 = arith.constant 96 : index
    %84 = vector.load %arg5[%c0_33, %c96] : memref<8x128xf32, #tpu.memory_space<vmem>>, vector<1x10xf32>
    tpu.vector_store %arg5[%c0_33, %c96], %35 {strides = array<i32>} : memref<8x128xf32, #tpu.memory_space<vmem>>, vector<1x10xf32>,
    %c1 = arith.constant 1 : index
    %85 = memref.load %arg1[%c1] : memref<8xi32, #tpu.memory_space<smem>>
    %c0_i32_34 = arith.constant 0 : i32
    %c63_i32_35 = arith.constant 63 : i32
    %86 = arith.maxsi %c0_i32_34, %85 : i32
    %87 = arith.minsi %c63_i32_35, %86 : i32
    %c8_i32_36 = arith.constant 8 : i32
    %88 = arith.muli %87, %c8_i32_36 : i32
    %89 = tpu.assume_multiple %88, 8 : i32
    %90 = arith.index_cast %89 : i32 to index
    %c0_37 = arith.constant 0 : index
    %91 = vector.load %arg4[%90, %c0_37] : memref<704x128xf32, #tpu.memory_space<vmem>>, vector<1x32xf32>
    %cst_38 = arith.constant dense<0.000000e+00> : vector<1x64xf32>
    %92 = tpu.matmul %91, %4, %cst_38 {dimension_numbers = #tpu.dot_dimension_numbers<[1], [0], [0], [1], [0, 0, 1, 1], [], []>} : vector<1x32xf32>, vector<32x64xf32>, vector<1x64xf32> -> vector<1x64xf32>
    %93 = arith.addf %92, %9 : vector<1x64xf32>
    %cst_39 = arith.constant dense<0.000000e+00> : vector<1x128xf32>
    %94 = tpu.matmul %69, %3, %cst_39 {dimension_numbers = #tpu.dot_dimension_numbers<[1], [0], [0], [1], [0, 0, 1, 1], [], []>} : vector<1x32xf32>, vector<32x128xf32>, vector<1x128xf32> -> vector<1x128xf32>
    %95 = arith.addf %94, %8 : vector<1x128xf32>
    %96 = vector.extract_strided_slice %93 {offsets = [0, 0], sizes = [1, 10], strides = [1, 1]} : vector<1x64xf32> to vector<1x10xf32>
    %97 = vector.extract_strided_slice %95 {offsets = [0, 0], sizes = [1, 10], strides = [1, 1]} : vector<1x128xf32> to vector<1x10xf32>
    %98 = arith.addf %96, %97 : vector<1x10xf32>
    %cst_40 = arith.constant dense<0xFF800000> : vector<1xf32>
    %99 = vector.multi_reduction <maximumf>, %98, %cst_40 [1] : vector<1x10xf32> to vector<1xf32>
    %100 = vector.shape_cast %99 : vector<1xf32> to vector<1x1xf32>
    %101 = vector.broadcast %100 : vector<1x1xf32> to vector<1x10xf32>
    %102 = arith.subf %98, %101 : vector<1x10xf32>
    %103 = math.exp %102 : vector<1x10xf32>
    %cst_41 = arith.constant dense<0.000000e+00> : vector<1xf32>
    %104 = vector.multi_reduction <add>, %103, %cst_41 [1] : vector<1x10xf32> to vector<1xf32>
    %105 = vector.shape_cast %104 : vector<1xf32> to vector<1x1xf32>
    %106 = vector.broadcast %105 : vector<1x1xf32> to vector<1x10xf32>
    %107 = arith.divf %103, %106 : vector<1x10xf32>
    %cst_42 = arith.constant dense<0.000000e+00> : vector<1x32xf32>
    %108 = tpu.matmul %107, %2, %cst_42 {dimension_numbers = #tpu.dot_dimension_numbers<[1], [0], [0], [1], [0, 0, 1, 1], [], []>} : vector<1x10xf32>, vector<10x32xf32>, vector<1x32xf32> -> vector<1x32xf32>
    %109 = vector.extract_strided_slice %93 {offsets = [0, 32], sizes = [1, 32], strides = [1, 1]} : vector<1x64xf32> to vector<1x32xf32>
    %cst_43 = arith.constant dense<0.000000e+00> : vector<1x32xf32>
    %110 = tpu.matmul %108, %6, %cst_43 {dimension_numbers = #tpu.dot_dimension_numbers<[1], [0], [0], [1], [0, 0, 1, 1], [], []>} : vector<1x32xf32>, vector<32x32xf32>, vector<1x32xf32> -> vector<1x32xf32>
    %111 = arith.addf %109, %110 : vector<1x32xf32>
    %cst_44 = arith.constant 0.000000e+00 : f32
    %112 = vector.broadcast %cst_44 : f32 to vector<1x32xf32>
    %113 = arith.maximumf %111, %112 : vector<1x32xf32>
    %cst_45 = arith.constant dense<0.000000e+00> : vector<1x96xf32>
    %114 = tpu.matmul %113, %5, %cst_45 {dimension_numbers = #tpu.dot_dimension_numbers<[1], [0], [0], [1], [0, 0, 1, 1], [], []>} : vector<1x32xf32>, vector<32x96xf32>, vector<1x96xf32> -> vector<1x96xf32>
    %115 = arith.addf %114, %10 : vector<1x96xf32>
    %116 = vector.extract_strided_slice %115 {offsets = [0, 0], sizes = [1, 32], strides = [1, 1]} : vector<1x96xf32> to vector<1x32xf32>
    %117 = vector.extract_strided_slice %95 {offsets = [0, 32], sizes = [1, 32], strides = [1, 1]} : vector<1x128xf32> to vector<1x32xf32>
    %118 = arith.addf %116, %117 : vector<1x32xf32>
    %119 = arith.negf %118 : vector<1x32xf32>
    %120 = math.exp %119 : vector<1x32xf32>
    %cst_46 = arith.constant 1.000000e+00 : f32
    %121 = vector.broadcast %cst_46 : f32 to vector<1x32xf32>
    %122 = arith.addf %121, %120 : vector<1x32xf32>
    %123 = arith.divf %121, %122 : vector<1x32xf32>
    %124 = vector.extract_strided_slice %115 {offsets = [0, 32], sizes = [1, 32], strides = [1, 1]} : vector<1x96xf32> to vector<1x32xf32>
    %125 = vector.extract_strided_slice %95 {offsets = [0, 64], sizes = [1, 32], strides = [1, 1]} : vector<1x128xf32> to vector<1x32xf32>
    %126 = arith.addf %124, %125 : vector<1x32xf32>
    %127 = arith.negf %126 : vector<1x32xf32>
    %128 = math.exp %127 : vector<1x32xf32>
    %cst_47 = arith.constant 1.000000e+00 : f32
    %129 = vector.broadcast %cst_47 : f32 to vector<1x32xf32>
    %130 = arith.addf %129, %128 : vector<1x32xf32>
    %131 = arith.divf %129, %130 : vector<1x32xf32>
    %132 = vector.extract_strided_slice %115 {offsets = [0, 64], sizes = [1, 32], strides = [1, 1]} : vector<1x96xf32> to vector<1x32xf32>
    %133 = vector.extract_strided_slice %95 {offsets = [0, 96], sizes = [1, 32], strides = [1, 1]} : vector<1x128xf32> to vector<1x32xf32>
    %134 = arith.mulf %123, %133 : vector<1x32xf32>
    %135 = arith.addf %132, %134 : vector<1x32xf32>
    %136 = math.tanh %135 : vector<1x32xf32>
    %cst_48 = arith.constant 1.000000e+00 : f32
    %137 = vector.broadcast %cst_48 : f32 to vector<1x32xf32>
    %138 = arith.subf %137, %131 : vector<1x32xf32>
    %139 = arith.mulf %138, %136 : vector<1x32xf32>
    %140 = arith.mulf %131, %69 : vector<1x32xf32>
    %141 = arith.addf %139, %140 : vector<1x32xf32>
    %cst_49 = arith.constant dense<0.000000e+00> : vector<1x64xf32>
    %142 = tpu.matmul %141, %7, %cst_49 {dimension_numbers = #tpu.dot_dimension_numbers<[1], [0], [0], [1], [0, 0, 1, 1], [], []>} : vector<1x32xf32>, vector<32x64xf32>, vector<1x64xf32> -> vector<1x64xf32>
    %143 = arith.addf %142, %11 : vector<1x64xf32>
    %cst_50 = arith.constant dense<0xFF800000> : vector<1xf32>
    %144 = vector.multi_reduction <maximumf>, %143, %cst_50 [1] : vector<1x64xf32> to vector<1xf32>
    %145 = vector.shape_cast %144 : vector<1xf32> to vector<1x1xf32>
    %146 = vector.broadcast %145 : vector<1x1xf32> to vector<1x64xf32>
    %147 = arith.subf %143, %146 : vector<1x64xf32>
    %148 = math.exp %147 : vector<1x64xf32>
    %cst_51 = arith.constant dense<0.000000e+00> : vector<1xf32>
    %149 = vector.multi_reduction <add>, %148, %cst_51 [1] : vector<1x64xf32> to vector<1xf32>
    %150 = vector.shape_cast %149 : vector<1xf32> to vector<1x1xf32>
    %151 = math.log %150 : vector<1x1xf32>
    %152 = vector.broadcast %151 : vector<1x1xf32> to vector<1x64xf32>
    %153 = arith.subf %147, %152 : vector<1x64xf32>
    %c1_52 = arith.constant 1 : index
    %c0_53 = arith.constant 0 : index
    %154 = vector.load %arg5[%c1_52, %c0_53] : memref<8x128xf32, #tpu.memory_space<vmem>>, vector<1x64xf32>
    tpu.vector_store %arg5[%c1_52, %c0_53], %153 {strides = array<i32>} : memref<8x128xf32, #tpu.memory_space<vmem>>, vector<1x64xf32>,
    %c1_54 = arith.constant 1 : index
    %c64_55 = arith.constant 64 : index
    %155 = vector.load %arg5[%c1_54, %c64_55] : memref<8x128xf32, #tpu.memory_space<vmem>>, vector<1x32xf32>
    tpu.vector_store %arg5[%c1_54, %c64_55], %141 {strides = array<i32>} : memref<8x128xf32, #tpu.memory_space<vmem>>, vector<1x32xf32>,
    %c1_56 = arith.constant 1 : index
    %c96_57 = arith.constant 96 : index
    %156 = vector.load %arg5[%c1_56, %c96_57] : memref<8x128xf32, #tpu.memory_space<vmem>>, vector<1x10xf32>
    tpu.vector_store %arg5[%c1_56, %c96_57], %107 {strides = array<i32>} : memref<8x128xf32, #tpu.memory_space<vmem>>, vector<1x10xf32>,
    %c2 = arith.constant 2 : index
    %157 = memref.load %arg1[%c2] : memref<8xi32, #tpu.memory_space<smem>>
    %c0_i32_58 = arith.constant 0 : i32
    %c63_i32_59 = arith.constant 63 : i32
    %158 = arith.maxsi %c0_i32_58, %157 : i32
    %159 = arith.minsi %c63_i32_59, %158 : i32
    %c8_i32_60 = arith.constant 8 : i32
    %160 = arith.muli %159, %c8_i32_60 : i32
    %161 = tpu.assume_multiple %160, 8 : i32
    %162 = arith.index_cast %161 : i32 to index
    %c0_61 = arith.constant 0 : index
    %163 = vector.load %arg4[%162, %c0_61] : memref<704x128xf32, #tpu.memory_space<vmem>>, vector<1x32xf32>
    %cst_62 = arith.constant dense<0.000000e+00> : vector<1x64xf32>
    %164 = tpu.matmul %163, %4, %cst_62 {dimension_numbers = #tpu.dot_dimension_numbers<[1], [0], [0], [1], [0, 0, 1, 1], [], []>} : vector<1x32xf32>, vector<32x64xf32>, vector<1x64xf32> -> vector<1x64xf32>
    %165 = arith.addf %164, %9 : vector<1x64xf32>
    %cst_63 = arith.constant dense<0.000000e+00> : vector<1x128xf32>
    %166 = tpu.matmul %141, %3, %cst_63 {dimension_numbers = #tpu.dot_dimension_numbers<[1], [0], [0], [1], [0, 0, 1, 1], [], []>} : vector<1x32xf32>, vector<32x128xf32>, vector<1x128xf32> -> vector<1x128xf32>
    %167 = arith.addf %166, %8 : vector<1x128xf32>
    %168 = vector.extract_strided_slice %165 {offsets = [0, 0], sizes = [1, 10], strides = [1, 1]} : vector<1x64xf32> to vector<1x10xf32>
    %169 = vector.extract_strided_slice %167 {offsets = [0, 0], sizes = [1, 10], strides = [1, 1]} : vector<1x128xf32> to vector<1x10xf32>
    %170 = arith.addf %168, %169 : vector<1x10xf32>
    %cst_64 = arith.constant dense<0xFF800000> : vector<1xf32>
    %171 = vector.multi_reduction <maximumf>, %170, %cst_64 [1] : vector<1x10xf32> to vector<1xf32>
    %172 = vector.shape_cast %171 : vector<1xf32> to vector<1x1xf32>
    %173 = vector.broadcast %172 : vector<1x1xf32> to vector<1x10xf32>
    %174 = arith.subf %170, %173 : vector<1x10xf32>
    %175 = math.exp %174 : vector<1x10xf32>
    %cst_65 = arith.constant dense<0.000000e+00> : vector<1xf32>
    %176 = vector.multi_reduction <add>, %175, %cst_65 [1] : vector<1x10xf32> to vector<1xf32>
    %177 = vector.shape_cast %176 : vector<1xf32> to vector<1x1xf32>
    %178 = vector.broadcast %177 : vector<1x1xf32> to vector<1x10xf32>
    %179 = arith.divf %175, %178 : vector<1x10xf32>
    %cst_66 = arith.constant dense<0.000000e+00> : vector<1x32xf32>
    %180 = tpu.matmul %179, %2, %cst_66 {dimension_numbers = #tpu.dot_dimension_numbers<[1], [0], [0], [1], [0, 0, 1, 1], [], []>} : vector<1x10xf32>, vector<10x32xf32>, vector<1x32xf32> -> vector<1x32xf32>
    %181 = vector.extract_strided_slice %165 {offsets = [0, 32], sizes = [1, 32], strides = [1, 1]} : vector<1x64xf32> to vector<1x32xf32>
    %cst_67 = arith.constant dense<0.000000e+00> : vector<1x32xf32>
    %182 = tpu.matmul %180, %6, %cst_67 {dimension_numbers = #tpu.dot_dimension_numbers<[1], [0], [0], [1], [0, 0, 1, 1], [], []>} : vector<1x32xf32>, vector<32x32xf32>, vector<1x32xf32> -> vector<1x32xf32>
    %183 = arith.addf %181, %182 : vector<1x32xf32>
    %cst_68 = arith.constant 0.000000e+00 : f32
    %184 = vector.broadcast %cst_68 : f32 to vector<1x32xf32>
    %185 = arith.maximumf %183, %184 : vector<1x32xf32>
    %cst_69 = arith.constant dense<0.000000e+00> : vector<1x96xf32>
    %186 = tpu.matmul %185, %5, %cst_69 {dimension_numbers = #tpu.dot_dimension_numbers<[1], [0], [0], [1], [0, 0, 1, 1], [], []>} : vector<1x32xf32>, vector<32x96xf32>, vector<1x96xf32> -> vector<1x96xf32>
    %187 = arith.addf %186, %10 : vector<1x96xf32>
    %188 = vector.extract_strided_slice %187 {offsets = [0, 0], sizes = [1, 32], strides = [1, 1]} : vector<1x96xf32> to vector<1x32xf32>
    %189 = vector.extract_strided_slice %167 {offsets = [0, 32], sizes = [1, 32], strides = [1, 1]} : vector<1x128xf32> to vector<1x32xf32>
    %190 = arith.addf %188, %189 : vector<1x32xf32>
    %191 = arith.negf %190 : vector<1x32xf32>
    %192 = math.exp %191 : vector<1x32xf32>
    %cst_70 = arith.constant 1.000000e+00 : f32
    %193 = vector.broadcast %cst_70 : f32 to vector<1x32xf32>
    %194 = arith.addf %193, %192 : vector<1x32xf32>
    %195 = arith.divf %193, %194 : vector<1x32xf32>
    %196 = vector.extract_strided_slice %187 {offsets = [0, 32], sizes = [1, 32], strides = [1, 1]} : vector<1x96xf32> to vector<1x32xf32>
    %197 = vector.extract_strided_slice %167 {offsets = [0, 64], sizes = [1, 32], strides = [1, 1]} : vector<1x128xf32> to vector<1x32xf32>
    %198 = arith.addf %196, %197 : vector<1x32xf32>
    %199 = arith.negf %198 : vector<1x32xf32>
    %200 = math.exp %199 : vector<1x32xf32>
    %cst_71 = arith.constant 1.000000e+00 : f32
    %201 = vector.broadcast %cst_71 : f32 to vector<1x32xf32>
    %202 = arith.addf %201, %200 : vector<1x32xf32>
    %203 = arith.divf %201, %202 : vector<1x32xf32>
    %204 = vector.extract_strided_slice %187 {offsets = [0, 64], sizes = [1, 32], strides = [1, 1]} : vector<1x96xf32> to vector<1x32xf32>
    %205 = vector.extract_strided_slice %167 {offsets = [0, 96], sizes = [1, 32], strides = [1, 1]} : vector<1x128xf32> to vector<1x32xf32>
    %206 = arith.mulf %195, %205 : vector<1x32xf32>
    %207 = arith.addf %204, %206 : vector<1x32xf32>
    %208 = math.tanh %207 : vector<1x32xf32>
    %cst_72 = arith.constant 1.000000e+00 : f32
    %209 = vector.broadcast %cst_72 : f32 to vector<1x32xf32>
    %210 = arith.subf %209, %203 : vector<1x32xf32>
    %211 = arith.mulf %210, %208 : vector<1x32xf32>
    %212 = arith.mulf %203, %141 : vector<1x32xf32>
    %213 = arith.addf %211, %212 : vector<1x32xf32>
    %cst_73 = arith.constant dense<0.000000e+00> : vector<1x64xf32>
    %214 = tpu.matmul %213, %7, %cst_73 {dimension_numbers = #tpu.dot_dimension_numbers<[1], [0], [0], [1], [0, 0, 1, 1], [], []>} : vector<1x32xf32>, vector<32x64xf32>, vector<1x64xf32> -> vector<1x64xf32>
    %215 = arith.addf %214, %11 : vector<1x64xf32>
    %cst_74 = arith.constant dense<0xFF800000> : vector<1xf32>
    %216 = vector.multi_reduction <maximumf>, %215, %cst_74 [1] : vector<1x64xf32> to vector<1xf32>
    %217 = vector.shape_cast %216 : vector<1xf32> to vector<1x1xf32>
    %218 = vector.broadcast %217 : vector<1x1xf32> to vector<1x64xf32>
    %219 = arith.subf %215, %218 : vector<1x64xf32>
    %220 = math.exp %219 : vector<1x64xf32>
    %cst_75 = arith.constant dense<0.000000e+00> : vector<1xf32>
    %221 = vector.multi_reduction <add>, %220, %cst_75 [1] : vector<1x64xf32> to vector<1xf32>
    %222 = vector.shape_cast %221 : vector<1xf32> to vector<1x1xf32>
    %223 = math.log %222 : vector<1x1xf32>
    %224 = vector.broadcast %223 : vector<1x1xf32> to vector<1x64xf32>
    %225 = arith.subf %219, %224 : vector<1x64xf32>
    %c2_76 = arith.constant 2 : index
    %c0_77 = arith.constant 0 : index
    %226 = vector.load %arg5[%c2_76, %c0_77] : memref<8x128xf32, #tpu.memory_space<vmem>>, vector<1x64xf32>
    tpu.vector_store %arg5[%c2_76, %c0_77], %225 {strides = array<i32>} : memref<8x128xf32, #tpu.memory_space<vmem>>, vector<1x64xf32>,
    %c2_78 = arith.constant 2 : index
    %c64_79 = arith.constant 64 : index
    %227 = vector.load %arg5[%c2_78, %c64_79] : memref<8x128xf32, #tpu.memory_space<vmem>>, vector<1x32xf32>
    tpu.vector_store %arg5[%c2_78, %c64_79], %213 {strides = array<i32>} : memref<8x128xf32, #tpu.memory_space<vmem>>, vector<1x32xf32>,
    %c2_80 = arith.constant 2 : index
    %c96_81 = arith.constant 96 : index
    %228 = vector.load %arg5[%c2_80, %c96_81] : memref<8x128xf32, #tpu.memory_space<vmem>>, vector<1x10xf32>
    tpu.vector_store %arg5[%c2_80, %c96_81], %179 {strides = array<i32>} : memref<8x128xf32, #tpu.memory_space<vmem>>, vector<1x10xf32>,
    %c3 = arith.constant 3 : index
    %229 = memref.load %arg1[%c3] : memref<8xi32, #tpu.memory_space<smem>>
    %c0_i32_82 = arith.constant 0 : i32
    %c63_i32_83 = arith.constant 63 : i32
    %230 = arith.maxsi %c0_i32_82, %229 : i32
    %231 = arith.minsi %c63_i32_83, %230 : i32
    %c8_i32_84 = arith.constant 8 : i32
    %232 = arith.muli %231, %c8_i32_84 : i32
    %233 = tpu.assume_multiple %232, 8 : i32
    %234 = arith.index_cast %233 : i32 to index
    %c0_85 = arith.constant 0 : index
    %235 = vector.load %arg4[%234, %c0_85] : memref<704x128xf32, #tpu.memory_space<vmem>>, vector<1x32xf32>
    %cst_86 = arith.constant dense<0.000000e+00> : vector<1x64xf32>
    %236 = tpu.matmul %235, %4, %cst_86 {dimension_numbers = #tpu.dot_dimension_numbers<[1], [0], [0], [1], [0, 0, 1, 1], [], []>} : vector<1x32xf32>, vector<32x64xf32>, vector<1x64xf32> -> vector<1x64xf32>
    %237 = arith.addf %236, %9 : vector<1x64xf32>
    %cst_87 = arith.constant dense<0.000000e+00> : vector<1x128xf32>
    %238 = tpu.matmul %213, %3, %cst_87 {dimension_numbers = #tpu.dot_dimension_numbers<[1], [0], [0], [1], [0, 0, 1, 1], [], []>} : vector<1x32xf32>, vector<32x128xf32>, vector<1x128xf32> -> vector<1x128xf32>
    %239 = arith.addf %238, %8 : vector<1x128xf32>
    %240 = vector.extract_strided_slice %237 {offsets = [0, 0], sizes = [1, 10], strides = [1, 1]} : vector<1x64xf32> to vector<1x10xf32>
    %241 = vector.extract_strided_slice %239 {offsets = [0, 0], sizes = [1, 10], strides = [1, 1]} : vector<1x128xf32> to vector<1x10xf32>
    %242 = arith.addf %240, %241 : vector<1x10xf32>
    %cst_88 = arith.constant dense<0xFF800000> : vector<1xf32>
    %243 = vector.multi_reduction <maximumf>, %242, %cst_88 [1] : vector<1x10xf32> to vector<1xf32>
    %244 = vector.shape_cast %243 : vector<1xf32> to vector<1x1xf32>
    %245 = vector.broadcast %244 : vector<1x1xf32> to vector<1x10xf32>
    %246 = arith.subf %242, %245 : vector<1x10xf32>
    %247 = math.exp %246 : vector<1x10xf32>
    %cst_89 = arith.constant dense<0.000000e+00> : vector<1xf32>
    %248 = vector.multi_reduction <add>, %247, %cst_89 [1] : vector<1x10xf32> to vector<1xf32>
    %249 = vector.shape_cast %248 : vector<1xf32> to vector<1x1xf32>
    %250 = vector.broadcast %249 : vector<1x1xf32> to vector<1x10xf32>
    %251 = arith.divf %247, %250 : vector<1x10xf32>
    %cst_90 = arith.constant dense<0.000000e+00> : vector<1x32xf32>
    %252 = tpu.matmul %251, %2, %cst_90 {dimension_numbers = #tpu.dot_dimension_numbers<[1], [0], [0], [1], [0, 0, 1, 1], [], []>} : vector<1x10xf32>, vector<10x32xf32>, vector<1x32xf32> -> vector<1x32xf32>
    %253 = vector.extract_strided_slice %237 {offsets = [0, 32], sizes = [1, 32], strides = [1, 1]} : vector<1x64xf32> to vector<1x32xf32>
    %cst_91 = arith.constant dense<0.000000e+00> : vector<1x32xf32>
    %254 = tpu.matmul %252, %6, %cst_91 {dimension_numbers = #tpu.dot_dimension_numbers<[1], [0], [0], [1], [0, 0, 1, 1], [], []>} : vector<1x32xf32>, vector<32x32xf32>, vector<1x32xf32> -> vector<1x32xf32>
    %255 = arith.addf %253, %254 : vector<1x32xf32>
    %cst_92 = arith.constant 0.000000e+00 : f32
    %256 = vector.broadcast %cst_92 : f32 to vector<1x32xf32>
    %257 = arith.maximumf %255, %256 : vector<1x32xf32>
    %cst_93 = arith.constant dense<0.000000e+00> : vector<1x96xf32>
    %258 = tpu.matmul %257, %5, %cst_93 {dimension_numbers = #tpu.dot_dimension_numbers<[1], [0], [0], [1], [0, 0, 1, 1], [], []>} : vector<1x32xf32>, vector<32x96xf32>, vector<1x96xf32> -> vector<1x96xf32>
    %259 = arith.addf %258, %10 : vector<1x96xf32>
    %260 = vector.extract_strided_slice %259 {offsets = [0, 0], sizes = [1, 32], strides = [1, 1]} : vector<1x96xf32> to vector<1x32xf32>
    %261 = vector.extract_strided_slice %239 {offsets = [0, 32], sizes = [1, 32], strides = [1, 1]} : vector<1x128xf32> to vector<1x32xf32>
    %262 = arith.addf %260, %261 : vector<1x32xf32>
    %263 = arith.negf %262 : vector<1x32xf32>
    %264 = math.exp %263 : vector<1x32xf32>
    %cst_94 = arith.constant 1.000000e+00 : f32
    %265 = vector.broadcast %cst_94 : f32 to vector<1x32xf32>
    %266 = arith.addf %265, %264 : vector<1x32xf32>
    %267 = arith.divf %265, %266 : vector<1x32xf32>
    %268 = vector.extract_strided_slice %259 {offsets = [0, 32], sizes = [1, 32], strides = [1, 1]} : vector<1x96xf32> to vector<1x32xf32>
    %269 = vector.extract_strided_slice %239 {offsets = [0, 64], sizes = [1, 32], strides = [1, 1]} : vector<1x128xf32> to vector<1x32xf32>
    %270 = arith.addf %268, %269 : vector<1x32xf32>
    %271 = arith.negf %270 : vector<1x32xf32>
    %272 = math.exp %271 : vector<1x32xf32>
    %cst_95 = arith.constant 1.000000e+00 : f32
    %273 = vector.broadcast %cst_95 : f32 to vector<1x32xf32>
    %274 = arith.addf %273, %272 : vector<1x32xf32>
    %275 = arith.divf %273, %274 : vector<1x32xf32>
    %276 = vector.extract_strided_slice %259 {offsets = [0, 64], sizes = [1, 32], strides = [1, 1]} : vector<1x96xf32> to vector<1x32xf32>
    %277 = vector.extract_strided_slice %239 {offsets = [0, 96], sizes = [1, 32], strides = [1, 1]} : vector<1x128xf32> to vector<1x32xf32>
    %278 = arith.mulf %267, %277 : vector<1x32xf32>
    %279 = arith.addf %276, %278 : vector<1x32xf32>
    %280 = math.tanh %279 : vector<1x32xf32>
    %cst_96 = arith.constant 1.000000e+00 : f32
    %281 = vector.broadcast %cst_96 : f32 to vector<1x32xf32>
    %282 = arith.subf %281, %275 : vector<1x32xf32>
    %283 = arith.mulf %282, %280 : vector<1x32xf32>
    %284 = arith.mulf %275, %213 : vector<1x32xf32>
    %285 = arith.addf %283, %284 : vector<1x32xf32>
    %cst_97 = arith.constant dense<0.000000e+00> : vector<1x64xf32>
    %286 = tpu.matmul %285, %7, %cst_97 {dimension_numbers = #tpu.dot_dimension_numbers<[1], [0], [0], [1], [0, 0, 1, 1], [], []>} : vector<1x32xf32>, vector<32x64xf32>, vector<1x64xf32> -> vector<1x64xf32>
    %287 = arith.addf %286, %11 : vector<1x64xf32>
    %cst_98 = arith.constant dense<0xFF800000> : vector<1xf32>
    %288 = vector.multi_reduction <maximumf>, %287, %cst_98 [1] : vector<1x64xf32> to vector<1xf32>
    %289 = vector.shape_cast %288 : vector<1xf32> to vector<1x1xf32>
    %290 = vector.broadcast %289 : vector<1x1xf32> to vector<1x64xf32>
    %291 = arith.subf %287, %290 : vector<1x64xf32>
    %292 = math.exp %291 : vector<1x64xf32>
    %cst_99 = arith.constant dense<0.000000e+00> : vector<1xf32>
    %293 = vector.multi_reduction <add>, %292, %cst_99 [1] : vector<1x64xf32> to vector<1xf32>
    %294 = vector.shape_cast %293 : vector<1xf32> to vector<1x1xf32>
    %295 = math.log %294 : vector<1x1xf32>
    %296 = vector.broadcast %295 : vector<1x1xf32> to vector<1x64xf32>
    %297 = arith.subf %291, %296 : vector<1x64xf32>
    %c3_100 = arith.constant 3 : index
    %c0_101 = arith.constant 0 : index
    %298 = vector.load %arg5[%c3_100, %c0_101] : memref<8x128xf32, #tpu.memory_space<vmem>>, vector<1x64xf32>
    tpu.vector_store %arg5[%c3_100, %c0_101], %297 {strides = array<i32>} : memref<8x128xf32, #tpu.memory_space<vmem>>, vector<1x64xf32>,
    %c3_102 = arith.constant 3 : index
    %c64_103 = arith.constant 64 : index
    %299 = vector.load %arg5[%c3_102, %c64_103] : memref<8x128xf32, #tpu.memory_space<vmem>>, vector<1x32xf32>
    tpu.vector_store %arg5[%c3_102, %c64_103], %285 {strides = array<i32>} : memref<8x128xf32, #tpu.memory_space<vmem>>, vector<1x32xf32>,
    %c3_104 = arith.constant 3 : index
    %c96_105 = arith.constant 96 : index
    %300 = vector.load %arg5[%c3_104, %c96_105] : memref<8x128xf32, #tpu.memory_space<vmem>>, vector<1x10xf32>
    tpu.vector_store %arg5[%c3_104, %c96_105], %251 {strides = array<i32>} : memref<8x128xf32, #tpu.memory_space<vmem>>, vector<1x10xf32>,
    %c4 = arith.constant 4 : index
    %301 = memref.load %arg1[%c4] : memref<8xi32, #tpu.memory_space<smem>>
    %c0_i32_106 = arith.constant 0 : i32
    %c63_i32_107 = arith.constant 63 : i32
    %302 = arith.maxsi %c0_i32_106, %301 : i32
    %303 = arith.minsi %c63_i32_107, %302 : i32
    %c8_i32_108 = arith.constant 8 : i32
    %304 = arith.muli %303, %c8_i32_108 : i32
    %305 = tpu.assume_multiple %304, 8 : i32
    %306 = arith.index_cast %305 : i32 to index
    %c0_109 = arith.constant 0 : index
    %307 = vector.load %arg4[%306, %c0_109] : memref<704x128xf32, #tpu.memory_space<vmem>>, vector<1x32xf32>
    %cst_110 = arith.constant dense<0.000000e+00> : vector<1x64xf32>
    %308 = tpu.matmul %307, %4, %cst_110 {dimension_numbers = #tpu.dot_dimension_numbers<[1], [0], [0], [1], [0, 0, 1, 1], [], []>} : vector<1x32xf32>, vector<32x64xf32>, vector<1x64xf32> -> vector<1x64xf32>
    %309 = arith.addf %308, %9 : vector<1x64xf32>
    %cst_111 = arith.constant dense<0.000000e+00> : vector<1x128xf32>
    %310 = tpu.matmul %285, %3, %cst_111 {dimension_numbers = #tpu.dot_dimension_numbers<[1], [0], [0], [1], [0, 0, 1, 1], [], []>} : vector<1x32xf32>, vector<32x128xf32>, vector<1x128xf32> -> vector<1x128xf32>
    %311 = arith.addf %310, %8 : vector<1x128xf32>
    %312 = vector.extract_strided_slice %309 {offsets = [0, 0], sizes = [1, 10], strides = [1, 1]} : vector<1x64xf32> to vector<1x10xf32>
    %313 = vector.extract_strided_slice %311 {offsets = [0, 0], sizes = [1, 10], strides = [1, 1]} : vector<1x128xf32> to vector<1x10xf32>
    %314 = arith.addf %312, %313 : vector<1x10xf32>
    %cst_112 = arith.constant dense<0xFF800000> : vector<1xf32>
    %315 = vector.multi_reduction <maximumf>, %314, %cst_112 [1] : vector<1x10xf32> to vector<1xf32>
    %316 = vector.shape_cast %315 : vector<1xf32> to vector<1x1xf32>
    %317 = vector.broadcast %316 : vector<1x1xf32> to vector<1x10xf32>
    %318 = arith.subf %314, %317 : vector<1x10xf32>
    %319 = math.exp %318 : vector<1x10xf32>
    %cst_113 = arith.constant dense<0.000000e+00> : vector<1xf32>
    %320 = vector.multi_reduction <add>, %319, %cst_113 [1] : vector<1x10xf32> to vector<1xf32>
    %321 = vector.shape_cast %320 : vector<1xf32> to vector<1x1xf32>
    %322 = vector.broadcast %321 : vector<1x1xf32> to vector<1x10xf32>
    %323 = arith.divf %319, %322 : vector<1x10xf32>
    %cst_114 = arith.constant dense<0.000000e+00> : vector<1x32xf32>
    %324 = tpu.matmul %323, %2, %cst_114 {dimension_numbers = #tpu.dot_dimension_numbers<[1], [0], [0], [1], [0, 0, 1, 1], [], []>} : vector<1x10xf32>, vector<10x32xf32>, vector<1x32xf32> -> vector<1x32xf32>
    %325 = vector.extract_strided_slice %309 {offsets = [0, 32], sizes = [1, 32], strides = [1, 1]} : vector<1x64xf32> to vector<1x32xf32>
    %cst_115 = arith.constant dense<0.000000e+00> : vector<1x32xf32>
    %326 = tpu.matmul %324, %6, %cst_115 {dimension_numbers = #tpu.dot_dimension_numbers<[1], [0], [0], [1], [0, 0, 1, 1], [], []>} : vector<1x32xf32>, vector<32x32xf32>, vector<1x32xf32> -> vector<1x32xf32>
    %327 = arith.addf %325, %326 : vector<1x32xf32>
    %cst_116 = arith.constant 0.000000e+00 : f32
    %328 = vector.broadcast %cst_116 : f32 to vector<1x32xf32>
    %329 = arith.maximumf %327, %328 : vector<1x32xf32>
    %cst_117 = arith.constant dense<0.000000e+00> : vector<1x96xf32>
    %330 = tpu.matmul %329, %5, %cst_117 {dimension_numbers = #tpu.dot_dimension_numbers<[1], [0], [0], [1], [0, 0, 1, 1], [], []>} : vector<1x32xf32>, vector<32x96xf32>, vector<1x96xf32> -> vector<1x96xf32>
    %331 = arith.addf %330, %10 : vector<1x96xf32>
    %332 = vector.extract_strided_slice %331 {offsets = [0, 0], sizes = [1, 32], strides = [1, 1]} : vector<1x96xf32> to vector<1x32xf32>
    %333 = vector.extract_strided_slice %311 {offsets = [0, 32], sizes = [1, 32], strides = [1, 1]} : vector<1x128xf32> to vector<1x32xf32>
    %334 = arith.addf %332, %333 : vector<1x32xf32>
    %335 = arith.negf %334 : vector<1x32xf32>
    %336 = math.exp %335 : vector<1x32xf32>
    %cst_118 = arith.constant 1.000000e+00 : f32
    %337 = vector.broadcast %cst_118 : f32 to vector<1x32xf32>
    %338 = arith.addf %337, %336 : vector<1x32xf32>
    %339 = arith.divf %337, %338 : vector<1x32xf32>
    %340 = vector.extract_strided_slice %331 {offsets = [0, 32], sizes = [1, 32], strides = [1, 1]} : vector<1x96xf32> to vector<1x32xf32>
    %341 = vector.extract_strided_slice %311 {offsets = [0, 64], sizes = [1, 32], strides = [1, 1]} : vector<1x128xf32> to vector<1x32xf32>
    %342 = arith.addf %340, %341 : vector<1x32xf32>
    %343 = arith.negf %342 : vector<1x32xf32>
    %344 = math.exp %343 : vector<1x32xf32>
    %cst_119 = arith.constant 1.000000e+00 : f32
    %345 = vector.broadcast %cst_119 : f32 to vector<1x32xf32>
    %346 = arith.addf %345, %344 : vector<1x32xf32>
    %347 = arith.divf %345, %346 : vector<1x32xf32>
    %348 = vector.extract_strided_slice %331 {offsets = [0, 64], sizes = [1, 32], strides = [1, 1]} : vector<1x96xf32> to vector<1x32xf32>
    %349 = vector.extract_strided_slice %311 {offsets = [0, 96], sizes = [1, 32], strides = [1, 1]} : vector<1x128xf32> to vector<1x32xf32>
    %350 = arith.mulf %339, %349 : vector<1x32xf32>
    %351 = arith.addf %348, %350 : vector<1x32xf32>
    %352 = math.tanh %351 : vector<1x32xf32>
    %cst_120 = arith.constant 1.000000e+00 : f32
    %353 = vector.broadcast %cst_120 : f32 to vector<1x32xf32>
    %354 = arith.subf %353, %347 : vector<1x32xf32>
    %355 = arith.mulf %354, %352 : vector<1x32xf32>
    %356 = arith.mulf %347, %285 : vector<1x32xf32>
    %357 = arith.addf %355, %356 : vector<1x32xf32>
    %cst_121 = arith.constant dense<0.000000e+00> : vector<1x64xf32>
    %358 = tpu.matmul %357, %7, %cst_121 {dimension_numbers = #tpu.dot_dimension_numbers<[1], [0], [0], [1], [0, 0, 1, 1], [], []>} : vector<1x32xf32>, vector<32x64xf32>, vector<1x64xf32> -> vector<1x64xf32>
    %359 = arith.addf %358, %11 : vector<1x64xf32>
    %cst_122 = arith.constant dense<0xFF800000> : vector<1xf32>
    %360 = vector.multi_reduction <maximumf>, %359, %cst_122 [1] : vector<1x64xf32> to vector<1xf32>
    %361 = vector.shape_cast %360 : vector<1xf32> to vector<1x1xf32>
    %362 = vector.broadcast %361 : vector<1x1xf32> to vector<1x64xf32>
    %363 = arith.subf %359, %362 : vector<1x64xf32>
    %364 = math.exp %363 : vector<1x64xf32>
    %cst_123 = arith.constant dense<0.000000e+00> : vector<1xf32>
    %365 = vector.multi_reduction <add>, %364, %cst_123 [1] : vector<1x64xf32> to vector<1xf32>
    %366 = vector.shape_cast %365 : vector<1xf32> to vector<1x1xf32>
    %367 = math.log %366 : vector<1x1xf32>
    %368 = vector.broadcast %367 : vector<1x1xf32> to vector<1x64xf32>
    %369 = arith.subf %363, %368 : vector<1x64xf32>
    %c4_124 = arith.constant 4 : index
    %c0_125 = arith.constant 0 : index
    %370 = vector.load %arg5[%c4_124, %c0_125] : memref<8x128xf32, #tpu.memory_space<vmem>>, vector<1x64xf32>
    tpu.vector_store %arg5[%c4_124, %c0_125], %369 {strides = array<i32>} : memref<8x128xf32, #tpu.memory_space<vmem>>, vector<1x64xf32>,
    %c4_126 = arith.constant 4 : index
    %c64_127 = arith.constant 64 : index
    %371 = vector.load %arg5[%c4_126, %c64_127] : memref<8x128xf32, #tpu.memory_space<vmem>>, vector<1x32xf32>
    tpu.vector_store %arg5[%c4_126, %c64_127], %357 {strides = array<i32>} : memref<8x128xf32, #tpu.memory_space<vmem>>, vector<1x32xf32>,
    %c4_128 = arith.constant 4 : index
    %c96_129 = arith.constant 96 : index
    %372 = vector.load %arg5[%c4_128, %c96_129] : memref<8x128xf32, #tpu.memory_space<vmem>>, vector<1x10xf32>
    tpu.vector_store %arg5[%c4_128, %c96_129], %323 {strides = array<i32>} : memref<8x128xf32, #tpu.memory_space<vmem>>, vector<1x10xf32>,
    %c5 = arith.constant 5 : index
    %373 = memref.load %arg1[%c5] : memref<8xi32, #tpu.memory_space<smem>>
    %c0_i32_130 = arith.constant 0 : i32
    %c63_i32_131 = arith.constant 63 : i32
    %374 = arith.maxsi %c0_i32_130, %373 : i32
    %375 = arith.minsi %c63_i32_131, %374 : i32
    %c8_i32_132 = arith.constant 8 : i32
    %376 = arith.muli %375, %c8_i32_132 : i32
    %377 = tpu.assume_multiple %376, 8 : i32
    %378 = arith.index_cast %377 : i32 to index
    %c0_133 = arith.constant 0 : index
    %379 = vector.load %arg4[%378, %c0_133] : memref<704x128xf32, #tpu.memory_space<vmem>>, vector<1x32xf32>
    %cst_134 = arith.constant dense<0.000000e+00> : vector<1x64xf32>
    %380 = tpu.matmul %379, %4, %cst_134 {dimension_numbers = #tpu.dot_dimension_numbers<[1], [0], [0], [1], [0, 0, 1, 1], [], []>} : vector<1x32xf32>, vector<32x64xf32>, vector<1x64xf32> -> vector<1x64xf32>
    %381 = arith.addf %380, %9 : vector<1x64xf32>
    %cst_135 = arith.constant dense<0.000000e+00> : vector<1x128xf32>
    %382 = tpu.matmul %357, %3, %cst_135 {dimension_numbers = #tpu.dot_dimension_numbers<[1], [0], [0], [1], [0, 0, 1, 1], [], []>} : vector<1x32xf32>, vector<32x128xf32>, vector<1x128xf32> -> vector<1x128xf32>
    %383 = arith.addf %382, %8 : vector<1x128xf32>
    %384 = vector.extract_strided_slice %381 {offsets = [0, 0], sizes = [1, 10], strides = [1, 1]} : vector<1x64xf32> to vector<1x10xf32>
    %385 = vector.extract_strided_slice %383 {offsets = [0, 0], sizes = [1, 10], strides = [1, 1]} : vector<1x128xf32> to vector<1x10xf32>
    %386 = arith.addf %384, %385 : vector<1x10xf32>
    %cst_136 = arith.constant dense<0xFF800000> : vector<1xf32>
    %387 = vector.multi_reduction <maximumf>, %386, %cst_136 [1] : vector<1x10xf32> to vector<1xf32>
    %388 = vector.shape_cast %387 : vector<1xf32> to vector<1x1xf32>
    %389 = vector.broadcast %388 : vector<1x1xf32> to vector<1x10xf32>
    %390 = arith.subf %386, %389 : vector<1x10xf32>
    %391 = math.exp %390 : vector<1x10xf32>
    %cst_137 = arith.constant dense<0.000000e+00> : vector<1xf32>
    %392 = vector.multi_reduction <add>, %391, %cst_137 [1] : vector<1x10xf32> to vector<1xf32>
    %393 = vector.shape_cast %392 : vector<1xf32> to vector<1x1xf32>
    %394 = vector.broadcast %393 : vector<1x1xf32> to vector<1x10xf32>
    %395 = arith.divf %391, %394 : vector<1x10xf32>
    %cst_138 = arith.constant dense<0.000000e+00> : vector<1x32xf32>
    %396 = tpu.matmul %395, %2, %cst_138 {dimension_numbers = #tpu.dot_dimension_numbers<[1], [0], [0], [1], [0, 0, 1, 1], [], []>} : vector<1x10xf32>, vector<10x32xf32>, vector<1x32xf32> -> vector<1x32xf32>
    %397 = vector.extract_strided_slice %381 {offsets = [0, 32], sizes = [1, 32], strides = [1, 1]} : vector<1x64xf32> to vector<1x32xf32>
    %cst_139 = arith.constant dense<0.000000e+00> : vector<1x32xf32>
    %398 = tpu.matmul %396, %6, %cst_139 {dimension_numbers = #tpu.dot_dimension_numbers<[1], [0], [0], [1], [0, 0, 1, 1], [], []>} : vector<1x32xf32>, vector<32x32xf32>, vector<1x32xf32> -> vector<1x32xf32>
    %399 = arith.addf %397, %398 : vector<1x32xf32>
    %cst_140 = arith.constant 0.000000e+00 : f32
    %400 = vector.broadcast %cst_140 : f32 to vector<1x32xf32>
    %401 = arith.maximumf %399, %400 : vector<1x32xf32>
    %cst_141 = arith.constant dense<0.000000e+00> : vector<1x96xf32>
    %402 = tpu.matmul %401, %5, %cst_141 {dimension_numbers = #tpu.dot_dimension_numbers<[1], [0], [0], [1], [0, 0, 1, 1], [], []>} : vector<1x32xf32>, vector<32x96xf32>, vector<1x96xf32> -> vector<1x96xf32>
    %403 = arith.addf %402, %10 : vector<1x96xf32>
    %404 = vector.extract_strided_slice %403 {offsets = [0, 0], sizes = [1, 32], strides = [1, 1]} : vector<1x96xf32> to vector<1x32xf32>
    %405 = vector.extract_strided_slice %383 {offsets = [0, 32], sizes = [1, 32], strides = [1, 1]} : vector<1x128xf32> to vector<1x32xf32>
    %406 = arith.addf %404, %405 : vector<1x32xf32>
    %407 = arith.negf %406 : vector<1x32xf32>
    %408 = math.exp %407 : vector<1x32xf32>
    %cst_142 = arith.constant 1.000000e+00 : f32
    %409 = vector.broadcast %cst_142 : f32 to vector<1x32xf32>
    %410 = arith.addf %409, %408 : vector<1x32xf32>
    %411 = arith.divf %409, %410 : vector<1x32xf32>
    %412 = vector.extract_strided_slice %403 {offsets = [0, 32], sizes = [1, 32], strides = [1, 1]} : vector<1x96xf32> to vector<1x32xf32>
    %413 = vector.extract_strided_slice %383 {offsets = [0, 64], sizes = [1, 32], strides = [1, 1]} : vector<1x128xf32> to vector<1x32xf32>
    %414 = arith.addf %412, %413 : vector<1x32xf32>
    %415 = arith.negf %414 : vector<1x32xf32>
    %416 = math.exp %415 : vector<1x32xf32>
    %cst_143 = arith.constant 1.000000e+00 : f32
    %417 = vector.broadcast %cst_143 : f32 to vector<1x32xf32>
    %418 = arith.addf %417, %416 : vector<1x32xf32>
    %419 = arith.divf %417, %418 : vector<1x32xf32>
    %420 = vector.extract_strided_slice %403 {offsets = [0, 64], sizes = [1, 32], strides = [1, 1]} : vector<1x96xf32> to vector<1x32xf32>
    %421 = vector.extract_strided_slice %383 {offsets = [0, 96], sizes = [1, 32], strides = [1, 1]} : vector<1x128xf32> to vector<1x32xf32>
    %422 = arith.mulf %411, %421 : vector<1x32xf32>
    %423 = arith.addf %420, %422 : vector<1x32xf32>
    %424 = math.tanh %423 : vector<1x32xf32>
    %cst_144 = arith.constant 1.000000e+00 : f32
    %425 = vector.broadcast %cst_144 : f32 to vector<1x32xf32>
    %426 = arith.subf %425, %419 : vector<1x32xf32>
    %427 = arith.mulf %426, %424 : vector<1x32xf32>
    %428 = arith.mulf %419, %357 : vector<1x32xf32>
    %429 = arith.addf %427, %428 : vector<1x32xf32>
    %cst_145 = arith.constant dense<0.000000e+00> : vector<1x64xf32>
    %430 = tpu.matmul %429, %7, %cst_145 {dimension_numbers = #tpu.dot_dimension_numbers<[1], [0], [0], [1], [0, 0, 1, 1], [], []>} : vector<1x32xf32>, vector<32x64xf32>, vector<1x64xf32> -> vector<1x64xf32>
    %431 = arith.addf %430, %11 : vector<1x64xf32>
    %cst_146 = arith.constant dense<0xFF800000> : vector<1xf32>
    %432 = vector.multi_reduction <maximumf>, %431, %cst_146 [1] : vector<1x64xf32> to vector<1xf32>
    %433 = vector.shape_cast %432 : vector<1xf32> to vector<1x1xf32>
    %434 = vector.broadcast %433 : vector<1x1xf32> to vector<1x64xf32>
    %435 = arith.subf %431, %434 : vector<1x64xf32>
    %436 = math.exp %435 : vector<1x64xf32>
    %cst_147 = arith.constant dense<0.000000e+00> : vector<1xf32>
    %437 = vector.multi_reduction <add>, %436, %cst_147 [1] : vector<1x64xf32> to vector<1xf32>
    %438 = vector.shape_cast %437 : vector<1xf32> to vector<1x1xf32>
    %439 = math.log %438 : vector<1x1xf32>
    %440 = vector.broadcast %439 : vector<1x1xf32> to vector<1x64xf32>
    %441 = arith.subf %435, %440 : vector<1x64xf32>
    %c5_148 = arith.constant 5 : index
    %c0_149 = arith.constant 0 : index
    %442 = vector.load %arg5[%c5_148, %c0_149] : memref<8x128xf32, #tpu.memory_space<vmem>>, vector<1x64xf32>
    tpu.vector_store %arg5[%c5_148, %c0_149], %441 {strides = array<i32>} : memref<8x128xf32, #tpu.memory_space<vmem>>, vector<1x64xf32>,
    %c5_150 = arith.constant 5 : index
    %c64_151 = arith.constant 64 : index
    %443 = vector.load %arg5[%c5_150, %c64_151] : memref<8x128xf32, #tpu.memory_space<vmem>>, vector<1x32xf32>
    tpu.vector_store %arg5[%c5_150, %c64_151], %429 {strides = array<i32>} : memref<8x128xf32, #tpu.memory_space<vmem>>, vector<1x32xf32>,
    %c5_152 = arith.constant 5 : index
    %c96_153 = arith.constant 96 : index
    %444 = vector.load %arg5[%c5_152, %c96_153] : memref<8x128xf32, #tpu.memory_space<vmem>>, vector<1x10xf32>
    tpu.vector_store %arg5[%c5_152, %c96_153], %395 {strides = array<i32>} : memref<8x128xf32, #tpu.memory_space<vmem>>, vector<1x10xf32>,
    %c6 = arith.constant 6 : index
    %445 = memref.load %arg1[%c6] : memref<8xi32, #tpu.memory_space<smem>>
    %c0_i32_154 = arith.constant 0 : i32
    %c63_i32_155 = arith.constant 63 : i32
    %446 = arith.maxsi %c0_i32_154, %445 : i32
    %447 = arith.minsi %c63_i32_155, %446 : i32
    %c8_i32_156 = arith.constant 8 : i32
    %448 = arith.muli %447, %c8_i32_156 : i32
    %449 = tpu.assume_multiple %448, 8 : i32
    %450 = arith.index_cast %449 : i32 to index
    %c0_157 = arith.constant 0 : index
    %451 = vector.load %arg4[%450, %c0_157] : memref<704x128xf32, #tpu.memory_space<vmem>>, vector<1x32xf32>
    %cst_158 = arith.constant dense<0.000000e+00> : vector<1x64xf32>
    %452 = tpu.matmul %451, %4, %cst_158 {dimension_numbers = #tpu.dot_dimension_numbers<[1], [0], [0], [1], [0, 0, 1, 1], [], []>} : vector<1x32xf32>, vector<32x64xf32>, vector<1x64xf32> -> vector<1x64xf32>
    %453 = arith.addf %452, %9 : vector<1x64xf32>
    %cst_159 = arith.constant dense<0.000000e+00> : vector<1x128xf32>
    %454 = tpu.matmul %429, %3, %cst_159 {dimension_numbers = #tpu.dot_dimension_numbers<[1], [0], [0], [1], [0, 0, 1, 1], [], []>} : vector<1x32xf32>, vector<32x128xf32>, vector<1x128xf32> -> vector<1x128xf32>
    %455 = arith.addf %454, %8 : vector<1x128xf32>
    %456 = vector.extract_strided_slice %453 {offsets = [0, 0], sizes = [1, 10], strides = [1, 1]} : vector<1x64xf32> to vector<1x10xf32>
    %457 = vector.extract_strided_slice %455 {offsets = [0, 0], sizes = [1, 10], strides = [1, 1]} : vector<1x128xf32> to vector<1x10xf32>
    %458 = arith.addf %456, %457 : vector<1x10xf32>
    %cst_160 = arith.constant dense<0xFF800000> : vector<1xf32>
    %459 = vector.multi_reduction <maximumf>, %458, %cst_160 [1] : vector<1x10xf32> to vector<1xf32>
    %460 = vector.shape_cast %459 : vector<1xf32> to vector<1x1xf32>
    %461 = vector.broadcast %460 : vector<1x1xf32> to vector<1x10xf32>
    %462 = arith.subf %458, %461 : vector<1x10xf32>
    %463 = math.exp %462 : vector<1x10xf32>
    %cst_161 = arith.constant dense<0.000000e+00> : vector<1xf32>
    %464 = vector.multi_reduction <add>, %463, %cst_161 [1] : vector<1x10xf32> to vector<1xf32>
    %465 = vector.shape_cast %464 : vector<1xf32> to vector<1x1xf32>
    %466 = vector.broadcast %465 : vector<1x1xf32> to vector<1x10xf32>
    %467 = arith.divf %463, %466 : vector<1x10xf32>
    %cst_162 = arith.constant dense<0.000000e+00> : vector<1x32xf32>
    %468 = tpu.matmul %467, %2, %cst_162 {dimension_numbers = #tpu.dot_dimension_numbers<[1], [0], [0], [1], [0, 0, 1, 1], [], []>} : vector<1x10xf32>, vector<10x32xf32>, vector<1x32xf32> -> vector<1x32xf32>
    %469 = vector.extract_strided_slice %453 {offsets = [0, 32], sizes = [1, 32], strides = [1, 1]} : vector<1x64xf32> to vector<1x32xf32>
    %cst_163 = arith.constant dense<0.000000e+00> : vector<1x32xf32>
    %470 = tpu.matmul %468, %6, %cst_163 {dimension_numbers = #tpu.dot_dimension_numbers<[1], [0], [0], [1], [0, 0, 1, 1], [], []>} : vector<1x32xf32>, vector<32x32xf32>, vector<1x32xf32> -> vector<1x32xf32>
    %471 = arith.addf %469, %470 : vector<1x32xf32>
    %cst_164 = arith.constant 0.000000e+00 : f32
    %472 = vector.broadcast %cst_164 : f32 to vector<1x32xf32>
    %473 = arith.maximumf %471, %472 : vector<1x32xf32>
    %cst_165 = arith.constant dense<0.000000e+00> : vector<1x96xf32>
    %474 = tpu.matmul %473, %5, %cst_165 {dimension_numbers = #tpu.dot_dimension_numbers<[1], [0], [0], [1], [0, 0, 1, 1], [], []>} : vector<1x32xf32>, vector<32x96xf32>, vector<1x96xf32> -> vector<1x96xf32>
    %475 = arith.addf %474, %10 : vector<1x96xf32>
    %476 = vector.extract_strided_slice %475 {offsets = [0, 0], sizes = [1, 32], strides = [1, 1]} : vector<1x96xf32> to vector<1x32xf32>
    %477 = vector.extract_strided_slice %455 {offsets = [0, 32], sizes = [1, 32], strides = [1, 1]} : vector<1x128xf32> to vector<1x32xf32>
    %478 = arith.addf %476, %477 : vector<1x32xf32>
    %479 = arith.negf %478 : vector<1x32xf32>
    %480 = math.exp %479 : vector<1x32xf32>
    %cst_166 = arith.constant 1.000000e+00 : f32
    %481 = vector.broadcast %cst_166 : f32 to vector<1x32xf32>
    %482 = arith.addf %481, %480 : vector<1x32xf32>
    %483 = arith.divf %481, %482 : vector<1x32xf32>
    %484 = vector.extract_strided_slice %475 {offsets = [0, 32], sizes = [1, 32], strides = [1, 1]} : vector<1x96xf32> to vector<1x32xf32>
    %485 = vector.extract_strided_slice %455 {offsets = [0, 64], sizes = [1, 32], strides = [1, 1]} : vector<1x128xf32> to vector<1x32xf32>
    %486 = arith.addf %484, %485 : vector<1x32xf32>
    %487 = arith.negf %486 : vector<1x32xf32>
    %488 = math.exp %487 : vector<1x32xf32>
    %cst_167 = arith.constant 1.000000e+00 : f32
    %489 = vector.broadcast %cst_167 : f32 to vector<1x32xf32>
    %490 = arith.addf %489, %488 : vector<1x32xf32>
    %491 = arith.divf %489, %490 : vector<1x32xf32>
    %492 = vector.extract_strided_slice %475 {offsets = [0, 64], sizes = [1, 32], strides = [1, 1]} : vector<1x96xf32> to vector<1x32xf32>
    %493 = vector.extract_strided_slice %455 {offsets = [0, 96], sizes = [1, 32], strides = [1, 1]} : vector<1x128xf32> to vector<1x32xf32>
    %494 = arith.mulf %483, %493 : vector<1x32xf32>
    %495 = arith.addf %492, %494 : vector<1x32xf32>
    %496 = math.tanh %495 : vector<1x32xf32>
    %cst_168 = arith.constant 1.000000e+00 : f32
    %497 = vector.broadcast %cst_168 : f32 to vector<1x32xf32>
    %498 = arith.subf %497, %491 : vector<1x32xf32>
    %499 = arith.mulf %498, %496 : vector<1x32xf32>
    %500 = arith.mulf %491, %429 : vector<1x32xf32>
    %501 = arith.addf %499, %500 : vector<1x32xf32>
    %cst_169 = arith.constant dense<0.000000e+00> : vector<1x64xf32>
    %502 = tpu.matmul %501, %7, %cst_169 {dimension_numbers = #tpu.dot_dimension_numbers<[1], [0], [0], [1], [0, 0, 1, 1], [], []>} : vector<1x32xf32>, vector<32x64xf32>, vector<1x64xf32> -> vector<1x64xf32>
    %503 = arith.addf %502, %11 : vector<1x64xf32>
    %cst_170 = arith.constant dense<0xFF800000> : vector<1xf32>
    %504 = vector.multi_reduction <maximumf>, %503, %cst_170 [1] : vector<1x64xf32> to vector<1xf32>
    %505 = vector.shape_cast %504 : vector<1xf32> to vector<1x1xf32>
    %506 = vector.broadcast %505 : vector<1x1xf32> to vector<1x64xf32>
    %507 = arith.subf %503, %506 : vector<1x64xf32>
    %508 = math.exp %507 : vector<1x64xf32>
    %cst_171 = arith.constant dense<0.000000e+00> : vector<1xf32>
    %509 = vector.multi_reduction <add>, %508, %cst_171 [1] : vector<1x64xf32> to vector<1xf32>
    %510 = vector.shape_cast %509 : vector<1xf32> to vector<1x1xf32>
    %511 = math.log %510 : vector<1x1xf32>
    %512 = vector.broadcast %511 : vector<1x1xf32> to vector<1x64xf32>
    %513 = arith.subf %507, %512 : vector<1x64xf32>
    %c6_172 = arith.constant 6 : index
    %c0_173 = arith.constant 0 : index
    %514 = vector.load %arg5[%c6_172, %c0_173] : memref<8x128xf32, #tpu.memory_space<vmem>>, vector<1x64xf32>
    tpu.vector_store %arg5[%c6_172, %c0_173], %513 {strides = array<i32>} : memref<8x128xf32, #tpu.memory_space<vmem>>, vector<1x64xf32>,
    %c6_174 = arith.constant 6 : index
    %c64_175 = arith.constant 64 : index
    %515 = vector.load %arg5[%c6_174, %c64_175] : memref<8x128xf32, #tpu.memory_space<vmem>>, vector<1x32xf32>
    tpu.vector_store %arg5[%c6_174, %c64_175], %501 {strides = array<i32>} : memref<8x128xf32, #tpu.memory_space<vmem>>, vector<1x32xf32>,
    %c6_176 = arith.constant 6 : index
    %c96_177 = arith.constant 96 : index
    %516 = vector.load %arg5[%c6_176, %c96_177] : memref<8x128xf32, #tpu.memory_space<vmem>>, vector<1x10xf32>
    tpu.vector_store %arg5[%c6_176, %c96_177], %467 {strides = array<i32>} : memref<8x128xf32, #tpu.memory_space<vmem>>, vector<1x10xf32>,
    %c7 = arith.constant 7 : index
    %517 = memref.load %arg1[%c7] : memref<8xi32, #tpu.memory_space<smem>>
    %c0_i32_178 = arith.constant 0 : i32
    %c63_i32_179 = arith.constant 63 : i32
    %518 = arith.maxsi %c0_i32_178, %517 : i32
    %519 = arith.minsi %c63_i32_179, %518 : i32
    %c8_i32_180 = arith.constant 8 : i32
    %520 = arith.muli %519, %c8_i32_180 : i32
    %521 = tpu.assume_multiple %520, 8 : i32
    %522 = arith.index_cast %521 : i32 to index
    %c0_181 = arith.constant 0 : index
    %523 = vector.load %arg4[%522, %c0_181] : memref<704x128xf32, #tpu.memory_space<vmem>>, vector<1x32xf32>
    %cst_182 = arith.constant dense<0.000000e+00> : vector<1x64xf32>
    %524 = tpu.matmul %523, %4, %cst_182 {dimension_numbers = #tpu.dot_dimension_numbers<[1], [0], [0], [1], [0, 0, 1, 1], [], []>} : vector<1x32xf32>, vector<32x64xf32>, vector<1x64xf32> -> vector<1x64xf32>
    %525 = arith.addf %524, %9 : vector<1x64xf32>
    %cst_183 = arith.constant dense<0.000000e+00> : vector<1x128xf32>
    %526 = tpu.matmul %501, %3, %cst_183 {dimension_numbers = #tpu.dot_dimension_numbers<[1], [0], [0], [1], [0, 0, 1, 1], [], []>} : vector<1x32xf32>, vector<32x128xf32>, vector<1x128xf32> -> vector<1x128xf32>
    %527 = arith.addf %526, %8 : vector<1x128xf32>
    %528 = vector.extract_strided_slice %525 {offsets = [0, 0], sizes = [1, 10], strides = [1, 1]} : vector<1x64xf32> to vector<1x10xf32>
    %529 = vector.extract_strided_slice %527 {offsets = [0, 0], sizes = [1, 10], strides = [1, 1]} : vector<1x128xf32> to vector<1x10xf32>
    %530 = arith.addf %528, %529 : vector<1x10xf32>
    %cst_184 = arith.constant dense<0xFF800000> : vector<1xf32>
    %531 = vector.multi_reduction <maximumf>, %530, %cst_184 [1] : vector<1x10xf32> to vector<1xf32>
    %532 = vector.shape_cast %531 : vector<1xf32> to vector<1x1xf32>
    %533 = vector.broadcast %532 : vector<1x1xf32> to vector<1x10xf32>
    %534 = arith.subf %530, %533 : vector<1x10xf32>
    %535 = math.exp %534 : vector<1x10xf32>
    %cst_185 = arith.constant dense<0.000000e+00> : vector<1xf32>
    %536 = vector.multi_reduction <add>, %535, %cst_185 [1] : vector<1x10xf32> to vector<1xf32>
    %537 = vector.shape_cast %536 : vector<1xf32> to vector<1x1xf32>
    %538 = vector.broadcast %537 : vector<1x1xf32> to vector<1x10xf32>
    %539 = arith.divf %535, %538 : vector<1x10xf32>
    %cst_186 = arith.constant dense<0.000000e+00> : vector<1x32xf32>
    %540 = tpu.matmul %539, %2, %cst_186 {dimension_numbers = #tpu.dot_dimension_numbers<[1], [0], [0], [1], [0, 0, 1, 1], [], []>} : vector<1x10xf32>, vector<10x32xf32>, vector<1x32xf32> -> vector<1x32xf32>
    %541 = vector.extract_strided_slice %525 {offsets = [0, 32], sizes = [1, 32], strides = [1, 1]} : vector<1x64xf32> to vector<1x32xf32>
    %cst_187 = arith.constant dense<0.000000e+00> : vector<1x32xf32>
    %542 = tpu.matmul %540, %6, %cst_187 {dimension_numbers = #tpu.dot_dimension_numbers<[1], [0], [0], [1], [0, 0, 1, 1], [], []>} : vector<1x32xf32>, vector<32x32xf32>, vector<1x32xf32> -> vector<1x32xf32>
    %543 = arith.addf %541, %542 : vector<1x32xf32>
    %cst_188 = arith.constant 0.000000e+00 : f32
    %544 = vector.broadcast %cst_188 : f32 to vector<1x32xf32>
    %545 = arith.maximumf %543, %544 : vector<1x32xf32>
    %cst_189 = arith.constant dense<0.000000e+00> : vector<1x96xf32>
    %546 = tpu.matmul %545, %5, %cst_189 {dimension_numbers = #tpu.dot_dimension_numbers<[1], [0], [0], [1], [0, 0, 1, 1], [], []>} : vector<1x32xf32>, vector<32x96xf32>, vector<1x96xf32> -> vector<1x96xf32>
    %547 = arith.addf %546, %10 : vector<1x96xf32>
    %548 = vector.extract_strided_slice %547 {offsets = [0, 0], sizes = [1, 32], strides = [1, 1]} : vector<1x96xf32> to vector<1x32xf32>
    %549 = vector.extract_strided_slice %527 {offsets = [0, 32], sizes = [1, 32], strides = [1, 1]} : vector<1x128xf32> to vector<1x32xf32>
    %550 = arith.addf %548, %549 : vector<1x32xf32>
    %551 = arith.negf %550 : vector<1x32xf32>
    %552 = math.exp %551 : vector<1x32xf32>
    %cst_190 = arith.constant 1.000000e+00 : f32
    %553 = vector.broadcast %cst_190 : f32 to vector<1x32xf32>
    %554 = arith.addf %553, %552 : vector<1x32xf32>
    %555 = arith.divf %553, %554 : vector<1x32xf32>
    %556 = vector.extract_strided_slice %547 {offsets = [0, 32], sizes = [1, 32], strides = [1, 1]} : vector<1x96xf32> to vector<1x32xf32>
    %557 = vector.extract_strided_slice %527 {offsets = [0, 64], sizes = [1, 32], strides = [1, 1]} : vector<1x128xf32> to vector<1x32xf32>
    %558 = arith.addf %556, %557 : vector<1x32xf32>
    %559 = arith.negf %558 : vector<1x32xf32>
    %560 = math.exp %559 : vector<1x32xf32>
    %cst_191 = arith.constant 1.000000e+00 : f32
    %561 = vector.broadcast %cst_191 : f32 to vector<1x32xf32>
    %562 = arith.addf %561, %560 : vector<1x32xf32>
    %563 = arith.divf %561, %562 : vector<1x32xf32>
    %564 = vector.extract_strided_slice %547 {offsets = [0, 64], sizes = [1, 32], strides = [1, 1]} : vector<1x96xf32> to vector<1x32xf32>
    %565 = vector.extract_strided_slice %527 {offsets = [0, 96], sizes = [1, 32], strides = [1, 1]} : vector<1x128xf32> to vector<1x32xf32>
    %566 = arith.mulf %555, %565 : vector<1x32xf32>
    %567 = arith.addf %564, %566 : vector<1x32xf32>
    %568 = math.tanh %567 : vector<1x32xf32>
    %cst_192 = arith.constant 1.000000e+00 : f32
    %569 = vector.broadcast %cst_192 : f32 to vector<1x32xf32>
    %570 = arith.subf %569, %563 : vector<1x32xf32>
    %571 = arith.mulf %570, %568 : vector<1x32xf32>
    %572 = arith.mulf %563, %501 : vector<1x32xf32>
    %573 = arith.addf %571, %572 : vector<1x32xf32>
    %cst_193 = arith.constant dense<0.000000e+00> : vector<1x64xf32>
    %574 = tpu.matmul %573, %7, %cst_193 {dimension_numbers = #tpu.dot_dimension_numbers<[1], [0], [0], [1], [0, 0, 1, 1], [], []>} : vector<1x32xf32>, vector<32x64xf32>, vector<1x64xf32> -> vector<1x64xf32>
    %575 = arith.addf %574, %11 : vector<1x64xf32>
    %cst_194 = arith.constant dense<0xFF800000> : vector<1xf32>
    %576 = vector.multi_reduction <maximumf>, %575, %cst_194 [1] : vector<1x64xf32> to vector<1xf32>
    %577 = vector.shape_cast %576 : vector<1xf32> to vector<1x1xf32>
    %578 = vector.broadcast %577 : vector<1x1xf32> to vector<1x64xf32>
    %579 = arith.subf %575, %578 : vector<1x64xf32>
    %580 = math.exp %579 : vector<1x64xf32>
    %cst_195 = arith.constant dense<0.000000e+00> : vector<1xf32>
    %581 = vector.multi_reduction <add>, %580, %cst_195 [1] : vector<1x64xf32> to vector<1xf32>
    %582 = vector.shape_cast %581 : vector<1xf32> to vector<1x1xf32>
    %583 = math.log %582 : vector<1x1xf32>
    %584 = vector.broadcast %583 : vector<1x1xf32> to vector<1x64xf32>
    %585 = arith.subf %579, %584 : vector<1x64xf32>
    %c7_196 = arith.constant 7 : index
    %c0_197 = arith.constant 0 : index
    %586 = vector.load %arg5[%c7_196, %c0_197] : memref<8x128xf32, #tpu.memory_space<vmem>>, vector<1x64xf32>
    tpu.vector_store %arg5[%c7_196, %c0_197], %585 {strides = array<i32>} : memref<8x128xf32, #tpu.memory_space<vmem>>, vector<1x64xf32>,
    %c7_198 = arith.constant 7 : index
    %c64_199 = arith.constant 64 : index
    %587 = vector.load %arg5[%c7_198, %c64_199] : memref<8x128xf32, #tpu.memory_space<vmem>>, vector<1x32xf32>
    tpu.vector_store %arg5[%c7_198, %c64_199], %573 {strides = array<i32>} : memref<8x128xf32, #tpu.memory_space<vmem>>, vector<1x32xf32>,
    %c7_200 = arith.constant 7 : index
    %c96_201 = arith.constant 96 : index
    %588 = vector.load %arg5[%c7_200, %c96_201] : memref<8x128xf32, #tpu.memory_space<vmem>>, vector<1x10xf32>
    tpu.vector_store %arg5[%c7_200, %c96_201], %539 {strides = array<i32>} : memref<8x128xf32, #tpu.memory_space<vmem>>, vector<1x10xf32>,
    return
  }
  func.func @transform_0(%arg0: i32, %arg1: memref<8xi32, #tpu.memory_space<smem>>) -> (i32, i32) {
    %c0_i32 = arith.constant 0 : i32
    %c0_i32_0 = arith.constant 0 : i32
    %c0_i32_1 = arith.constant 0 : i32
    return %c0_i32, %c0_i32_0 : i32, i32
  }
  func.func @transform_1(%arg0: i32, %arg1: memref<8xi32, #tpu.memory_space<smem>>) -> (i32, i32) {
    %c0_i32 = arith.constant 0 : i32
    %c0_i32_0 = arith.constant 0 : i32
    %c0_i32_1 = arith.constant 0 : i32
    return %c0_i32, %c0_i32_0 : i32, i32
  }
  func.func @transform_2(%arg0: i32, %arg1: memref<8xi32, #tpu.memory_space<smem>>) -> (i32, i32) {
    %c0_i32 = arith.constant 0 : i32
    %c0_i32_0 = arith.constant 0 : i32
    %c0_i32_1 = arith.constant 0 : i32
    return %c0_i32, %c0_i32_0 : i32, i32
  }
  func.func @transform_3(%arg0: i32, %arg1: memref<8xi32, #tpu.memory_space<smem>>) -> (i32, i32) {
    %c0_i32 = arith.constant 0 : i32
    %c0_i32_0 = arith.constant 0 : i32
    %c0_i32_1 = arith.constant 0 : i32
    return %c0_i32, %c0_i32_0 : i32, i32
  }
}

</mosaic_0001>

<llo_original>
// kernel: tpu_custom_call.1
$region0: #{tpu_custom_call.1}
  #allocation0 [shape = 'u32[]', space=smem, size = 0x4, offset = 0x4, fixed_abs, tag = 'smem constant byte address 0x4 - core index']
  #allocation1 [shape = 'u32[144,128]{1,0:T(1,128)}', space=vmem, size = 0x12000, scoped, tag = 'internal scratch']
  #allocation2 [shape = 's32[1]{0}', space=sflag, size = 0x4, scoped, tag = 'scoped memory for tpu_custom_call.1']
  #allocation3 [shape = 'u8[512]{0}', space=smem, size = 0x200, scoped, tag = 'prefetched SMEM operand 0']
  %s0 = inlined_call_operand.hbm [shape: s32[8], index: 0, kind: input, shape index: {}]
  %s1 = inlined_call_operand.vmem [shape: f32[1,32], index: 1, kind: input, shape index: {}]
  %s2 = inlined_call_operand.hbm [shape: f32[10,32], index: 2, kind: input, shape index: {}]
  %s3 = inlined_call_operand.hbm [shape: f32[704,128], index: 3, kind: input, shape index: {}]
  %s4 = inlined_call_operand.hbm [shape: f32[8,128], index: 4, kind: output, shape index: {}]
  %s5 = sld [smem:[#allocation0]]
  $region30: #{tpu_custom_call.1} parent=0
    _
  %s7 = ssub.s32 1, %s5
  %s8 = scalar_select 0, %s7, %s5
  %10 = dma.hbm_to_smem %s0, 16, [#allocation3], [#allocation2]
  %11 = dma.done [#allocation2], 16
  %12 = sfence
  $region1: #{tpu_custom_call.1} parent=0
    #allocation4 [shape = 'u8[8192]{0}', space=vmem, size = 0x2000, scoped, tag = 'input window, operand 2, single buffered']
    #allocation5 [shape = 's32[1]{0}', space=sflag, size = 0x4, scoped, tag = 'scoped memory for tpu_custom_call.1']
    #allocation6 [shape = 's32[1]{0}', space=sflag, size = 0x4, scoped, tag = 'scoped memory for tpu_custom_call.1']
    #allocation7 [shape = 'u8[360448]{0}', space=vmem, size = 0x58000, scoped, tag = 'input window, operand 3, single buffered']
    #allocation8 [shape = 's32[1]{0}', space=sflag, size = 0x4, scoped, tag = 'scoped memory for tpu_custom_call.1']
    #allocation9 [shape = 'u8[4096]{0}', space=vmem, size = 0x1000, scoped, tag = 'output window, operand 0, single buffered']
    %13 = vsyncpa [#allocation5], 0
    %14 = vsyncpa [#allocation8], 0
    %15 = vsyncpa [#allocation6], 0
    // Predicated region
    $region2: #{tpu_custom_call.1} parent=1 // pred_check
      _
    $region3: #{tpu_custom_call.1} parent=1 // pred_check_branch
      %17 = sbr.rel (0) target = $region5
    $region4: #{tpu_custom_call.1} parent=1 // pred_region
      _
    $region5: #{tpu_custom_call.1} parent=1 // pred_fallthru
      _
    // Predicated region
    $region6: #{tpu_custom_call.1} parent=1 // pred_check
      _
    $region7: #{tpu_custom_call.1} parent=1 // pred_check_branch
      %19 = sbr.rel (0) target = $region9
    $region8: #{tpu_custom_call.1} parent=1 // pred_region
      %s21 = ssub.s32 256, 256
      %22 = vsyncadd [#allocation5], %s21
      %s23 = sshll.u32 [#allocation4], 4
      %s24 = int_to_ptr.vmem [resolvable:$true] %s23
      %29 = dma.hbm_to_vmem [thread:$0]  %s2, 256, %s24, [#allocation5], 128, 128, 8
    $region9: #{tpu_custom_call.1} parent=1 // pred_fallthru
      _
    // Predicated region
    $region10: #{tpu_custom_call.1} parent=1 // pred_check
      _
    $region11: #{tpu_custom_call.1} parent=1 // pred_check_branch
      %31 = sbr.rel (0) target = $region13
    $region12: #{tpu_custom_call.1} parent=1 // pred_region
      %s33 = ssub.s32 11264, 11264
      %34 = vsyncadd [#allocation8], %s33
      %s35 = sshll.u32 [#allocation7], 4
      %s36 = int_to_ptr.vmem [resolvable:$true] %s35
      %41 = dma.hbm_to_vmem [thread:$0]  %s3, 11264, %s36, [#allocation8], 128, 128, 8
    $region13: #{tpu_custom_call.1} parent=1 // pred_fallthru
      _
    // Predicated region
    $region14: #{tpu_custom_call.1} parent=1 // pred_check
      _
    $region15: #{tpu_custom_call.1} parent=1 // pred_check_branch
      %43 = sbr.rel (0) target = $region17
    $region16: #{tpu_custom_call.1} parent=1 // pred_region
      %44 = dma.done [#allocation5], 256
    $region17: #{tpu_custom_call.1} parent=1 // pred_fallthru
      _
    // Predicated region
    $region18: #{tpu_custom_call.1} parent=1 // pred_check
      _
    $region19: #{tpu_custom_call.1} parent=1 // pred_check_branch
      %46 = sbr.rel (0) target = $region21
    $region20: #{tpu_custom_call.1} parent=1 // pred_region
      %47 = dma.done [#allocation8], 11264
    $region21: #{tpu_custom_call.1} parent=1 // pred_fallthru
      _
    %48 = vst [vmem:[#allocation9] sm:$0xff] 0.0
    %v49 = vld [vmem:[#allocation4] sm:$0xff]
    %v50 = vld [vmem:[#allocation4 + $0x8] sm:$0x3]
    %v51 = vld [vmem:[#allocation7 + $0x200] sm:$0xff]
    %v52 = vld [vmem:[#allocation7 + $0x208] sm:$0xff]
    %v53 = vld [vmem:[#allocation7 + $0x210] sm:$0xff]
    %v54 = vld [vmem:[#allocation7 + $0x218] sm:$0xff]
    %v55 = vld [vmem:[#allocation7 + $0x220] sm:$0xff]
    %v56 = vld [vmem:[#allocation7 + $0x228] sm:$0xff]
    %v57 = vld [vmem:[#allocation7 + $0x230] sm:$0xff]
    %v58 = vld [vmem:[#allocation7 + $0x238] sm:$0xff]
    %v59 = vld [vmem:[#allocation7 + $0x240] sm:$0xff]
    %v60 = vld [vmem:[#allocation7 + $0x248] sm:$0xff]
    %v61 = vld [vmem:[#allocation7 + $0x250] sm:$0xff]
    %v62 = vld [vmem:[#allocation7 + $0x258] sm:$0xff]
    %v63 = vld [vmem:[#allocation7 + $0x260] sm:$0xff]
    %v64 = vld [vmem:[#allocation7 + $0x268] sm:$0xff]
    %v65 = vld [vmem:[#allocation7 + $0x270] sm:$0xff]
    %v66 = vld [vmem:[#allocation7 + $0x278] sm:$0xff]
    %v67 = vld [vmem:[#allocation7 + $0x280] sm:$0xff]
    %v68 = vld [vmem:[#allocation7 + $0x288] sm:$0xff]
    %v69 = vld [vmem:[#allocation7 + $0x290] sm:$0xff]
    %v70 = vld [vmem:[#allocation7 + $0x298] sm:$0xff]
    %v71 = vld [vmem:[#allocation7 + $0x2a0] sm:$0x1]
    %v72 = vld [vmem:[#allocation7 + $0x2a8] sm:$0x1]
    %v73 = vld [vmem:[#allocation7 + $0x2b0] sm:$0x1]
    %v74 = vld [vmem:[#allocation7 + $0x2b8] sm:$0x1]
    %v75 = vld [vmem:[%s1] sm:$0x1]
    %s76 = sld [smem:[#allocation3]]
    %p77 = scmp.gt.s32.totalorder %s76, 0
    %s78 = scalar_select %p77, %s76, 0
    %p79 = scmp.lt.s32.totalorder %s78, 63
    %s80 = scalar_select %p79, %s78, 63
    %s81 = smul.u32 %s80, 8
    %s82 = scalar_lea.vmem [#allocation7], %s81
    %v83 = vld [vmem:[%s82] sm:$0x1]
    %vm84 = vcmask 261120
    %v86 = vsel %vm84, %v83, 0
    %88 = vmatprep.subr.mxu0 0.0
    %89 = vmatpush1.msra.mxu0 0.0
    %90 = vmatprep.subr.mxu0 0.0
    %91 = vmatpush1.msra.mxu0 0.0
    %92 = vmatprep.subr.mxu0 0.0
    %93 = vmatpush1.msra.mxu0 0.0
    %94 = vmatprep.subr.mxu0 0.0
    %95 = vmatpush1.msra.mxu0 0.0
    %96 = vmatprep.subr.mxu0 0.0
    %97 = vmatpush1.msra.mxu0 0.0
    %98 = vmatprep.subr.mxu0 0.0
    %99 = vmatpush1.msra.mxu0 0.0
    %100 = vmatprep.subr.mxu0 0.0
    %101 = vmatpush1.msra.mxu0 0.0
    %102 = vmatprep.subr.mxu0 0.0
    %103 = vmatpush1.msra.mxu0 0.0
    %104 = vmatprep.subr.mxu0 0.0
    %105 = vmatpush1.msra.mxu0 0.0
    %106 = vmatprep.subr.mxu0 0.0
    %107 = vmatpush1.msra.mxu0 0.0
    %108 = vmatprep.subr.mxu0 0.0
    %109 = vmatpush1.msra.mxu0 0.0
    %110 = vmatprep.subr.mxu0 0.0
    %111 = vmatpush1.msra.mxu0 0.0
    %112 = vmatprep.subr.mxu0 0.0
    %113 = vmatpush1.msra.mxu0 %v58
    %114 = vmatprep.subr.mxu0 0.0
    %115 = vmatpush1.msra.mxu0 %v57
    %116 = vmatprep.subr.mxu0 0.0
    %117 = vmatpush1.msra.mxu0 %v56
    %118 = vmatprep.subr.mxu0 0.0
    %119 = vmatpush1.msra.mxu0 %v55
    %120 = vmatprep.subr.mxu0 0.0
    %121 = vmatpush2.msra.mxu0 0.0
    %122 = vmatprep.subr.mxu0 0.0
    %123 = vmatpush2.msra.mxu0 0.0
    %124 = vmatprep.subr.mxu0 0.0
    %125 = vmatpush2.msra.mxu0 0.0
    %126 = vmatprep.subr.mxu0 0.0
    %127 = vmatpush2.msra.mxu0 0.0
    %128 = vmatprep.subr.mxu0 0.0
    %129 = vmatpush2.msra.mxu0 0.0
    %130 = vmatprep.subr.mxu0 0.0
    %131 = vmatpush2.msra.mxu0 0.0
    %132 = vmatprep.subr.mxu0 0.0
    %133 = vmatpush2.msra.mxu0 0.0
    %134 = vmatprep.subr.mxu0 0.0
    %135 = vmatpush2.msra.mxu0 0.0
    %136 = vmatprep.subr.mxu0 0.0
    %137 = vmatpush2.msra.mxu0 0.0
    %138 = vmatprep.subr.mxu0 0.0
    %139 = vmatpush2.msra.mxu0 0.0
    %140 = vmatprep.subr.mxu0 0.0
    %141 = vmatpush2.msra.mxu0 0.0
    %142 = vmatprep.subr.mxu0 0.0
    %143 = vmatpush2.msra.mxu0 0.0
    %144 = vmatprep.subr.mxu0 0.0
    %145 = vmatpush2.msra.mxu0 0.0
    %146 = vmatprep.subr.mxu0 0.0
    %147 = vmatpush2.msra.mxu0 0.0
    %148 = vmatprep.subr.mxu0 0.0
    %149 = vmatpush2.msra.mxu0 0.0
    %150 = vmatprep.subr.mxu0 0.0
    %151 = vmatpush2.msra.mxu0 0.0
    %152 = vmatprep.mubr.f32.mxu0 0.0
    %153 = vmatmul.mubr.f32.gmra.mxu0 %v86
    %v154 = vpop.f32.mrf.mxu0
    %v155 = vadd.f32 %v72, %v154
    %v156 = vpop.f32.mrf.mxu0
    %157 = vdwg.mxu0
    %v159 = vsel %vm84, %v75, 0
    %161 = vmatprep.subr.mxu0 0.0
    %162 = vmatpush1.msra.mxu0 0.0
    %163 = vmatprep.subr.mxu0 0.0
    %164 = vmatpush1.msra.mxu0 0.0
    %165 = vmatprep.subr.mxu0 0.0
    %166 = vmatpush1.msra.mxu0 0.0
    %167 = vmatprep.subr.mxu0 0.0
    %168 = vmatpush1.msra.mxu0 0.0
    %169 = vmatprep.subr.mxu0 0.0
    %170 = vmatpush1.msra.mxu0 0.0
    %171 = vmatprep.subr.mxu0 0.0
    %172 = vmatpush1.msra.mxu0 0.0
    %173 = vmatprep.subr.mxu0 0.0
    %174 = vmatpush1.msra.mxu0 0.0
    %175 = vmatprep.subr.mxu0 0.0
    %176 = vmatpush1.msra.mxu0 0.0
    %177 = vmatprep.subr.mxu0 0.0
    %178 = vmatpush1.msra.mxu0 0.0
    %179 = vmatprep.subr.mxu0 0.0
    %180 = vmatpush1.msra.mxu0 0.0
    %181 = vmatprep.subr.mxu0 0.0
    %182 = vmatpush1.msra.mxu0 0.0
    %183 = vmatprep.subr.mxu0 0.0
    %184 = vmatpush1.msra.mxu0 0.0
    %185 = vmatprep.subr.mxu0 0.0
    %186 = vmatpush1.msra.mxu0 %v54
    %187 = vmatprep.subr.mxu0 0.0
    %188 = vmatpush1.msra.mxu0 %v53
    %189 = vmatprep.subr.mxu0 0.0
    %190 = vmatpush1.msra.mxu0 %v52
    %191 = vmatprep.subr.mxu0 0.0
    %192 = vmatpush1.msra.mxu0 %v51
    %193 = vmatprep.subr.mxu0 0.0
    %194 = vmatpush2.msra.mxu0 0.0
    %195 = vmatprep.subr.mxu0 0.0
    %196 = vmatpush2.msra.mxu0 0.0
    %197 = vmatprep.subr.mxu0 0.0
    %198 = vmatpush2.msra.mxu0 0.0
    %199 = vmatprep.subr.mxu0 0.0
    %200 = vmatpush2.msra.mxu0 0.0
    %201 = vmatprep.subr.mxu0 0.0
    %202 = vmatpush2.msra.mxu0 0.0
    %203 = vmatprep.subr.mxu0 0.0
    %204 = vmatpush2.msra.mxu0 0.0
    %205 = vmatprep.subr.mxu0 0.0
    %206 = vmatpush2.msra.mxu0 0.0
    %207 = vmatprep.subr.mxu0 0.0
    %208 = vmatpush2.msra.mxu0 0.0
    %209 = vmatprep.subr.mxu0 0.0
    %210 = vmatpush2.msra.mxu0 0.0
    %211 = vmatprep.subr.mxu0 0.0
    %212 = vmatpush2.msra.mxu0 0.0
    %213 = vmatprep.subr.mxu0 0.0
    %214 = vmatpush2.msra.mxu0 0.0
    %215 = vmatprep.subr.mxu0 0.0
    %216 = vmatpush2.msra.mxu0 0.0
    %217 = vmatprep.subr.mxu0 0.0
    %218 = vmatpush2.msra.mxu0 0.0
    %219 = vmatprep.subr.mxu0 0.0
    %220 = vmatpush2.msra.mxu0 0.0
    %221 = vmatprep.subr.mxu0 0.0
    %222 = vmatpush2.msra.mxu0 0.0
    %223 = vmatprep.subr.mxu0 0.0
    %224 = vmatpush2.msra.mxu0 0.0
    %225 = vmatprep.mubr.f32.mxu0 0.0
    %226 = vmatmul.mubr.f32.gmra.mxu0 %v159
    %v227 = vpop.f32.mrf.mxu0
    %v228 = vadd.f32 %v71, %v227
    %v229 = vpop.f32.mrf.mxu0
    %230 = vdwg.mxu0
    %v231 = vadd.f32 %v155, %v228
    %vm232 = vcmask 73728
    %v233 = vsel %vm232, %v231, -inf
    %234 = vmax.xlane.f32.xlu0 %v233
    %v235 = vpop.xlane.xlu0 %234
    %v236 = vsub.f32 %v231, %v235
    %v237 = vmul.f32 %v236, 1.442695
    %v238 = vpow.pop %v237
    %v239 = vsel %vm232, %v238, 0.0
    %240 = vadd.xlane.f32.xlu0 %v239
    %v241 = vpop.xlane.xlu0 %240
    %v242 = vrcp.pop %v241
    %v243 = vmul.f32 %v238, %v242
    %vm244 = vcmask 80896
    %v246 = vsel %vm244, %v243, 0
    %vm248 = vcmask 1041408
    %v250 = vsel %vm248, %v50, 0
    %252 = vmatprep.subr.mxu0 0.0
    %253 = vmatpush1.msra.mxu0 0.0
    %254 = vmatprep.subr.mxu0 0.0
    %255 = vmatpush1.msra.mxu0 0.0
    %256 = vmatprep.subr.mxu0 0.0
    %257 = vmatpush1.msra.mxu0 0.0
    %258 = vmatprep.subr.mxu0 0.0
    %259 = vmatpush1.msra.mxu0 0.0
    %260 = vmatprep.subr.mxu0 0.0
    %261 = vmatpush1.msra.mxu0 0.0
    %262 = vmatprep.subr.mxu0 0.0
    %263 = vmatpush1.msra.mxu0 0.0
    %264 = vmatprep.subr.mxu0 0.0
    %265 = vmatpush1.msra.mxu0 0.0
    %266 = vmatprep.subr.mxu0 0.0
    %267 = vmatpush1.msra.mxu0 0.0
    %268 = vmatprep.subr.mxu0 0.0
    %269 = vmatpush1.msra.mxu0 0.0
    %270 = vmatprep.subr.mxu0 0.0
    %271 = vmatpush1.msra.mxu0 0.0
    %272 = vmatprep.subr.mxu0 0.0
    %273 = vmatpush1.msra.mxu0 0.0
    %274 = vmatprep.subr.mxu0 0.0
    %275 = vmatpush1.msra.mxu0 0.0
    %276 = vmatprep.subr.mxu0 0.0
    %277 = vmatpush1.msra.mxu0 0.0
    %278 = vmatprep.subr.mxu0 0.0
    %279 = vmatpush1.msra.mxu0 0.0
    %280 = vmatprep.subr.mxu0 0.0
    %281 = vmatpush1.msra.mxu0 %v250
    %282 = vmatprep.subr.mxu0 0.0
    %283 = vmatpush1.msra.mxu0 %v49
    %284 = vmatprep.subr.mxu0 0.0
    %285 = vmatpush2.msra.mxu0 0.0
    %286 = vmatprep.subr.mxu0 0.0
    %287 = vmatpush2.msra.mxu0 0.0
    %288 = vmatprep.subr.mxu0 0.0
    %289 = vmatpush2.msra.mxu0 0.0
    %290 = vmatprep.subr.mxu0 0.0
    %291 = vmatpush2.msra.mxu0 0.0
    %292 = vmatprep.subr.mxu0 0.0
    %293 = vmatpush2.msra.mxu0 0.0
    %294 = vmatprep.subr.mxu0 0.0
    %295 = vmatpush2.msra.mxu0 0.0
    %296 = vmatprep.subr.mxu0 0.0
    %297 = vmatpush2.msra.mxu0 0.0
    %298 = vmatprep.subr.mxu0 0.0
    %299 = vmatpush2.msra.mxu0 0.0
    %300 = vmatprep.subr.mxu0 0.0
    %301 = vmatpush2.msra.mxu0 0.0
    %302 = vmatprep.subr.mxu0 0.0
    %303 = vmatpush2.msra.mxu0 0.0
    %304 = vmatprep.subr.mxu0 0.0
    %305 = vmatpush2.msra.mxu0 0.0
    %306 = vmatprep.subr.mxu0 0.0
    %307 = vmatpush2.msra.mxu0 0.0
    %308 = vmatprep.subr.mxu0 0.0
    %309 = vmatpush2.msra.mxu0 0.0
    %310 = vmatprep.subr.mxu0 0.0
    %311 = vmatpush2.msra.mxu0 0.0
    %312 = vmatprep.subr.mxu0 0.0
    %313 = vmatpush2.msra.mxu0 0.0
    %314 = vmatprep.subr.mxu0 0.0
    %315 = vmatpush2.msra.mxu0 0.0
    %316 = vmatprep.mubr.f32.mxu0 0.0
    %317 = vmatmul.mubr.f32.gmra.mxu0 %v246
    %v318 = vpop.f32.mrf.mxu0
    %v319 = vadd.f32 0.0, %v318
    %v320 = vpop.f32.mrf.mxu0
    %321 = vdwg.mxu0
    %v323 = vsel %vm84, %v319, 0
    %325 = vmatprep.subr.mxu0 0.0
    %326 = vmatpush1.msra.mxu0 0.0
    %327 = vmatprep.subr.mxu0 0.0
    %328 = vmatpush1.msra.mxu0 0.0
    %329 = vmatprep.subr.mxu0 0.0
    %330 = vmatpush1.msra.mxu0 0.0
    %331 = vmatprep.subr.mxu0 0.0
    %332 = vmatpush1.msra.mxu0 0.0
    %333 = vmatprep.subr.mxu0 0.0
    %334 = vmatpush1.msra.mxu0 0.0
    %335 = vmatprep.subr.mxu0 0.0
    %336 = vmatpush1.msra.mxu0 0.0
    %337 = vmatprep.subr.mxu0 0.0
    %338 = vmatpush1.msra.mxu0 0.0
    %339 = vmatprep.subr.mxu0 0.0
    %340 = vmatpush1.msra.mxu0 0.0
    %341 = vmatprep.subr.mxu0 0.0
    %342 = vmatpush1.msra.mxu0 0.0
    %343 = vmatprep.subr.mxu0 0.0
    %344 = vmatpush1.msra.mxu0 0.0
    %345 = vmatprep.subr.mxu0 0.0
    %346 = vmatpush1.msra.mxu0 0.0
    %347 = vmatprep.subr.mxu0 0.0
    %348 = vmatpush1.msra.mxu0 0.0
    %349 = vmatprep.subr.mxu0 0.0
    %350 = vmatpush1.msra.mxu0 %v66
    %351 = vmatprep.subr.mxu0 0.0
    %352 = vmatpush1.msra.mxu0 %v65
    %353 = vmatprep.subr.mxu0 0.0
    %354 = vmatpush1.msra.mxu0 %v64
    %355 = vmatprep.subr.mxu0 0.0
    %356 = vmatpush1.msra.mxu0 %v63
    %357 = vmatprep.subr.mxu0 0.0
    %358 = vmatpush2.msra.mxu0 0.0
    %359 = vmatprep.subr.mxu0 0.0
    %360 = vmatpush2.msra.mxu0 0.0
    %361 = vmatprep.subr.mxu0 0.0
    %362 = vmatpush2.msra.mxu0 0.0
    %363 = vmatprep.subr.mxu0 0.0
    %364 = vmatpush2.msra.mxu0 0.0
    %365 = vmatprep.subr.mxu0 0.0
    %366 = vmatpush2.msra.mxu0 0.0
    %367 = vmatprep.subr.mxu0 0.0
    %368 = vmatpush2.msra.mxu0 0.0
    %369 = vmatprep.subr.mxu0 0.0
    %370 = vmatpush2.msra.mxu0 0.0
    %371 = vmatprep.subr.mxu0 0.0
    %372 = vmatpush2.msra.mxu0 0.0
    %373 = vmatprep.subr.mxu0 0.0
    %374 = vmatpush2.msra.mxu0 0.0
    %375 = vmatprep.subr.mxu0 0.0
    %376 = vmatpush2.msra.mxu0 0.0
    %377 = vmatprep.subr.mxu0 0.0
    %378 = vmatpush2.msra.mxu0 0.0
    %379 = vmatprep.subr.mxu0 0.0
    %380 = vmatpush2.msra.mxu0 0.0
    %381 = vmatprep.subr.mxu0 0.0
    %382 = vmatpush2.msra.mxu0 0.0
    %383 = vmatprep.subr.mxu0 0.0
    %384 = vmatpush2.msra.mxu0 0.0
    %385 = vmatprep.subr.mxu0 0.0
    %386 = vmatpush2.msra.mxu0 0.0
    %387 = vmatprep.subr.mxu0 0.0
    %388 = vmatpush2.msra.mxu0 0.0
    %389 = vmatprep.mubr.f32.mxu0 0.0
    %390 = vmatmul.mubr.f32.gmra.mxu0 %v323
    %v391 = vpop.f32.mrf.mxu0
    %v392 = vadd.f32 0.0, %v391
    %v393 = vpop.f32.mrf.mxu0
    %394 = vdwg.mxu0
    %396 = vrot.lane.b32.xlu0 %v392, 32
    %v397 = vpop.permute.xlu0 %396
    %v399 = vadd.f32 %v155, %v397
    %v400 = vmax.f32 %v399, 0.0
    %402 = vrot.lane.b32.xlu0 %v400, 96
    %v403 = vpop.permute.xlu0 %402
    %v404 = vsel %vm84, %v403, 0
    %406 = vmatprep.subr.mxu0 0.0
    %407 = vmatpush1.msra.mxu0 0.0
    %408 = vmatprep.subr.mxu0 0.0
    %409 = vmatpush1.msra.mxu0 0.0
    %410 = vmatprep.subr.mxu0 0.0
    %411 = vmatpush1.msra.mxu0 0.0
    %412 = vmatprep.subr.mxu0 0.0
    %413 = vmatpush1.msra.mxu0 0.0
    %414 = vmatprep.subr.mxu0 0.0
    %415 = vmatpush1.msra.mxu0 0.0
    %416 = vmatprep.subr.mxu0 0.0
    %417 = vmatpush1.msra.mxu0 0.0
    %418 = vmatprep.subr.mxu0 0.0
    %419 = vmatpush1.msra.mxu0 0.0
    %420 = vmatprep.subr.mxu0 0.0
    %421 = vmatpush1.msra.mxu0 0.0
    %422 = vmatprep.subr.mxu0 0.0
    %423 = vmatpush1.msra.mxu0 0.0
    %424 = vmatprep.subr.mxu0 0.0
    %425 = vmatpush1.msra.mxu0 0.0
    %426 = vmatprep.subr.mxu0 0.0
    %427 = vmatpush1.msra.mxu0 0.0
    %428 = vmatprep.subr.mxu0 0.0
    %429 = vmatpush1.msra.mxu0 0.0
    %430 = vmatprep.subr.mxu0 0.0
    %431 = vmatpush1.msra.mxu0 %v62
    %432 = vmatprep.subr.mxu0 0.0
    %433 = vmatpush1.msra.mxu0 %v61
    %434 = vmatprep.subr.mxu0 0.0
    %435 = vmatpush1.msra.mxu0 %v60
    %436 = vmatprep.subr.mxu0 0.0
    %437 = vmatpush1.msra.mxu0 %v59
    %438 = vmatprep.subr.mxu0 0.0
    %439 = vmatpush2.msra.mxu0 0.0
    %440 = vmatprep.subr.mxu0 0.0
    %441 = vmatpush2.msra.mxu0 0.0
    %442 = vmatprep.subr.mxu0 0.0
    %443 = vmatpush2.msra.mxu0 0.0
    %444 = vmatprep.subr.mxu0 0.0
    %445 = vmatpush2.msra.mxu0 0.0
    %446 = vmatprep.subr.mxu0 0.0
    %447 = vmatpush2.msra.mxu0 0.0
    %448 = vmatprep.subr.mxu0 0.0
    %449 = vmatpush2.msra.mxu0 0.0
    %450 = vmatprep.subr.mxu0 0.0
    %451 = vmatpush2.msra.mxu0 0.0
    %452 = vmatprep.subr.mxu0 0.0
    %453 = vmatpush2.msra.mxu0 0.0
    %454 = vmatprep.subr.mxu0 0.0
    %455 = vmatpush2.msra.mxu0 0.0
    %456 = vmatprep.subr.mxu0 0.0
    %457 = vmatpush2.msra.mxu0 0.0
    %458 = vmatprep.subr.mxu0 0.0
    %459 = vmatpush2.msra.mxu0 0.0
    %460 = vmatprep.subr.mxu0 0.0
    %461 = vmatpush2.msra.mxu0 0.0
    %462 = vmatprep.subr.mxu0 0.0
    %463 = vmatpush2.msra.mxu0 0.0
    %464 = vmatprep.subr.mxu0 0.0
    %465 = vmatpush2.msra.mxu0 0.0
    %466 = vmatprep.subr.mxu0 0.0
    %467 = vmatpush2.msra.mxu0 0.0
    %468 = vmatprep.subr.mxu0 0.0
    %469 = vmatpush2.msra.mxu0 0.0
    %470 = vmatprep.mubr.f32.mxu0 0.0
    %471 = vmatmul.mubr.f32.gmra.mxu0 %v404
    %v472 = vpop.f32.mrf.mxu0
    %v473 = vadd.f32 %v73, %v472
    %v474 = vpop.f32.mrf.mxu0
    %475 = vdwg.mxu0
    %477 = vrot.lane.b32.xlu0 %v228, 96
    %v478 = vpop.permute.xlu0 %477
    %v480 = vadd.f32 %v473, %v478
    %v481 = vxor.u32 %v480, 2147483648
    %v482 = vmul.f32 %v481, 1.442695
    %v483 = vpow.pop %v482
    %v484 = vadd.f32 %v483, 1.0
    %v485 = vrcp.pop %v484
    %v486 = vmul.f32 1.0, %v485
    %487 = vrot.lane.b32.xlu0 %v228, 32
    %v488 = vpop.permute.xlu0 %487
    %v490 = vmul.f32 %v486, %v488
    %492 = vrot.lane.b32.xlu0 %v490, 64
    %v493 = vpop.permute.xlu0 %492
    %v495 = vadd.f32 %v473, %v493
    %v496 = vtanh.pop %v495
    %v497 = vsub.f32 1.0, %v486
    %499 = vrot.lane.b32.xlu0 %v496, 96
    %v500 = vpop.permute.xlu0 %499
    %v502 = vmul.f32 %v497, %v500
    %v503 = vlaneseq
    %v504 = vshrl.u32 %v503, 7
    %v505 = vsub.s32 0, %v504
    %v506 = vrot.slane %v75, %v505
    %507 = vrot.lane.b32.xlu0 %v506, 32
    %v508 = vpop.permute.xlu0 %507
    %v510 = vmul.f32 %v486, %v508
    %v511 = vadd.f32 %v502, %v510
    %513 = vrot.lane.b32.xlu0 %v511, 96
    %v514 = vpop.permute.xlu0 %513
    %v515 = vsel %vm84, %v514, 0
    %517 = vmatprep.subr.mxu0 0.0
    %518 = vmatpush1.msra.mxu0 0.0
    %519 = vmatprep.subr.mxu0 0.0
    %520 = vmatpush1.msra.mxu0 0.0
    %521 = vmatprep.subr.mxu0 0.0
    %522 = vmatpush1.msra.mxu0 0.0
    %523 = vmatprep.subr.mxu0 0.0
    %524 = vmatpush1.msra.mxu0 0.0
    %525 = vmatprep.subr.mxu0 0.0
    %526 = vmatpush1.msra.mxu0 0.0
    %527 = vmatprep.subr.mxu0 0.0
    %528 = vmatpush1.msra.mxu0 0.0
    %529 = vmatprep.subr.mxu0 0.0
    %530 = vmatpush1.msra.mxu0 0.0
    %531 = vmatprep.subr.mxu0 0.0
    %532 = vmatpush1.msra.mxu0 0.0
    %533 = vmatprep.subr.mxu0 0.0
    %534 = vmatpush1.msra.mxu0 0.0
    %535 = vmatprep.subr.mxu0 0.0
    %536 = vmatpush1.msra.mxu0 0.0
    %537 = vmatprep.subr.mxu0 0.0
    %538 = vmatpush1.msra.mxu0 0.0
    %539 = vmatprep.subr.mxu0 0.0
    %540 = vmatpush1.msra.mxu0 0.0
    %541 = vmatprep.subr.mxu0 0.0
    %542 = vmatpush1.msra.mxu0 %v70
    %543 = vmatprep.subr.mxu0 0.0
    %544 = vmatpush1.msra.mxu0 %v69
    %545 = vmatprep.subr.mxu0 0.0
    %546 = vmatpush1.msra.mxu0 %v68
    %547 = vmatprep.subr.mxu0 0.0
    %548 = vmatpush1.msra.mxu0 %v67
    %549 = vmatprep.subr.mxu0 0.0
    %550 = vmatpush2.msra.mxu0 0.0
    %551 = vmatprep.subr.mxu0 0.0
    %552 = vmatpush2.msra.mxu0 0.0
    %553 = vmatprep.subr.mxu0 0.0
    %554 = vmatpush2.msra.mxu0 0.0
    %555 = vmatprep.subr.mxu0 0.0
    %556 = vmatpush2.msra.mxu0 0.0
    %557 = vmatprep.subr.mxu0 0.0
    %558 = vmatpush2.msra.mxu0 0.0
    %559 = vmatprep.subr.mxu0 0.0
    %560 = vmatpush2.msra.mxu0 0.0
    %561 = vmatprep.subr.mxu0 0.0
    %562 = vmatpush2.msra.mxu0 0.0
    %563 = vmatprep.subr.mxu0 0.0
    %564 = vmatpush2.msra.mxu0 0.0
    %565 = vmatprep.subr.mxu0 0.0
    %566 = vmatpush2.msra.mxu0 0.0
    %567 = vmatprep.subr.mxu0 0.0
    %568 = vmatpush2.msra.mxu0 0.0
    %569 = vmatprep.subr.mxu0 0.0
    %570 = vmatpush2.msra.mxu0 0.0
    %571 = vmatprep.subr.mxu0 0.0
    %572 = vmatpush2.msra.mxu0 0.0
    %573 = vmatprep.subr.mxu0 0.0
    %574 = vmatpush2.msra.mxu0 0.0
    %575 = vmatprep.subr.mxu0 0.0
    %576 = vmatpush2.msra.mxu0 0.0
    %577 = vmatprep.subr.mxu0 0.0
    %578 = vmatpush2.msra.mxu0 0.0
    %579 = vmatprep.subr.mxu0 0.0
    %580 = vmatpush2.msra.mxu0 0.0
    %581 = vmatprep.mubr.f32.mxu0 0.0
    %582 = vmatmul.mubr.f32.gmra.mxu0 %v515
    %v583 = vpop.f32.mrf.mxu0
    %v584 = vadd.f32 %v74, %v583
    %v585 = vpop.f32.mrf.mxu0
    %586 = vdwg.mxu0
    %vm587 = vcmask 516096
    %v588 = vsel %vm587, %v584, -inf
    %589 = vmax.xlane.f32.xlu0 %v588
    %v590 = vpop.xlane.xlu0 %589
    %v591 = vsub.f32 %v584, %v590
    %v592 = vmul.f32 %v591, 1.442695
    %v593 = vpow.pop %v592
    %v594 = vsel %vm587, %v593, 0.0
    %595 = vadd.xlane.f32.xlu0 %v594
    %v596 = vpop.xlane.xlu0 %595
    %v597 = vlog2.pop %v596
    %v598 = vmul.f32 %v597, 0.6931472
    %v599 = vsub.f32 %v591, %v598
    %600 = vst.msk [vmem:[#allocation9] sm:$0x1] %vm587, %v599
    %601 = vrot.lane.b32.xlu0 %v511, 32
    %v602 = vpop.permute.xlu0 %601
    %vm604 = vcmask 778752
    %605 = vst.msk [vmem:[#allocation9] sm:$0x1] %vm604, %v602
    %606 = vrot.lane.b32.xlu0 %v243, 96
    %v607 = vpop.permute.xlu0 %606
    %vm609 = vcmask 860928
    %610 = vst.msk [vmem:[#allocation9] sm:$0x1] %vm609, %v607
    %s611 = sld [smem:[#allocation3 + $0x1]]
    %p612 = scmp.gt.s32.totalorder %s611, 0
    %s613 = scalar_select %p612, %s611, 0
    %p614 = scmp.lt.s32.totalorder %s613, 63
    %s615 = scalar_select %p614, %s613, 63
    %s616 = smul.u32 %s615, 8
    %s617 = scalar_lea.vmem [#allocation7], %s616
    %v618 = vld [vmem:[%s617] sm:$0x1]
    %v620 = vsel %vm84, %v618, 0
    %622 = vmatprep.subr.mxu0 0.0
    %623 = vmatpush1.msra.mxu0 0.0
    %624 = vmatprep.subr.mxu0 0.0
    %625 = vmatpush1.msra.mxu0 0.0
    %626 = vmatprep.subr.mxu0 0.0
    %627 = vmatpush1.msra.mxu0 0.0
    %628 = vmatprep.subr.mxu0 0.0
    %629 = vmatpush1.msra.mxu0 0.0
    %630 = vmatprep.subr.mxu0 0.0
    %631 = vmatpush1.msra.mxu0 0.0
    %632 = vmatprep.subr.mxu0 0.0
    %633 = vmatpush1.msra.mxu0 0.0
    %634 = vmatprep.subr.mxu0 0.0
    %635 = vmatpush1.msra.mxu0 0.0
    %636 = vmatprep.subr.mxu0 0.0
    %637 = vmatpush1.msra.mxu0 0.0
    %638 = vmatprep.subr.mxu0 0.0
    %639 = vmatpush1.msra.mxu0 0.0
    %640 = vmatprep.subr.mxu0 0.0
    %641 = vmatpush1.msra.mxu0 0.0
    %642 = vmatprep.subr.mxu0 0.0
    %643 = vmatpush1.msra.mxu0 0.0
    %644 = vmatprep.subr.mxu0 0.0
    %645 = vmatpush1.msra.mxu0 0.0
    %646 = vmatprep.subr.mxu0 0.0
    %647 = vmatpush1.msra.mxu0 %v58
    %648 = vmatprep.subr.mxu0 0.0
    %649 = vmatpush1.msra.mxu0 %v57
    %650 = vmatprep.subr.mxu0 0.0
    %651 = vmatpush1.msra.mxu0 %v56
    %652 = vmatprep.subr.mxu0 0.0
    %653 = vmatpush1.msra.mxu0 %v55
    %654 = vmatprep.subr.mxu0 0.0
    %655 = vmatpush2.msra.mxu0 0.0
    %656 = vmatprep.subr.mxu0 0.0
    %657 = vmatpush2.msra.mxu0 0.0
    %658 = vmatprep.subr.mxu0 0.0
    %659 = vmatpush2.msra.mxu0 0.0
    %660 = vmatprep.subr.mxu0 0.0
    %661 = vmatpush2.msra.mxu0 0.0
    %662 = vmatprep.subr.mxu0 0.0
    %663 = vmatpush2.msra.mxu0 0.0
    %664 = vmatprep.subr.mxu0 0.0
    %665 = vmatpush2.msra.mxu0 0.0
    %666 = vmatprep.subr.mxu0 0.0
    %667 = vmatpush2.msra.mxu0 0.0
    %668 = vmatprep.subr.mxu0 0.0
    %669 = vmatpush2.msra.mxu0 0.0
    %670 = vmatprep.subr.mxu0 0.0
    %671 = vmatpush2.msra.mxu0 0.0
    %672 = vmatprep.subr.mxu0 0.0
    %673 = vmatpush2.msra.mxu0 0.0
    %674 = vmatprep.subr.mxu0 0.0
    %675 = vmatpush2.msra.mxu0 0.0
    %676 = vmatprep.subr.mxu0 0.0
    %677 = vmatpush2.msra.mxu0 0.0
    %678 = vmatprep.subr.mxu0 0.0
    %679 = vmatpush2.msra.mxu0 0.0
    %680 = vmatprep.subr.mxu0 0.0
    %681 = vmatpush2.msra.mxu0 0.0
    %682 = vmatprep.subr.mxu0 0.0
    %683 = vmatpush2.msra.mxu0 0.0
    %684 = vmatprep.subr.mxu0 0.0
    %685 = vmatpush2.msra.mxu0 0.0
    %686 = vmatprep.mubr.f32.mxu0 0.0
    %687 = vmatmul.mubr.f32.gmra.mxu0 %v620
    %v688 = vpop.f32.mrf.mxu0
    %v689 = vadd.f32 %v72, %v688
    %v690 = vpop.f32.mrf.mxu0
    %691 = vdwg.mxu0
    %692 = vmatprep.subr.mxu0 0.0
    %693 = vmatpush1.msra.mxu0 0.0
    %694 = vmatprep.subr.mxu0 0.0
    %695 = vmatpush1.msra.mxu0 0.0
    %696 = vmatprep.subr.mxu0 0.0
    %697 = vmatpush1.msra.mxu0 0.0
    %698 = vmatprep.subr.mxu0 0.0
    %699 = vmatpush1.msra.mxu0 0.0
    %700 = vmatprep.subr.mxu0 0.0
    %701 = vmatpush1.msra.mxu0 0.0
    %702 = vmatprep.subr.mxu0 0.0
    %703 = vmatpush1.msra.mxu0 0.0
    %704 = vmatprep.subr.mxu0 0.0
    %705 = vmatpush1.msra.mxu0 0.0
    %706 = vmatprep.subr.mxu0 0.0
    %707 = vmatpush1.msra.mxu0 0.0
    %708 = vmatprep.subr.mxu0 0.0
    %709 = vmatpush1.msra.mxu0 0.0
    %710 = vmatprep.subr.mxu0 0.0
    %711 = vmatpush1.msra.mxu0 0.0
    %712 = vmatprep.subr.mxu0 0.0
    %713 = vmatpush1.msra.mxu0 0.0
    %714 = vmatprep.subr.mxu0 0.0
    %715 = vmatpush1.msra.mxu0 0.0
    %716 = vmatprep.subr.mxu0 0.0
    %717 = vmatpush1.msra.mxu0 %v54
    %718 = vmatprep.subr.mxu0 0.0
    %719 = vmatpush1.msra.mxu0 %v53
    %720 = vmatprep.subr.mxu0 0.0
    %721 = vmatpush1.msra.mxu0 %v52
    %722 = vmatprep.subr.mxu0 0.0
    %723 = vmatpush1.msra.mxu0 %v51
    %724 = vmatprep.subr.mxu0 0.0
    %725 = vmatpush2.msra.mxu0 0.0
    %726 = vmatprep.subr.mxu0 0.0
    %727 = vmatpush2.msra.mxu0 0.0
    %728 = vmatprep.subr.mxu0 0.0
    %729 = vmatpush2.msra.mxu0 0.0
    %730 = vmatprep.subr.mxu0 0.0
    %731 = vmatpush2.msra.mxu0 0.0
    %732 = vmatprep.subr.mxu0 0.0
    %733 = vmatpush2.msra.mxu0 0.0
    %734 = vmatprep.subr.mxu0 0.0
    %735 = vmatpush2.msra.mxu0 0.0
    %736 = vmatprep.subr.mxu0 0.0
    %737 = vmatpush2.msra.mxu0 0.0
    %738 = vmatprep.subr.mxu0 0.0
    %739 = vmatpush2.msra.mxu0 0.0
    %740 = vmatprep.subr.mxu0 0.0
    %741 = vmatpush2.msra.mxu0 0.0
    %742 = vmatprep.subr.mxu0 0.0
    %743 = vmatpush2.msra.mxu0 0.0
    %744 = vmatprep.subr.mxu0 0.0
    %745 = vmatpush2.msra.mxu0 0.0
    %746 = vmatprep.subr.mxu0 0.0
    %747 = vmatpush2.msra.mxu0 0.0
    %748 = vmatprep.subr.mxu0 0.0
    %749 = vmatpush2.msra.mxu0 0.0
    %750 = vmatprep.subr.mxu0 0.0
    %751 = vmatpush2.msra.mxu0 0.0
    %752 = vmatprep.subr.mxu0 0.0
    %753 = vmatpush2.msra.mxu0 0.0
    %754 = vmatprep.subr.mxu0 0.0
    %755 = vmatpush2.msra.mxu0 0.0
    %756 = vmatprep.mubr.f32.mxu0 0.0
    %757 = vmatmul.mubr.f32.gmra.mxu0 %v515
    %v758 = vpop.f32.mrf.mxu0
    %v759 = vadd.f32 %v71, %v758
    %v760 = vpop.f32.mrf.mxu0
    %761 = vdwg.mxu0
    %v762 = vadd.f32 %v689, %v759
    %v763 = vsel %vm232, %v762, -inf
    %764 = vmax.xlane.f32.xlu0 %v763
    %v765 = vpop.xlane.xlu0 %764
    %v766 = vsub.f32 %v762, %v765
    %v767 = vmul.f32 %v766, 1.442695
    %v768 = vpow.pop %v767
    %v769 = vsel %vm232, %v768, 0.0
    %770 = vadd.xlane.f32.xlu0 %v769
    %v771 = vpop.xlane.xlu0 %770
    %v772 = vrcp.pop %v771
    %v773 = vmul.f32 %v768, %v772
    %v775 = vsel %vm244, %v773, 0
    %777 = vmatprep.subr.mxu0 0.0
    %778 = vmatpush1.msra.mxu0 0.0
    %779 = vmatprep.subr.mxu0 0.0
    %780 = vmatpush1.msra.mxu0 0.0
    %781 = vmatprep.subr.mxu0 0.0
    %782 = vmatpush1.msra.mxu0 0.0
    %783 = vmatprep.subr.mxu0 0.0
    %784 = vmatpush1.msra.mxu0 0.0
    %785 = vmatprep.subr.mxu0 0.0
    %786 = vmatpush1.msra.mxu0 0.0
    %787 = vmatprep.subr.mxu0 0.0
    %788 = vmatpush1.msra.mxu0 0.0
    %789 = vmatprep.subr.mxu0 0.0
    %790 = vmatpush1.msra.mxu0 0.0
    %791 = vmatprep.subr.mxu0 0.0
    %792 = vmatpush1.msra.mxu0 0.0
    %793 = vmatprep.subr.mxu0 0.0
    %794 = vmatpush1.msra.mxu0 0.0
    %795 = vmatprep.subr.mxu0 0.0
    %796 = vmatpush1.msra.mxu0 0.0
    %797 = vmatprep.subr.mxu0 0.0
    %798 = vmatpush1.msra.mxu0 0.0
    %799 = vmatprep.subr.mxu0 0.0
    %800 = vmatpush1.msra.mxu0 0.0
    %801 = vmatprep.subr.mxu0 0.0
    %802 = vmatpush1.msra.mxu0 0.0
    %803 = vmatprep.subr.mxu0 0.0
    %804 = vmatpush1.msra.mxu0 0.0
    %805 = vmatprep.subr.mxu0 0.0
    %806 = vmatpush1.msra.mxu0 %v250
    %807 = vmatprep.subr.mxu0 0.0
    %808 = vmatpush1.msra.mxu0 %v49
    %809 = vmatprep.subr.mxu0 0.0
    %810 = vmatpush2.msra.mxu0 0.0
    %811 = vmatprep.subr.mxu0 0.0
    %812 = vmatpush2.msra.mxu0 0.0
    %813 = vmatprep.subr.mxu0 0.0
    %814 = vmatpush2.msra.mxu0 0.0
    %815 = vmatprep.subr.mxu0 0.0
    %816 = vmatpush2.msra.mxu0 0.0
    %817 = vmatprep.subr.mxu0 0.0
    %818 = vmatpush2.msra.mxu0 0.0
    %819 = vmatprep.subr.mxu0 0.0
    %820 = vmatpush2.msra.mxu0 0.0
    %821 = vmatprep.subr.mxu0 0.0
    %822 = vmatpush2.msra.mxu0 0.0
    %823 = vmatprep.subr.mxu0 0.0
    %824 = vmatpush2.msra.mxu0 0.0
    %825 = vmatprep.subr.mxu0 0.0
    %826 = vmatpush2.msra.mxu0 0.0
    %827 = vmatprep.subr.mxu0 0.0
    %828 = vmatpush2.msra.mxu0 0.0
    %829 = vmatprep.subr.mxu0 0.0
    %830 = vmatpush2.msra.mxu0 0.0
    %831 = vmatprep.subr.mxu0 0.0
    %832 = vmatpush2.msra.mxu0 0.0
    %833 = vmatprep.subr.mxu0 0.0
    %834 = vmatpush2.msra.mxu0 0.0
    %835 = vmatprep.subr.mxu0 0.0
    %836 = vmatpush2.msra.mxu0 0.0
    %837 = vmatprep.subr.mxu0 0.0
    %838 = vmatpush2.msra.mxu0 0.0
    %839 = vmatprep.subr.mxu0 0.0
    %840 = vmatpush2.msra.mxu0 0.0
    %841 = vmatprep.mubr.f32.mxu0 0.0
    %842 = vmatmul.mubr.f32.gmra.mxu0 %v775
    %v843 = vpop.f32.mrf.mxu0
    %v844 = vadd.f32 0.0, %v843
    %v845 = vpop.f32.mrf.mxu0
    %846 = vdwg.mxu0
    %v848 = vsel %vm84, %v844, 0
    %850 = vmatprep.subr.mxu0 0.0
    %851 = vmatpush1.msra.mxu0 0.0
    %852 = vmatprep.subr.mxu0 0.0
    %853 = vmatpush1.msra.mxu0 0.0
    %854 = vmatprep.subr.mxu0 0.0
    %855 = vmatpush1.msra.mxu0 0.0
    %856 = vmatprep.subr.mxu0 0.0
    %857 = vmatpush1.msra.mxu0 0.0
    %858 = vmatprep.subr.mxu0 0.0
    %859 = vmatpush1.msra.mxu0 0.0
    %860 = vmatprep.subr.mxu0 0.0
    %861 = vmatpush1.msra.mxu0 0.0
    %862 = vmatprep.subr.mxu0 0.0
    %863 = vmatpush1.msra.mxu0 0.0
    %864 = vmatprep.subr.mxu0 0.0
    %865 = vmatpush1.msra.mxu0 0.0
    %866 = vmatprep.subr.mxu0 0.0
    %867 = vmatpush1.msra.mxu0 0.0
    %868 = vmatprep.subr.mxu0 0.0
    %869 = vmatpush1.msra.mxu0 0.0
    %870 = vmatprep.subr.mxu0 0.0
    %871 = vmatpush1.msra.mxu0 0.0
    %872 = vmatprep.subr.mxu0 0.0
    %873 = vmatpush1.msra.mxu0 0.0
    %874 = vmatprep.subr.mxu0 0.0
    %875 = vmatpush1.msra.mxu0 %v66
    %876 = vmatprep.subr.mxu0 0.0
    %877 = vmatpush1.msra.mxu0 %v65
    %878 = vmatprep.subr.mxu0 0.0
    %879 = vmatpush1.msra.mxu0 %v64
    %880 = vmatprep.subr.mxu0 0.0
    %881 = vmatpush1.msra.mxu0 %v63
    %882 = vmatprep.subr.mxu0 0.0
    %883 = vmatpush2.msra.mxu0 0.0
    %884 = vmatprep.subr.mxu0 0.0
    %885 = vmatpush2.msra.mxu0 0.0
    %886 = vmatprep.subr.mxu0 0.0
    %887 = vmatpush2.msra.mxu0 0.0
    %888 = vmatprep.subr.mxu0 0.0
    %889 = vmatpush2.msra.mxu0 0.0
    %890 = vmatprep.subr.mxu0 0.0
    %891 = vmatpush2.msra.mxu0 0.0
    %892 = vmatprep.subr.mxu0 0.0
    %893 = vmatpush2.msra.mxu0 0.0
    %894 = vmatprep.subr.mxu0 0.0
    %895 = vmatpush2.msra.mxu0 0.0
    %896 = vmatprep.subr.mxu0 0.0
    %897 = vmatpush2.msra.mxu0 0.0
    %898 = vmatprep.subr.mxu0 0.0
    %899 = vmatpush2.msra.mxu0 0.0
    %900 = vmatprep.subr.mxu0 0.0
    %901 = vmatpush2.msra.mxu0 0.0
    %902 = vmatprep.subr.mxu0 0.0
    %903 = vmatpush2.msra.mxu0 0.0
    %904 = vmatprep.subr.mxu0 0.0
    %905 = vmatpush2.msra.mxu0 0.0
    %906 = vmatprep.subr.mxu0 0.0
    %907 = vmatpush2.msra.mxu0 0.0
    %908 = vmatprep.subr.mxu0 0.0
    %909 = vmatpush2.msra.mxu0 0.0
    %910 = vmatprep.subr.mxu0 0.0
    %911 = vmatpush2.msra.mxu0 0.0
    %912 = vmatprep.subr.mxu0 0.0
    %913 = vmatpush2.msra.mxu0 0.0
    %914 = vmatprep.mubr.f32.mxu0 0.0
    %915 = vmatmul.mubr.f32.gmra.mxu0 %v848
    %v916 = vpop.f32.mrf.mxu0
    %v917 = vadd.f32 0.0, %v916
    %v918 = vpop.f32.mrf.mxu0
    %919 = vdwg.mxu0
    %921 = vrot.lane.b32.xlu0 %v917, 32
    %v922 = vpop.permute.xlu0 %921
    %v924 = vadd.f32 %v689, %v922
    %v925 = vmax.f32 %v924, 0.0
    %927 = vrot.lane.b32.xlu0 %v925, 96
    %v928 = vpop.permute.xlu0 %927
    %v929 = vsel %vm84, %v928, 0
    %931 = vmatprep.subr.mxu0 0.0
    %932 = vmatpush1.msra.mxu0 0.0
    %933 = vmatprep.subr.mxu0 0.0
    %934 = vmatpush1.msra.mxu0 0.0
    %935 = vmatprep.subr.mxu0 0.0
    %936 = vmatpush1.msra.mxu0 0.0
    %937 = vmatprep.subr.mxu0 0.0
    %938 = vmatpush1.msra.mxu0 0.0
    %939 = vmatprep.subr.mxu0 0.0
    %940 = vmatpush1.msra.mxu0 0.0
    %941 = vmatprep.subr.mxu0 0.0
    %942 = vmatpush1.msra.mxu0 0.0
    %943 = vmatprep.subr.mxu0 0.0
    %944 = vmatpush1.msra.mxu0 0.0
    %945 = vmatprep.subr.mxu0 0.0
    %946 = vmatpush1.msra.mxu0 0.0
    %947 = vmatprep.subr.mxu0 0.0
    %948 = vmatpush1.msra.mxu0 0.0
    %949 = vmatprep.subr.mxu0 0.0
    %950 = vmatpush1.msra.mxu0 0.0
    %951 = vmatprep.subr.mxu0 0.0
    %952 = vmatpush1.msra.mxu0 0.0
    %953 = vmatprep.subr.mxu0 0.0
    %954 = vmatpush1.msra.mxu0 0.0
    %955 = vmatprep.subr.mxu0 0.0
    %956 = vmatpush1.msra.mxu0 %v62
    %957 = vmatprep.subr.mxu0 0.0
    %958 = vmatpush1.msra.mxu0 %v61
    %959 = vmatprep.subr.mxu0 0.0
    %960 = vmatpush1.msra.mxu0 %v60
    %961 = vmatprep.subr.mxu0 0.0
    %962 = vmatpush1.msra.mxu0 %v59
    %963 = vmatprep.subr.mxu0 0.0
    %964 = vmatpush2.msra.mxu0 0.0
    %965 = vmatprep.subr.mxu0 0.0
    %966 = vmatpush2.msra.mxu0 0.0
    %967 = vmatprep.subr.mxu0 0.0
    %968 = vmatpush2.msra.mxu0 0.0
    %969 = vmatprep.subr.mxu0 0.0
    %970 = vmatpush2.msra.mxu0 0.0
    %971 = vmatprep.subr.mxu0 0.0
    %972 = vmatpush2.msra.mxu0 0.0
    %973 = vmatprep.subr.mxu0 0.0
    %974 = vmatpush2.msra.mxu0 0.0
    %975 = vmatprep.subr.mxu0 0.0
    %976 = vmatpush2.msra.mxu0 0.0
    %977 = vmatprep.subr.mxu0 0.0
    %978 = vmatpush2.msra.mxu0 0.0
    %979 = vmatprep.subr.mxu0 0.0
    %980 = vmatpush2.msra.mxu0 0.0
    %981 = vmatprep.subr.mxu0 0.0
    %982 = vmatpush2.msra.mxu0 0.0
    %983 = vmatprep.subr.mxu0 0.0
    %984 = vmatpush2.msra.mxu0 0.0
    %985 = vmatprep.subr.mxu0 0.0
    %986 = vmatpush2.msra.mxu0 0.0
    %987 = vmatprep.subr.mxu0 0.0
    %988 = vmatpush2.msra.mxu0 0.0
    %989 = vmatprep.subr.mxu0 0.0
    %990 = vmatpush2.msra.mxu0 0.0
    %991 = vmatprep.subr.mxu0 0.0
    %992 = vmatpush2.msra.mxu0 0.0
    %993 = vmatprep.subr.mxu0 0.0
    %994 = vmatpush2.msra.mxu0 0.0
    %995 = vmatprep.mubr.f32.mxu0 0.0
    %996 = vmatmul.mubr.f32.gmra.mxu0 %v929
    %v997 = vpop.f32.mrf.mxu0
    %v998 = vadd.f32 %v73, %v997
    %v999 = vpop.f32.mrf.mxu0
    %1000 = vdwg.mxu0
    %1002 = vrot.lane.b32.xlu0 %v759, 96
    %v1003 = vpop.permute.xlu0 %1002
    %v1005 = vadd.f32 %v998, %v1003
    %v1006 = vxor.u32 %v1005, 2147483648
    %v1007 = vmul.f32 %v1006, 1.442695
    %v1008 = vpow.pop %v1007
    %v1009 = vadd.f32 %v1008, 1.0
    %v1010 = vrcp.pop %v1009
    %v1011 = vmul.f32 1.0, %v1010
    %1012 = vrot.lane.b32.xlu0 %v759, 32
    %v1013 = vpop.permute.xlu0 %1012
    %v1015 = vmul.f32 %v1011, %v1013
    %1017 = vrot.lane.b32.xlu0 %v1015, 64
    %v1018 = vpop.permute.xlu0 %1017
    %v1020 = vadd.f32 %v998, %v1018
    %v1021 = vtanh.pop %v1020
    %v1022 = vsub.f32 1.0, %v1011
    %1024 = vrot.lane.b32.xlu0 %v1021, 96
    %v1025 = vpop.permute.xlu0 %1024
    %v1027 = vmul.f32 %v1022, %v1025
    %v1028 = vmul.f32 %v1011, %v511
    %v1029 = vadd.f32 %v1027, %v1028
    %1031 = vrot.lane.b32.xlu0 %v1029, 96
    %v1032 = vpop.permute.xlu0 %1031
    %v1033 = vsel %vm84, %v1032, 0
    %1035 = vmatprep.subr.mxu0 0.0
    %1036 = vmatpush1.msra.mxu0 0.0
    %1037 = vmatprep.subr.mxu0 0.0
    %1038 = vmatpush1.msra.mxu0 0.0
    %1039 = vmatprep.subr.mxu0 0.0
    %1040 = vmatpush1.msra.mxu0 0.0
    %1041 = vmatprep.subr.mxu0 0.0
    %1042 = vmatpush1.msra.mxu0 0.0
    %1043 = vmatprep.subr.mxu0 0.0
    %1044 = vmatpush1.msra.mxu0 0.0
    %1045 = vmatprep.subr.mxu0 0.0
    %1046 = vmatpush1.msra.mxu0 0.0
    %1047 = vmatprep.subr.mxu0 0.0
    %1048 = vmatpush1.msra.mxu0 0.0
    %1049 = vmatprep.subr.mxu0 0.0
    %1050 = vmatpush1.msra.mxu0 0.0
    %1051 = vmatprep.subr.mxu0 0.0
    %1052 = vmatpush1.msra.mxu0 0.0
    %1053 = vmatprep.subr.mxu0 0.0
    %1054 = vmatpush1.msra.mxu0 0.0
    %1055 = vmatprep.subr.mxu0 0.0
    %1056 = vmatpush1.msra.mxu0 0.0
    %1057 = vmatprep.subr.mxu0 0.0
    %1058 = vmatpush1.msra.mxu0 0.0
    %1059 = vmatprep.subr.mxu0 0.0
    %1060 = vmatpush1.msra.mxu0 %v70
    %1061 = vmatprep.subr.mxu0 0.0
    %1062 = vmatpush1.msra.mxu0 %v69
    %1063 = vmatprep.subr.mxu0 0.0
    %1064 = vmatpush1.msra.mxu0 %v68
    %1065 = vmatprep.subr.mxu0 0.0
    %1066 = vmatpush1.msra.mxu0 %v67
    %1067 = vmatprep.subr.mxu0 0.0
    %1068 = vmatpush2.msra.mxu0 0.0
    %1069 = vmatprep.subr.mxu0 0.0
    %1070 = vmatpush2.msra.mxu0 0.0
    %1071 = vmatprep.subr.mxu0 0.0
    %1072 = vmatpush2.msra.mxu0 0.0
    %1073 = vmatprep.subr.mxu0 0.0
    %1074 = vmatpush2.msra.mxu0 0.0
    %1075 = vmatprep.subr.mxu0 0.0
    %1076 = vmatpush2.msra.mxu0 0.0
    %1077 = vmatprep.subr.mxu0 0.0
    %1078 = vmatpush2.msra.mxu0 0.0
    %1079 = vmatprep.subr.mxu0 0.0
    %1080 = vmatpush2.msra.mxu0 0.0
    %1081 = vmatprep.subr.mxu0 0.0
    %1082 = vmatpush2.msra.mxu0 0.0
    %1083 = vmatprep.subr.mxu0 0.0
    %1084 = vmatpush2.msra.mxu0 0.0
    %1085 = vmatprep.subr.mxu0 0.0
    %1086 = vmatpush2.msra.mxu0 0.0
    %1087 = vmatprep.subr.mxu0 0.0
    %1088 = vmatpush2.msra.mxu0 0.0
    %1089 = vmatprep.subr.mxu0 0.0
    %1090 = vmatpush2.msra.mxu0 0.0
    %1091 = vmatprep.subr.mxu0 0.0
    %1092 = vmatpush2.msra.mxu0 0.0
    %1093 = vmatprep.subr.mxu0 0.0
    %1094 = vmatpush2.msra.mxu0 0.0
    %1095 = vmatprep.subr.mxu0 0.0
    %1096 = vmatpush2.msra.mxu0 0.0
    %1097 = vmatprep.subr.mxu0 0.0
    %1098 = vmatpush2.msra.mxu0 0.0
    %1099 = vmatprep.mubr.f32.mxu0 0.0
    %1100 = vmatmul.mubr.f32.gmra.mxu0 %v1033
    %v1101 = vpop.f32.mrf.mxu0
    %v1102 = vadd.f32 %v74, %v1101
    %v1103 = vpop.f32.mrf.mxu0
    %1104 = vdwg.mxu0
    %v1105 = vsel %vm587, %v1102, -inf
    %1106 = vmax.xlane.f32.xlu0 %v1105
    %v1107 = vpop.xlane.xlu0 %1106
    %v1108 = vsub.f32 %v1102, %v1107
    %v1109 = vmul.f32 %v1108, 1.442695
    %v1110 = vpow.pop %v1109
    %v1111 = vsel %vm587, %v1110, 0.0
    %1112 = vadd.xlane.f32.xlu0 %v1111
    %v1113 = vpop.xlane.xlu0 %1112
    %v1114 = vlog2.pop %v1113
    %v1115 = vmul.f32 %v1114, 0.6931472
    %v1116 = vsub.f32 %v1108, %v1115
    %1117 = vst.msk [vmem:[#allocation9 + $0x1] sm:$0x1] %vm587, %v1116
    %1118 = vrot.lane.b32.xlu0 %v1029, 32
    %v1119 = vpop.permute.xlu0 %1118
    %1121 = vst.msk [vmem:[#allocation9 + $0x1] sm:$0x1] %vm604, %v1119
    %1122 = vrot.lane.b32.xlu0 %v773, 96
    %v1123 = vpop.permute.xlu0 %1122
    %1125 = vst.msk [vmem:[#allocation9 + $0x1] sm:$0x1] %vm609, %v1123
    %s1126 = sld [smem:[#allocation3 + $0x2]]
    %p1127 = scmp.gt.s32.totalorder %s1126, 0
    %s1128 = scalar_select %p1127, %s1126, 0
    %p1129 = scmp.lt.s32.totalorder %s1128, 63
    %s1130 = scalar_select %p1129, %s1128, 63
    %s1131 = smul.u32 %s1130, 8
    %s1132 = scalar_lea.vmem [#allocation7], %s1131
    %v1133 = vld [vmem:[%s1132] sm:$0x1]
    %v1135 = vsel %vm84, %v1133, 0
    %1137 = vmatprep.subr.mxu0 0.0
    %1138 = vmatpush1.msra.mxu0 0.0
    %1139 = vmatprep.subr.mxu0 0.0
    %1140 = vmatpush1.msra.mxu0 0.0
    %1141 = vmatprep.subr.mxu0 0.0
    %1142 = vmatpush1.msra.mxu0 0.0
    %1143 = vmatprep.subr.mxu0 0.0
    %1144 = vmatpush1.msra.mxu0 0.0
    %1145 = vmatprep.subr.mxu0 0.0
    %1146 = vmatpush1.msra.mxu0 0.0
    %1147 = vmatprep.subr.mxu0 0.0
    %1148 = vmatpush1.msra.mxu0 0.0
    %1149 = vmatprep.subr.mxu0 0.0
    %1150 = vmatpush1.msra.mxu0 0.0
    %1151 = vmatprep.subr.mxu0 0.0
    %1152 = vmatpush1.msra.mxu0 0.0
    %1153 = vmatprep.subr.mxu0 0.0
    %1154 = vmatpush1.msra.mxu0 0.0
    %1155 = vmatprep.subr.mxu0 0.0
    %1156 = vmatpush1.msra.mxu0 0.0
    %1157 = vmatprep.subr.mxu0 0.0
    %1158 = vmatpush1.msra.mxu0 0.0
    %1159 = vmatprep.subr.mxu0 0.0
    %1160 = vmatpush1.msra.mxu0 0.0
    %1161 = vmatprep.subr.mxu0 0.0
    %1162 = vmatpush1.msra.mxu0 %v58
    %1163 = vmatprep.subr.mxu0 0.0
    %1164 = vmatpush1.msra.mxu0 %v57
    %1165 = vmatprep.subr.mxu0 0.0
    %1166 = vmatpush1.msra.mxu0 %v56
    %1167 = vmatprep.subr.mxu0 0.0
    %1168 = vmatpush1.msra.mxu0 %v55
    %1169 = vmatprep.subr.mxu0 0.0
    %1170 = vmatpush2.msra.mxu0 0.0
    %1171 = vmatprep.subr.mxu0 0.0
    %1172 = vmatpush2.msra.mxu0 0.0
    %1173 = vmatprep.subr.mxu0 0.0
    %1174 = vmatpush2.msra.mxu0 0.0
    %1175 = vmatprep.subr.mxu0 0.0
    %1176 = vmatpush2.msra.mxu0 0.0
    %1177 = vmatprep.subr.mxu0 0.0
    %1178 = vmatpush2.msra.mxu0 0.0
    %1179 = vmatprep.subr.mxu0 0.0
    %1180 = vmatpush2.msra.mxu0 0.0
    %1181 = vmatprep.subr.mxu0 0.0
    %1182 = vmatpush2.msra.mxu0 0.0
    %1183 = vmatprep.subr.mxu0 0.0
    %1184 = vmatpush2.msra.mxu0 0.0
    %1185 = vmatprep.subr.mxu0 0.0
    %1186 = vmatpush2.msra.mxu0 0.0
    %1187 = vmatprep.subr.mxu0 0.0
    %1188 = vmatpush2.msra.mxu0 0.0
    %1189 = vmatprep.subr.mxu0 0.0
    %1190 = vmatpush2.msra.mxu0 0.0
    %1191 = vmatprep.subr.mxu0 0.0
    %1192 = vmatpush2.msra.mxu0 0.0
    %1193 = vmatprep.subr.mxu0 0.0
    %1194 = vmatpush2.msra.mxu0 0.0
    %1195 = vmatprep.subr.mxu0 0.0
    %1196 = vmatpush2.msra.mxu0 0.0
    %1197 = vmatprep.subr.mxu0 0.0
    %1198 = vmatpush2.msra.mxu0 0.0
    %1199 = vmatprep.subr.mxu0 0.0
    %1200 = vmatpush2.msra.mxu0 0.0
    %1201 = vmatprep.mubr.f32.mxu0 0.0
    %1202 = vmatmul.mubr.f32.gmra.mxu0 %v1135
    %v1203 = vpop.f32.mrf.mxu0
    %v1204 = vadd.f32 %v72, %v1203
    %v1205 = vpop.f32.mrf.mxu0
    %1206 = vdwg.mxu0
    %1207 = vmatprep.subr.mxu0 0.0
    %1208 = vmatpush1.msra.mxu0 0.0
    %1209 = vmatprep.subr.mxu0 0.0
    %1210 = vmatpush1.msra.mxu0 0.0
    %1211 = vmatprep.subr.mxu0 0.0
    %1212 = vmatpush1.msra.mxu0 0.0
    %1213 = vmatprep.subr.mxu0 0.0
    %1214 = vmatpush1.msra.mxu0 0.0
    %1215 = vmatprep.subr.mxu0 0.0
    %1216 = vmatpush1.msra.mxu0 0.0
    %1217 = vmatprep.subr.mxu0 0.0
    %1218 = vmatpush1.msra.mxu0 0.0
    %1219 = vmatprep.subr.mxu0 0.0
    %1220 = vmatpush1.msra.mxu0 0.0
    %1221 = vmatprep.subr.mxu0 0.0
    %1222 = vmatpush1.msra.mxu0 0.0
    %1223 = vmatprep.subr.mxu0 0.0
    %1224 = vmatpush1.msra.mxu0 0.0
    %1225 = vmatprep.subr.mxu0 0.0
    %1226 = vmatpush1.msra.mxu0 0.0
    %1227 = vmatprep.subr.mxu0 0.0
    %1228 = vmatpush1.msra.mxu0 0.0
    %1229 = vmatprep.subr.mxu0 0.0
    %1230 = vmatpush1.msra.mxu0 0.0
    %1231 = vmatprep.subr.mxu0 0.0
    %1232 = vmatpush1.msra.mxu0 %v54
    %1233 = vmatprep.subr.mxu0 0.0
    %1234 = vmatpush1.msra.mxu0 %v53
    %1235 = vmatprep.subr.mxu0 0.0
    %1236 = vmatpush1.msra.mxu0 %v52
    %1237 = vmatprep.subr.mxu0 0.0
    %1238 = vmatpush1.msra.mxu0 %v51
    %1239 = vmatprep.subr.mxu0 0.0
    %1240 = vmatpush2.msra.mxu0 0.0
    %1241 = vmatprep.subr.mxu0 0.0
    %1242 = vmatpush2.msra.mxu0 0.0
    %1243 = vmatprep.subr.mxu0 0.0
    %1244 = vmatpush2.msra.mxu0 0.0
    %1245 = vmatprep.subr.mxu0 0.0
    %1246 = vmatpush2.msra.mxu0 0.0
    %1247 = vmatprep.subr.mxu0 0.0
    %1248 = vmatpush2.msra.mxu0 0.0
    %1249 = vmatprep.subr.mxu0 0.0
    %1250 = vmatpush2.msra.mxu0 0.0
    %1251 = vmatprep.subr.mxu0 0.0
    %1252 = vmatpush2.msra.mxu0 0.0
    %1253 = vmatprep.subr.mxu0 0.0
    %1254 = vmatpush2.msra.mxu0 0.0
    %1255 = vmatprep.subr.mxu0 0.0
    %1256 = vmatpush2.msra.mxu0 0.0
    %1257 = vmatprep.subr.mxu0 0.0
    %1258 = vmatpush2.msra.mxu0 0.0
    %1259 = vmatprep.subr.mxu0 0.0
    %1260 = vmatpush2.msra.mxu0 0.0
    %1261 = vmatprep.subr.mxu0 0.0
    %1262 = vmatpush2.msra.mxu0 0.0
    %1263 = vmatprep.subr.mxu0 0.0
    %1264 = vmatpush2.msra.mxu0 0.0
    %1265 = vmatprep.subr.mxu0 0.0
    %1266 = vmatpush2.msra.mxu0 0.0
    %1267 = vmatprep.subr.mxu0 0.0
    %1268 = vmatpush2.msra.mxu0 0.0
    %1269 = vmatprep.subr.mxu0 0.0
    %1270 = vmatpush2.msra.mxu0 0.0
    %1271 = vmatprep.mubr.f32.mxu0 0.0
    %1272 = vmatmul.mubr.f32.gmra.mxu0 %v1033
    %v1273 = vpop.f32.mrf.mxu0
    %v1274 = vadd.f32 %v71, %v1273
    %v1275 = vpop.f32.mrf.mxu0
    %1276 = vdwg.mxu0
    %v1277 = vadd.f32 %v1204, %v1274
    %v1278 = vsel %vm232, %v1277, -inf
    %1279 = vmax.xlane.f32.xlu0 %v1278
    %v1280 = vpop.xlane.xlu0 %1279
    %v1281 = vsub.f32 %v1277, %v1280
    %v1282 = vmul.f32 %v1281, 1.442695
    %v1283 = vpow.pop %v1282
    %v1284 = vsel %vm232, %v1283, 0.0
    %1285 = vadd.xlane.f32.xlu0 %v1284
    %v1286 = vpop.xlane.xlu0 %1285
    %v1287 = vrcp.pop %v1286
    %v1288 = vmul.f32 %v1283, %v1287
    %v1290 = vsel %vm244, %v1288, 0
    %1292 = vmatprep.subr.mxu0 0.0
    %1293 = vmatpush1.msra.mxu0 0.0
    %1294 = vmatprep.subr.mxu0 0.0
    %1295 = vmatpush1.msra.mxu0 0.0
    %1296 = vmatprep.subr.mxu0 0.0
    %1297 = vmatpush1.msra.mxu0 0.0
    %1298 = vmatprep.subr.mxu0 0.0
    %1299 = vmatpush1.msra.mxu0 0.0
    %1300 = vmatprep.subr.mxu0 0.0
    %1301 = vmatpush1.msra.mxu0 0.0
    %1302 = vmatprep.subr.mxu0 0.0
    %1303 = vmatpush1.msra.mxu0 0.0
    %1304 = vmatprep.subr.mxu0 0.0
    %1305 = vmatpush1.msra.mxu0 0.0
    %1306 = vmatprep.subr.mxu0 0.0
    %1307 = vmatpush1.msra.mxu0 0.0
    %1308 = vmatprep.subr.mxu0 0.0
    %1309 = vmatpush1.msra.mxu0 0.0
    %1310 = vmatprep.subr.mxu0 0.0
    %1311 = vmatpush1.msra.mxu0 0.0
    %1312 = vmatprep.subr.mxu0 0.0
    %1313 = vmatpush1.msra.mxu0 0.0
    %1314 = vmatprep.subr.mxu0 0.0
    %1315 = vmatpush1.msra.mxu0 0.0
    %1316 = vmatprep.subr.mxu0 0.0
    %1317 = vmatpush1.msra.mxu0 0.0
    %1318 = vmatprep.subr.mxu0 0.0
    %1319 = vmatpush1.msra.mxu0 0.0
    %1320 = vmatprep.subr.mxu0 0.0
    %1321 = vmatpush1.msra.mxu0 %v250
    %1322 = vmatprep.subr.mxu0 0.0
    %1323 = vmatpush1.msra.mxu0 %v49
    %1324 = vmatprep.subr.mxu0 0.0
    %1325 = vmatpush2.msra.mxu0 0.0
    %1326 = vmatprep.subr.mxu0 0.0
    %1327 = vmatpush2.msra.mxu0 0.0
    %1328 = vmatprep.subr.mxu0 0.0
    %1329 = vmatpush2.msra.mxu0 0.0
    %1330 = vmatprep.subr.mxu0 0.0
    %1331 = vmatpush2.msra.mxu0 0.0
    %1332 = vmatprep.subr.mxu0 0.0
    %1333 = vmatpush2.msra.mxu0 0.0
    %1334 = vmatprep.subr.mxu0 0.0
    %1335 = vmatpush2.msra.mxu0 0.0
    %1336 = vmatprep.subr.mxu0 0.0
    %1337 = vmatpush2.msra.mxu0 0.0
    %1338 = vmatprep.subr.mxu0 0.0
    %1339 = vmatpush2.msra.mxu0 0.0
    %1340 = vmatprep.subr.mxu0 0.0
    %1341 = vmatpush2.msra.mxu0 0.0
    %1342 = vmatprep.subr.mxu0 0.0
    %1343 = vmatpush2.msra.mxu0 0.0
    %1344 = vmatprep.subr.mxu0 0.0
    %1345 = vmatpush2.msra.mxu0 0.0
    %1346 = vmatprep.subr.mxu0 0.0
    %1347 = vmatpush2.msra.mxu0 0.0
    %1348 = vmatprep.subr.mxu0 0.0
    %1349 = vmatpush2.msra.mxu0 0.0
    %1350 = vmatprep.subr.mxu0 0.0
    %1351 = vmatpush2.msra.mxu0 0.0
    %1352 = vmatprep.subr.mxu0 0.0
    %1353 = vmatpush2.msra.mxu0 0.0
    %1354 = vmatprep.subr.mxu0 0.0
    %1355 = vmatpush2.msra.mxu0 0.0
    %1356 = vmatprep.mubr.f32.mxu0 0.0
    %1357 = vmatmul.mubr.f32.gmra.mxu0 %v1290
    %v1358 = vpop.f32.mrf.mxu0
    %v1359 = vadd.f32 0.0, %v1358
    %v1360 = vpop.f32.mrf.mxu0
    %1361 = vdwg.mxu0
    %v1363 = vsel %vm84, %v1359, 0
    %1365 = vmatprep.subr.mxu0 0.0
    %1366 = vmatpush1.msra.mxu0 0.0
    %1367 = vmatprep.subr.mxu0 0.0
    %1368 = vmatpush1.msra.mxu0 0.0
    %1369 = vmatprep.subr.mxu0 0.0
    %1370 = vmatpush1.msra.mxu0 0.0
    %1371 = vmatprep.subr.mxu0 0.0
    %1372 = vmatpush1.msra.mxu0 0.0
    %1373 = vmatprep.subr.mxu0 0.0
    %1374 = vmatpush1.msra.mxu0 0.0
    %1375 = vmatprep.subr.mxu0 0.0
    %1376 = vmatpush1.msra.mxu0 0.0
    %1377 = vmatprep.subr.mxu0 0.0
    %1378 = vmatpush1.msra.mxu0 0.0
    %1379 = vmatprep.subr.mxu0 0.0
    %1380 = vmatpush1.msra.mxu0 0.0
    %1381 = vmatprep.subr.mxu0 0.0
    %1382 = vmatpush1.msra.mxu0 0.0
    %1383 = vmatprep.subr.mxu0 0.0
    %1384 = vmatpush1.msra.mxu0 0.0
    %1385 = vmatprep.subr.mxu0 0.0
    %1386 = vmatpush1.msra.mxu0 0.0
    %1387 = vmatprep.subr.mxu0 0.0
    %1388 = vmatpush1.msra.mxu0 0.0
    %1389 = vmatprep.subr.mxu0 0.0
    %1390 = vmatpush1.msra.mxu0 %v66
    %1391 = vmatprep.subr.mxu0 0.0
    %1392 = vmatpush1.msra.mxu0 %v65
    %1393 = vmatprep.subr.mxu0 0.0
    %1394 = vmatpush1.msra.mxu0 %v64
    %1395 = vmatprep.subr.mxu0 0.0
    %1396 = vmatpush1.msra.mxu0 %v63
    %1397 = vmatprep.subr.mxu0 0.0
    %1398 = vmatpush2.msra.mxu0 0.0
    %1399 = vmatprep.subr.mxu0 0.0
    %1400 = vmatpush2.msra.mxu0 0.0
    %1401 = vmatprep.subr.mxu0 0.0
    %1402 = vmatpush2.msra.mxu0 0.0
    %1403 = vmatprep.subr.mxu0 0.0
    %1404 = vmatpush2.msra.mxu0 0.0
    %1405 = vmatprep.subr.mxu0 0.0
    %1406 = vmatpush2.msra.mxu0 0.0
    %1407 = vmatprep.subr.mxu0 0.0
    %1408 = vmatpush2.msra.mxu0 0.0
    %1409 = vmatprep.subr.mxu0 0.0
    %1410 = vmatpush2.msra.mxu0 0.0
    %1411 = vmatprep.subr.mxu0 0.0
    %1412 = vmatpush2.msra.mxu0 0.0
    %1413 = vmatprep.subr.mxu0 0.0
    %1414 = vmatpush2.msra.mxu0 0.0
    %1415 = vmatprep.subr.mxu0 0.0
    %1416 = vmatpush2.msra.mxu0 0.0
    %1417 = vmatprep.subr.mxu0 0.0
    %1418 = vmatpush2.msra.mxu0 0.0
    %1419 = vmatprep.subr.mxu0 0.0
    %1420 = vmatpush2.msra.mxu0 0.0
    %1421 = vmatprep.subr.mxu0 0.0
    %1422 = vmatpush2.msra.mxu0 0.0
    %1423 = vmatprep.subr.mxu0 0.0
    %1424 = vmatpush2.msra.mxu0 0.0
    %1425 = vmatprep.subr.mxu0 0.0
    %1426 = vmatpush2.msra.mxu0 0.0
    %1427 = vmatprep.subr.mxu0 0.0
    %1428 = vmatpush2.msra.mxu0 0.0
    %1429 = vmatprep.mubr.f32.mxu0 0.0
    %1430 = vmatmul.mubr.f32.gmra.mxu0 %v1363
    %v1431 = vpop.f32.mrf.mxu0
    %v1432 = vadd.f32 0.0, %v1431
    %v1433 = vpop.f32.mrf.mxu0
    %1434 = vdwg.mxu0
    %1436 = vrot.lane.b32.xlu0 %v1432, 32
    %v1437 = vpop.permute.xlu0 %1436
    %v1439 = vadd.f32 %v1204, %v1437
    %v1440 = vmax.f32 %v1439, 0.0
    %1442 = vrot.lane.b32.xlu0 %v1440, 96
    %v1443 = vpop.permute.xlu0 %1442
    %v1444 = vsel %vm84, %v1443, 0
    %1446 = vmatprep.subr.mxu0 0.0
    %1447 = vmatpush1.msra.mxu0 0.0
    %1448 = vmatprep.subr.mxu0 0.0
    %1449 = vmatpush1.msra.mxu0 0.0
    %1450 = vmatprep.subr.mxu0 0.0
    %1451 = vmatpush1.msra.mxu0 0.0
    %1452 = vmatprep.subr.mxu0 0.0
    %1453 = vmatpush1.msra.mxu0 0.0
    %1454 = vmatprep.subr.mxu0 0.0
    %1455 = vmatpush1.msra.mxu0 0.0
    %1456 = vmatprep.subr.mxu0 0.0
    %1457 = vmatpush1.msra.mxu0 0.0
    %1458 = vmatprep.subr.mxu0 0.0
    %1459 = vmatpush1.msra.mxu0 0.0
    %1460 = vmatprep.subr.mxu0 0.0
    %1461 = vmatpush1.msra.mxu0 0.0
    %1462 = vmatprep.subr.mxu0 0.0
    %1463 = vmatpush1.msra.mxu0 0.0
    %1464 = vmatprep.subr.mxu0 0.0
    %1465 = vmatpush1.msra.mxu0 0.0
    %1466 = vmatprep.subr.mxu0 0.0
    %1467 = vmatpush1.msra.mxu0 0.0
    %1468 = vmatprep.subr.mxu0 0.0
    %1469 = vmatpush1.msra.mxu0 0.0
    %1470 = vmatprep.subr.mxu0 0.0
    %1471 = vmatpush1.msra.mxu0 %v62
    %1472 = vmatprep.subr.mxu0 0.0
    %1473 = vmatpush1.msra.mxu0 %v61
    %1474 = vmatprep.subr.mxu0 0.0
    %1475 = vmatpush1.msra.mxu0 %v60
    %1476 = vmatprep.subr.mxu0 0.0
    %1477 = vmatpush1.msra.mxu0 %v59
    %1478 = vmatprep.subr.mxu0 0.0
    %1479 = vmatpush2.msra.mxu0 0.0
    %1480 = vmatprep.subr.mxu0 0.0
    %1481 = vmatpush2.msra.mxu0 0.0
    %1482 = vmatprep.subr.mxu0 0.0
    %1483 = vmatpush2.msra.mxu0 0.0
    %1484 = vmatprep.subr.mxu0 0.0
    %1485 = vmatpush2.msra.mxu0 0.0
    %1486 = vmatprep.subr.mxu0 0.0
    %1487 = vmatpush2.msra.mxu0 0.0
    %1488 = vmatprep.subr.mxu0 0.0
    %1489 = vmatpush2.msra.mxu0 0.0
    %1490 = vmatprep.subr.mxu0 0.0
    %1491 = vmatpush2.msra.mxu0 0.0
    %1492 = vmatprep.subr.mxu0 0.0
    %1493 = vmatpush2.msra.mxu0 0.0
    %1494 = vmatprep.subr.mxu0 0.0
    %1495 = vmatpush2.msra.mxu0 0.0
    %1496 = vmatprep.subr.mxu0 0.0
    %1497 = vmatpush2.msra.mxu0 0.0
    %1498 = vmatprep.subr.mxu0 0.0
    %1499 = vmatpush2.msra.mxu0 0.0
    %1500 = vmatprep.subr.mxu0 0.0
    %1501 = vmatpush2.msra.mxu0 0.0
    %1502 = vmatprep.subr.mxu0 0.0
    %1503 = vmatpush2.msra.mxu0 0.0
    %1504 = vmatprep.subr.mxu0 0.0
    %1505 = vmatpush2.msra.mxu0 0.0
    %1506 = vmatprep.subr.mxu0 0.0
    %1507 = vmatpush2.msra.mxu0 0.0
    %1508 = vmatprep.subr.mxu0 0.0
    %1509 = vmatpush2.msra.mxu0 0.0
    %1510 = vmatprep.mubr.f32.mxu0 0.0
    %1511 = vmatmul.mubr.f32.gmra.mxu0 %v1444
    %v1512 = vpop.f32.mrf.mxu0
    %v1513 = vadd.f32 %v73, %v1512
    %v1514 = vpop.f32.mrf.mxu0
    %1515 = vdwg.mxu0
    %1517 = vrot.lane.b32.xlu0 %v1274, 96
    %v1518 = vpop.permute.xlu0 %1517
    %v1520 = vadd.f32 %v1513, %v1518
    %v1521 = vxor.u32 %v1520, 2147483648
    %v1522 = vmul.f32 %v1521, 1.442695
    %v1523 = vpow.pop %v1522
    %v1524 = vadd.f32 %v1523, 1.0
    %v1525 = vrcp.pop %v1524
    %v1526 = vmul.f32 1.0, %v1525
    %1527 = vrot.lane.b32.xlu0 %v1274, 32
    %v1528 = vpop.permute.xlu0 %1527
    %v1530 = vmul.f32 %v1526, %v1528
    %1532 = vrot.lane.b32.xlu0 %v1530, 64
    %v1533 = vpop.permute.xlu0 %1532
    %v1535 = vadd.f32 %v1513, %v1533
    %v1536 = vtanh.pop %v1535
    %v1537 = vsub.f32 1.0, %v1526
    %1539 = vrot.lane.b32.xlu0 %v1536, 96
    %v1540 = vpop.permute.xlu0 %1539
    %v1542 = vmul.f32 %v1537, %v1540
    %v1543 = vmul.f32 %v1526, %v1029
    %v1544 = vadd.f32 %v1542, %v1543
    %1546 = vrot.lane.b32.xlu0 %v1544, 96
    %v1547 = vpop.permute.xlu0 %1546
    %v1548 = vsel %vm84, %v1547, 0
    %1550 = vmatprep.subr.mxu0 0.0
    %1551 = vmatpush1.msra.mxu0 0.0
    %1552 = vmatprep.subr.mxu0 0.0
    %1553 = vmatpush1.msra.mxu0 0.0
    %1554 = vmatprep.subr.mxu0 0.0
    %1555 = vmatpush1.msra.mxu0 0.0
    %1556 = vmatprep.subr.mxu0 0.0
    %1557 = vmatpush1.msra.mxu0 0.0
    %1558 = vmatprep.subr.mxu0 0.0
    %1559 = vmatpush1.msra.mxu0 0.0
    %1560 = vmatprep.subr.mxu0 0.0
    %1561 = vmatpush1.msra.mxu0 0.0
    %1562 = vmatprep.subr.mxu0 0.0
    %1563 = vmatpush1.msra.mxu0 0.0
    %1564 = vmatprep.subr.mxu0 0.0
    %1565 = vmatpush1.msra.mxu0 0.0
    %1566 = vmatprep.subr.mxu0 0.0
    %1567 = vmatpush1.msra.mxu0 0.0
    %1568 = vmatprep.subr.mxu0 0.0
    %1569 = vmatpush1.msra.mxu0 0.0
    %1570 = vmatprep.subr.mxu0 0.0
    %1571 = vmatpush1.msra.mxu0 0.0
    %1572 = vmatprep.subr.mxu0 0.0
    %1573 = vmatpush1.msra.mxu0 0.0
    %1574 = vmatprep.subr.mxu0 0.0
    %1575 = vmatpush1.msra.mxu0 %v70
    %1576 = vmatprep.subr.mxu0 0.0
    %1577 = vmatpush1.msra.mxu0 %v69
    %1578 = vmatprep.subr.mxu0 0.0
    %1579 = vmatpush1.msra.mxu0 %v68
    %1580 = vmatprep.subr.mxu0 0.0
    %1581 = vmatpush1.msra.mxu0 %v67
    %1582 = vmatprep.subr.mxu0 0.0
    %1583 = vmatpush2.msra.mxu0 0.0
    %1584 = vmatprep.subr.mxu0 0.0
    %1585 = vmatpush2.msra.mxu0 0.0
    %1586 = vmatprep.subr.mxu0 0.0
    %1587 = vmatpush2.msra.mxu0 0.0
    %1588 = vmatprep.subr.mxu0 0.0
    %1589 = vmatpush2.msra.mxu0 0.0
    %1590 = vmatprep.subr.mxu0 0.0
    %1591 = vmatpush2.msra.mxu0 0.0
    %1592 = vmatprep.subr.mxu0 0.0
    %1593 = vmatpush2.msra.mxu0 0.0
    %1594 = vmatprep.subr.mxu0 0.0
    %1595 = vmatpush2.msra.mxu0 0.0
    %1596 = vmatprep.subr.mxu0 0.0
    %1597 = vmatpush2.msra.mxu0 0.0
    %1598 = vmatprep.subr.mxu0 0.0
    %1599 = vmatpush2.msra.mxu0 0.0
    %1600 = vmatprep.subr.mxu0 0.0
    %1601 = vmatpush2.msra.mxu0 0.0
    %1602 = vmatprep.subr.mxu0 0.0
    %1603 = vmatpush2.msra.mxu0 0.0
    %1604 = vmatprep.subr.mxu0 0.0
    %1605 = vmatpush2.msra.mxu0 0.0
    %1606 = vmatprep.subr.mxu0 0.0
    %1607 = vmatpush2.msra.mxu0 0.0
    %1608 = vmatprep.subr.mxu0 0.0
    %1609 = vmatpush2.msra.mxu0 0.0
    %1610 = vmatprep.subr.mxu0 0.0
    %1611 = vmatpush2.msra.mxu0 0.0
    %1612 = vmatprep.subr.mxu0 0.0
    %1613 = vmatpush2.msra.mxu0 0.0
    %1614 = vmatprep.mubr.f32.mxu0 0.0
    %1615 = vmatmul.mubr.f32.gmra.mxu0 %v1548
    %v1616 = vpop.f32.mrf.mxu0
    %v1617 = vadd.f32 %v74, %v1616
    %v1618 = vpop.f32.mrf.mxu0
    %1619 = vdwg.mxu0
    %v1620 = vsel %vm587, %v1617, -inf
    %1621 = vmax.xlane.f32.xlu0 %v1620
    %v1622 = vpop.xlane.xlu0 %1621
    %v1623 = vsub.f32 %v1617, %v1622
    %v1624 = vmul.f32 %v1623, 1.442695
    %v1625 = vpow.pop %v1624
    %v1626 = vsel %vm587, %v1625, 0.0
    %1627 = vadd.xlane.f32.xlu0 %v1626
    %v1628 = vpop.xlane.xlu0 %1627
    %v1629 = vlog2.pop %v1628
    %v1630 = vmul.f32 %v1629, 0.6931472
    %v1631 = vsub.f32 %v1623, %v1630
    %1632 = vst.msk [vmem:[#allocation9 + $0x2] sm:$0x1] %vm587, %v1631
    %1633 = vrot.lane.b32.xlu0 %v1544, 32
    %v1634 = vpop.permute.xlu0 %1633
    %1636 = vst.msk [vmem:[#allocation9 + $0x2] sm:$0x1] %vm604, %v1634
    %1637 = vrot.lane.b32.xlu0 %v1288, 96
    %v1638 = vpop.permute.xlu0 %1637
    %1640 = vst.msk [vmem:[#allocation9 + $0x2] sm:$0x1] %vm609, %v1638
    %s1641 = sld [smem:[#allocation3 + $0x3]]
    %p1642 = scmp.gt.s32.totalorder %s1641, 0
    %s1643 = scalar_select %p1642, %s1641, 0
    %p1644 = scmp.lt.s32.totalorder %s1643, 63
    %s1645 = scalar_select %p1644, %s1643, 63
    %s1646 = smul.u32 %s1645, 8
    %s1647 = scalar_lea.vmem [#allocation7], %s1646
    %v1648 = vld [vmem:[%s1647] sm:$0x1]
    %v1650 = vsel %vm84, %v1648, 0
    %1652 = vmatprep.subr.mxu0 0.0
    %1653 = vmatpush1.msra.mxu0 0.0
    %1654 = vmatprep.subr.mxu0 0.0
    %1655 = vmatpush1.msra.mxu0 0.0
    %1656 = vmatprep.subr.mxu0 0.0
    %1657 = vmatpush1.msra.mxu0 0.0
    %1658 = vmatprep.subr.mxu0 0.0
    %1659 = vmatpush1.msra.mxu0 0.0
    %1660 = vmatprep.subr.mxu0 0.0
    %1661 = vmatpush1.msra.mxu0 0.0
    %1662 = vmatprep.subr.mxu0 0.0
    %1663 = vmatpush1.msra.mxu0 0.0
    %1664 = vmatprep.subr.mxu0 0.0
    %1665 = vmatpush1.msra.mxu0 0.0
    %1666 = vmatprep.subr.mxu0 0.0
    %1667 = vmatpush1.msra.mxu0 0.0
    %1668 = vmatprep.subr.mxu0 0.0
    %1669 = vmatpush1.msra.mxu0 0.0
    %1670 = vmatprep.subr.mxu0 0.0
    %1671 = vmatpush1.msra.mxu0 0.0
    %1672 = vmatprep.subr.mxu0 0.0
    %1673 = vmatpush1.msra.mxu0 0.0
    %1674 = vmatprep.subr.mxu0 0.0
    %1675 = vmatpush1.msra.mxu0 0.0
    %1676 = vmatprep.subr.mxu0 0.0
    %1677 = vmatpush1.msra.mxu0 %v58
    %1678 = vmatprep.subr.mxu0 0.0
    %1679 = vmatpush1.msra.mxu0 %v57
    %1680 = vmatprep.subr.mxu0 0.0
    %1681 = vmatpush1.msra.mxu0 %v56
    %1682 = vmatprep.subr.mxu0 0.0
    %1683 = vmatpush1.msra.mxu0 %v55
    %1684 = vmatprep.subr.mxu0 0.0
    %1685 = vmatpush2.msra.mxu0 0.0
    %1686 = vmatprep.subr.mxu0 0.0
    %1687 = vmatpush2.msra.mxu0 0.0
    %1688 = vmatprep.subr.mxu0 0.0
    %1689 = vmatpush2.msra.mxu0 0.0
    %1690 = vmatprep.subr.mxu0 0.0
    %1691 = vmatpush2.msra.mxu0 0.0
    %1692 = vmatprep.subr.mxu0 0.0
    %1693 = vmatpush2.msra.mxu0 0.0
    %1694 = vmatprep.subr.mxu0 0.0
    %1695 = vmatpush2.msra.mxu0 0.0
    %1696 = vmatprep.subr.mxu0 0.0
    %1697 = vmatpush2.msra.mxu0 0.0
    %1698 = vmatprep.subr.mxu0 0.0
    %1699 = vmatpush2.msra.mxu0 0.0
    %1700 = vmatprep.subr.mxu0 0.0
    %1701 = vmatpush2.msra.mxu0 0.0
    %1702 = vmatprep.subr.mxu0 0.0
    %1703 = vmatpush2.msra.mxu0 0.0
    %1704 = vmatprep.subr.mxu0 0.0
    %1705 = vmatpush2.msra.mxu0 0.0
    %1706 = vmatprep.subr.mxu0 0.0
    %1707 = vmatpush2.msra.mxu0 0.0
    %1708 = vmatprep.subr.mxu0 0.0
    %1709 = vmatpush2.msra.mxu0 0.0
    %1710 = vmatprep.subr.mxu0 0.0
    %1711 = vmatpush2.msra.mxu0 0.0
    %1712 = vmatprep.subr.mxu0 0.0
    %1713 = vmatpush2.msra.mxu0 0.0
    %1714 = vmatprep.subr.mxu0 0.0
    %1715 = vmatpush2.msra.mxu0 0.0
    %1716 = vmatprep.mubr.f32.mxu0 0.0
    %1717 = vmatmul.mubr.f32.gmra.mxu0 %v1650
    %v1718 = vpop.f32.mrf.mxu0
    %v1719 = vadd.f32 %v72, %v1718
    %v1720 = vpop.f32.mrf.mxu0
    %1721 = vdwg.mxu0
    %1722 = vmatprep.subr.mxu0 0.0
    %1723 = vmatpush1.msra.mxu0 0.0
    %1724 = vmatprep.subr.mxu0 0.0
    %1725 = vmatpush1.msra.mxu0 0.0
    %1726 = vmatprep.subr.mxu0 0.0
    %1727 = vmatpush1.msra.mxu0 0.0
    %1728 = vmatprep.subr.mxu0 0.0
    %1729 = vmatpush1.msra.mxu0 0.0
    %1730 = vmatprep.subr.mxu0 0.0
    %1731 = vmatpush1.msra.mxu0 0.0
    %1732 = vmatprep.subr.mxu0 0.0
    %1733 = vmatpush1.msra.mxu0 0.0
    %1734 = vmatprep.subr.mxu0 0.0
    %1735 = vmatpush1.msra.mxu0 0.0
    %1736 = vmatprep.subr.mxu0 0.0
    %1737 = vmatpush1.msra.mxu0 0.0
    %1738 = vmatprep.subr.mxu0 0.0
    %1739 = vmatpush1.msra.mxu0 0.0
    %1740 = vmatprep.subr.mxu0 0.0
    %1741 = vmatpush1.msra.mxu0 0.0
    %1742 = vmatprep.subr.mxu0 0.0
    %1743 = vmatpush1.msra.mxu0 0.0
    %1744 = vmatprep.subr.mxu0 0.0
    %1745 = vmatpush1.msra.mxu0 0.0
    %1746 = vmatprep.subr.mxu0 0.0
    %1747 = vmatpush1.msra.mxu0 %v54
    %1748 = vmatprep.subr.mxu0 0.0
    %1749 = vmatpush1.msra.mxu0 %v53
    %1750 = vmatprep.subr.mxu0 0.0
    %1751 = vmatpush1.msra.mxu0 %v52
    %1752 = vmatprep.subr.mxu0 0.0
    %1753 = vmatpush1.msra.mxu0 %v51
    %1754 = vmatprep.subr.mxu0 0.0
    %1755 = vmatpush2.msra.mxu0 0.0
    %1756 = vmatprep.subr.mxu0 0.0
    %1757 = vmatpush2.msra.mxu0 0.0
    %1758 = vmatprep.subr.mxu0 0.0
    %1759 = vmatpush2.msra.mxu0 0.0
    %1760 = vmatprep.subr.mxu0 0.0
    %1761 = vmatpush2.msra.mxu0 0.0
    %1762 = vmatprep.subr.mxu0 0.0
    %1763 = vmatpush2.msra.mxu0 0.0
    %1764 = vmatprep.subr.mxu0 0.0
    %1765 = vmatpush2.msra.mxu0 0.0
    %1766 = vmatprep.subr.mxu0 0.0
    %1767 = vmatpush2.msra.mxu0 0.0
    %1768 = vmatprep.subr.mxu0 0.0
    %1769 = vmatpush2.msra.mxu0 0.0
    %1770 = vmatprep.subr.mxu0 0.0
    %1771 = vmatpush2.msra.mxu0 0.0
    %1772 = vmatprep.subr.mxu0 0.0
    %1773 = vmatpush2.msra.mxu0 0.0
    %1774 = vmatprep.subr.mxu0 0.0
    %1775 = vmatpush2.msra.mxu0 0.0
    %1776 = vmatprep.subr.mxu0 0.0
    %1777 = vmatpush2.msra.mxu0 0.0
    %1778 = vmatprep.subr.mxu0 0.0
    %1779 = vmatpush2.msra.mxu0 0.0
    %1780 = vmatprep.subr.mxu0 0.0
    %1781 = vmatpush2.msra.mxu0 0.0
    %1782 = vmatprep.subr.mxu0 0.0
    %1783 = vmatpush2.msra.mxu0 0.0
    %1784 = vmatprep.subr.mxu0 0.0
    %1785 = vmatpush2.msra.mxu0 0.0
    %1786 = vmatprep.mubr.f32.mxu0 0.0
    %1787 = vmatmul.mubr.f32.gmra.mxu0 %v1548
    %v1788 = vpop.f32.mrf.mxu0
    %v1789 = vadd.f32 %v71, %v1788
    %v1790 = vpop.f32.mrf.mxu0
    %1791 = vdwg.mxu0
    %v1792 = vadd.f32 %v1719, %v1789
    %v1793 = vsel %vm232, %v1792, -inf
    %1794 = vmax.xlane.f32.xlu0 %v1793
    %v1795 = vpop.xlane.xlu0 %1794
    %v1796 = vsub.f32 %v1792, %v1795
    %v1797 = vmul.f32 %v1796, 1.442695
    %v1798 = vpow.pop %v1797
    %v1799 = vsel %vm232, %v1798, 0.0
    %1800 = vadd.xlane.f32.xlu0 %v1799
    %v1801 = vpop.xlane.xlu0 %1800
    %v1802 = vrcp.pop %v1801
    %v1803 = vmul.f32 %v1798, %v1802
    %v1805 = vsel %vm244, %v1803, 0
    %1807 = vmatprep.subr.mxu0 0.0
    %1808 = vmatpush1.msra.mxu0 0.0
    %1809 = vmatprep.subr.mxu0 0.0
    %1810 = vmatpush1.msra.mxu0 0.0
    %1811 = vmatprep.subr.mxu0 0.0
    %1812 = vmatpush1.msra.mxu0 0.0
    %1813 = vmatprep.subr.mxu0 0.0
    %1814 = vmatpush1.msra.mxu0 0.0
    %1815 = vmatprep.subr.mxu0 0.0
    %1816 = vmatpush1.msra.mxu0 0.0
    %1817 = vmatprep.subr.mxu0 0.0
    %1818 = vmatpush1.msra.mxu0 0.0
    %1819 = vmatprep.subr.mxu0 0.0
    %1820 = vmatpush1.msra.mxu0 0.0
    %1821 = vmatprep.subr.mxu0 0.0
    %1822 = vmatpush1.msra.mxu0 0.0
    %1823 = vmatprep.subr.mxu0 0.0
    %1824 = vmatpush1.msra.mxu0 0.0
    %1825 = vmatprep.subr.mxu0 0.0
    %1826 = vmatpush1.msra.mxu0 0.0
    %1827 = vmatprep.subr.mxu0 0.0
    %1828 = vmatpush1.msra.mxu0 0.0
    %1829 = vmatprep.subr.mxu0 0.0
    %1830 = vmatpush1.msra.mxu0 0.0
    %1831 = vmatprep.subr.mxu0 0.0
    %1832 = vmatpush1.msra.mxu0 0.0
    %1833 = vmatprep.subr.mxu0 0.0
    %1834 = vmatpush1.msra.mxu0 0.0
    %1835 = vmatprep.subr.mxu0 0.0
    %1836 = vmatpush1.msra.mxu0 %v250
    %1837 = vmatprep.subr.mxu0 0.0
    %1838 = vmatpush1.msra.mxu0 %v49
    %1839 = vmatprep.subr.mxu0 0.0
    %1840 = vmatpush2.msra.mxu0 0.0
    %1841 = vmatprep.subr.mxu0 0.0
    %1842 = vmatpush2.msra.mxu0 0.0
    %1843 = vmatprep.subr.mxu0 0.0
    %1844 = vmatpush2.msra.mxu0 0.0
    %1845 = vmatprep.subr.mxu0 0.0
    %1846 = vmatpush2.msra.mxu0 0.0
    %1847 = vmatprep.subr.mxu0 0.0
    %1848 = vmatpush2.msra.mxu0 0.0
    %1849 = vmatprep.subr.mxu0 0.0
    %1850 = vmatpush2.msra.mxu0 0.0
    %1851 = vmatprep.subr.mxu0 0.0
    %1852 = vmatpush2.msra.mxu0 0.0
    %1853 = vmatprep.subr.mxu0 0.0
    %1854 = vmatpush2.msra.mxu0 0.0
    %1855 = vmatprep.subr.mxu0 0.0
    %1856 = vmatpush2.msra.mxu0 0.0
    %1857 = vmatprep.subr.mxu0 0.0
    %1858 = vmatpush2.msra.mxu0 0.0
    %1859 = vmatprep.subr.mxu0 0.0
    %1860 = vmatpush2.msra.mxu0 0.0
    %1861 = vmatprep.subr.mxu0 0.0
    %1862 = vmatpush2.msra.mxu0 0.0
    %1863 = vmatprep.subr.mxu0 0.0
    %1864 = vmatpush2.msra.mxu0 0.0
    %1865 = vmatprep.subr.mxu0 0.0
    %1866 = vmatpush2.msra.mxu0 0.0
    %1867 = vmatprep.subr.mxu0 0.0
    %1868 = vmatpush2.msra.mxu0 0.0
    %1869 = vmatprep.subr.mxu0 0.0
    %1870 = vmatpush2.msra.mxu0 0.0
    %1871 = vmatprep.mubr.f32.mxu0 0.0
    %1872 = vmatmul.mubr.f32.gmra.mxu0 %v1805
    %v1873 = vpop.f32.mrf.mxu0
    %v1874 = vadd.f32 0.0, %v1873
    %v1875 = vpop.f32.mrf.mxu0
    %1876 = vdwg.mxu0
    %v1878 = vsel %vm84, %v1874, 0
    %1880 = vmatprep.subr.mxu0 0.0
    %1881 = vmatpush1.msra.mxu0 0.0
    %1882 = vmatprep.subr.mxu0 0.0
    %1883 = vmatpush1.msra.mxu0 0.0
    %1884 = vmatprep.subr.mxu0 0.0
    %1885 = vmatpush1.msra.mxu0 0.0
    %1886 = vmatprep.subr.mxu0 0.0
    %1887 = vmatpush1.msra.mxu0 0.0
    %1888 = vmatprep.subr.mxu0 0.0
    %1889 = vmatpush1.msra.mxu0 0.0
    %1890 = vmatprep.subr.mxu0 0.0
    %1891 = vmatpush1.msra.mxu0 0.0
    %1892 = vmatprep.subr.mxu0 0.0
    %1893 = vmatpush1.msra.mxu0 0.0
    %1894 = vmatprep.subr.mxu0 0.0
    %1895 = vmatpush1.msra.mxu0 0.0
    %1896 = vmatprep.subr.mxu0 0.0
    %1897 = vmatpush1.msra.mxu0 0.0
    %1898 = vmatprep.subr.mxu0 0.0
    %1899 = vmatpush1.msra.mxu0 0.0
    %1900 = vmatprep.subr.mxu0 0.0
    %1901 = vmatpush1.msra.mxu0 0.0
    %1902 = vmatprep.subr.mxu0 0.0
    %1903 = vmatpush1.msra.mxu0 0.0
    %1904 = vmatprep.subr.mxu0 0.0
    %1905 = vmatpush1.msra.mxu0 %v66
    %1906 = vmatprep.subr.mxu0 0.0
    %1907 = vmatpush1.msra.mxu0 %v65
    %1908 = vmatprep.subr.mxu0 0.0
    %1909 = vmatpush1.msra.mxu0 %v64
    %1910 = vmatprep.subr.mxu0 0.0
    %1911 = vmatpush1.msra.mxu0 %v63
    %1912 = vmatprep.subr.mxu0 0.0
    %1913 = vmatpush2.msra.mxu0 0.0
    %1914 = vmatprep.subr.mxu0 0.0
    %1915 = vmatpush2.msra.mxu0 0.0
    %1916 = vmatprep.subr.mxu0 0.0
    %1917 = vmatpush2.msra.mxu0 0.0
    %1918 = vmatprep.subr.mxu0 0.0
    %1919 = vmatpush2.msra.mxu0 0.0
    %1920 = vmatprep.subr.mxu0 0.0
    %1921 = vmatpush2.msra.mxu0 0.0
    %1922 = vmatprep.subr.mxu0 0.0
    %1923 = vmatpush2.msra.mxu0 0.0
    %1924 = vmatprep.subr.mxu0 0.0
    %1925 = vmatpush2.msra.mxu0 0.0
    %1926 = vmatprep.subr.mxu0 0.0
    %1927 = vmatpush2.msra.mxu0 0.0
    %1928 = vmatprep.subr.mxu0 0.0
    %1929 = vmatpush2.msra.mxu0 0.0
    %1930 = vmatprep.subr.mxu0 0.0
    %1931 = vmatpush2.msra.mxu0 0.0
    %1932 = vmatprep.subr.mxu0 0.0
    %1933 = vmatpush2.msra.mxu0 0.0
    %1934 = vmatprep.subr.mxu0 0.0
    %1935 = vmatpush2.msra.mxu0 0.0
    %1936 = vmatprep.subr.mxu0 0.0
    %1937 = vmatpush2.msra.mxu0 0.0
    %1938 = vmatprep.subr.mxu0 0.0
    %1939 = vmatpush2.msra.mxu0 0.0
    %1940 = vmatprep.subr.mxu0 0.0
    %1941 = vmatpush2.msra.mxu0 0.0
    %1942 = vmatprep.subr.mxu0 0.0
    %1943 = vmatpush2.msra.mxu0 0.0
    %1944 = vmatprep.mubr.f32.mxu0 0.0
    %1945 = vmatmul.mubr.f32.gmra.mxu0 %v1878
    %v1946 = vpop.f32.mrf.mxu0
    %v1947 = vadd.f32 0.0, %v1946
    %v1948 = vpop.f32.mrf.mxu0
    %1949 = vdwg.mxu0
    %1951 = vrot.lane.b32.xlu0 %v1947, 32
    %v1952 = vpop.permute.xlu0 %1951
    %v1954 = vadd.f32 %v1719, %v1952
    %v1955 = vmax.f32 %v1954, 0.0
    %1957 = vrot.lane.b32.xlu0 %v1955, 96
    %v1958 = vpop.permute.xlu0 %1957
    %v1959 = vsel %vm84, %v1958, 0
    %1961 = vmatprep.subr.mxu0 0.0
    %1962 = vmatpush1.msra.mxu0 0.0
    %1963 = vmatprep.subr.mxu0 0.0
    %1964 = vmatpush1.msra.mxu0 0.0
    %1965 = vmatprep.subr.mxu0 0.0
    %1966 = vmatpush1.msra.mxu0 0.0
    %1967 = vmatprep.subr.mxu0 0.0
    %1968 = vmatpush1.msra.mxu0 0.0
    %1969 = vmatprep.subr.mxu0 0.0
    %1970 = vmatpush1.msra.mxu0 0.0
    %1971 = vmatprep.subr.mxu0 0.0
    %1972 = vmatpush1.msra.mxu0 0.0
    %1973 = vmatprep.subr.mxu0 0.0
    %1974 = vmatpush1.msra.mxu0 0.0
    %1975 = vmatprep.subr.mxu0 0.0
    %1976 = vmatpush1.msra.mxu0 0.0
    %1977 = vmatprep.subr.mxu0 0.0
    %1978 = vmatpush1.msra.mxu0 0.0
    %1979 = vmatprep.subr.mxu0 0.0
    %1980 = vmatpush1.msra.mxu0 0.0
    %1981 = vmatprep.subr.mxu0 0.0
    %1982 = vmatpush1.msra.mxu0 0.0
    %1983 = vmatprep.subr.mxu0 0.0
    %1984 = vmatpush1.msra.mxu0 0.0
    %1985 = vmatprep.subr.mxu0 0.0
    %1986 = vmatpush1.msra.mxu0 %v62
    %1987 = vmatprep.subr.mxu0 0.0
    %1988 = vmatpush1.msra.mxu0 %v61
    %1989 = vmatprep.subr.mxu0 0.0
    %1990 = vmatpush1.msra.mxu0 %v60
    %1991 = vmatprep.subr.mxu0 0.0
    %1992 = vmatpush1.msra.mxu0 %v59
    %1993 = vmatprep.subr.mxu0 0.0
    %1994 = vmatpush2.msra.mxu0 0.0
    %1995 = vmatprep.subr.mxu0 0.0
    %1996 = vmatpush2.msra.mxu0 0.0
    %1997 = vmatprep.subr.mxu0 0.0
    %1998 = vmatpush2.msra.mxu0 0.0
    %1999 = vmatprep.subr.mxu0 0.0
    %2000 = vmatpush2.msra.mxu0 0.0
    %2001 = vmatprep.subr.mxu0 0.0
    %2002 = vmatpush2.msra.mxu0 0.0
    %2003 = vmatprep.subr.mxu0 0.0
    %2004 = vmatpush2.msra.mxu0 0.0
    %2005 = vmatprep.subr.mxu0 0.0
    %2006 = vmatpush2.msra.mxu0 0.0
    %2007 = vmatprep.subr.mxu0 0.0
    %2008 = vmatpush2.msra.mxu0 0.0
    %2009 = vmatprep.subr.mxu0 0.0
    %2010 = vmatpush2.msra.mxu0 0.0
    %2011 = vmatprep.subr.mxu0 0.0
    %2012 = vmatpush2.msra.mxu0 0.0
    %2013 = vmatprep.subr.mxu0 0.0
    %2014 = vmatpush2.msra.mxu0 0.0
    %2015 = vmatprep.subr.mxu0 0.0
    %2016 = vmatpush2.msra.mxu0 0.0
    %2017 = vmatprep.subr.mxu0 0.0
    %2018 = vmatpush2.msra.mxu0 0.0
    %2019 = vmatprep.subr.mxu0 0.0
    %2020 = vmatpush2.msra.mxu0 0.0
    %2021 = vmatprep.subr.mxu0 0.0
    %2022 = vmatpush2.msra.mxu0 0.0
    %2023 = vmatprep.subr.mxu0 0.0
    %2024 = vmatpush2.msra.mxu0 0.0
    %2025 = vmatprep.mubr.f32.mxu0 0.0
    %2026 = vmatmul.mubr.f32.gmra.mxu0 %v1959
    %v2027 = vpop.f32.mrf.mxu0
    %v2028 = vadd.f32 %v73, %v2027
    %v2029 = vpop.f32.mrf.mxu0
    %2030 = vdwg.mxu0
    %2032 = vrot.lane.b32.xlu0 %v1789, 96
    %v2033 = vpop.permute.xlu0 %2032
    %v2035 = vadd.f32 %v2028, %v2033
    %v2036 = vxor.u32 %v2035, 2147483648
    %v2037 = vmul.f32 %v2036, 1.442695
    %v2038 = vpow.pop %v2037
    %v2039 = vadd.f32 %v2038, 1.0
    %v2040 = vrcp.pop %v2039
    %v2041 = vmul.f32 1.0, %v2040
    %2042 = vrot.lane.b32.xlu0 %v1789, 32
    %v2043 = vpop.permute.xlu0 %2042
    %v2045 = vmul.f32 %v2041, %v2043
    %2047 = vrot.lane.b32.xlu0 %v2045, 64
    %v2048 = vpop.permute.xlu0 %2047
    %v2050 = vadd.f32 %v2028, %v2048
    %v2051 = vtanh.pop %v2050
    %v2052 = vsub.f32 1.0, %v2041
    %2054 = vrot.lane.b32.xlu0 %v2051, 96
    %v2055 = vpop.permute.xlu0 %2054
    %v2057 = vmul.f32 %v2052, %v2055
    %v2058 = vmul.f32 %v2041, %v1544
    %v2059 = vadd.f32 %v2057, %v2058
    %2061 = vrot.lane.b32.xlu0 %v2059, 96
    %v2062 = vpop.permute.xlu0 %2061
    %v2063 = vsel %vm84, %v2062, 0
    %2065 = vmatprep.subr.mxu0 0.0
    %2066 = vmatpush1.msra.mxu0 0.0
    %2067 = vmatprep.subr.mxu0 0.0
    %2068 = vmatpush1.msra.mxu0 0.0
    %2069 = vmatprep.subr.mxu0 0.0
    %2070 = vmatpush1.msra.mxu0 0.0
    %2071 = vmatprep.subr.mxu0 0.0
    %2072 = vmatpush1.msra.mxu0 0.0
    %2073 = vmatprep.subr.mxu0 0.0
    %2074 = vmatpush1.msra.mxu0 0.0
    %2075 = vmatprep.subr.mxu0 0.0
    %2076 = vmatpush1.msra.mxu0 0.0
    %2077 = vmatprep.subr.mxu0 0.0
    %2078 = vmatpush1.msra.mxu0 0.0
    %2079 = vmatprep.subr.mxu0 0.0
    %2080 = vmatpush1.msra.mxu0 0.0
    %2081 = vmatprep.subr.mxu0 0.0
    %2082 = vmatpush1.msra.mxu0 0.0
    %2083 = vmatprep.subr.mxu0 0.0
    %2084 = vmatpush1.msra.mxu0 0.0
    %2085 = vmatprep.subr.mxu0 0.0
    %2086 = vmatpush1.msra.mxu0 0.0
    %2087 = vmatprep.subr.mxu0 0.0
    %2088 = vmatpush1.msra.mxu0 0.0
    %2089 = vmatprep.subr.mxu0 0.0
    %2090 = vmatpush1.msra.mxu0 %v70
    %2091 = vmatprep.subr.mxu0 0.0
    %2092 = vmatpush1.msra.mxu0 %v69
    %2093 = vmatprep.subr.mxu0 0.0
    %2094 = vmatpush1.msra.mxu0 %v68
    %2095 = vmatprep.subr.mxu0 0.0
    %2096 = vmatpush1.msra.mxu0 %v67
    %2097 = vmatprep.subr.mxu0 0.0
    %2098 = vmatpush2.msra.mxu0 0.0
    %2099 = vmatprep.subr.mxu0 0.0
    %2100 = vmatpush2.msra.mxu0 0.0
    %2101 = vmatprep.subr.mxu0 0.0
    %2102 = vmatpush2.msra.mxu0 0.0
    %2103 = vmatprep.subr.mxu0 0.0
    %2104 = vmatpush2.msra.mxu0 0.0
    %2105 = vmatprep.subr.mxu0 0.0
    %2106 = vmatpush2.msra.mxu0 0.0
    %2107 = vmatprep.subr.mxu0 0.0
    %2108 = vmatpush2.msra.mxu0 0.0
    %2109 = vmatprep.subr.mxu0 0.0
    %2110 = vmatpush2.msra.mxu0 0.0
    %2111 = vmatprep.subr.mxu0 0.0
    %2112 = vmatpush2.msra.mxu0 0.0
    %2113 = vmatprep.subr.mxu0 0.0
    %2114 = vmatpush2.msra.mxu0 0.0
    %2115 = vmatprep.subr.mxu0 0.0
    %2116 = vmatpush2.msra.mxu0 0.0
    %2117 = vmatprep.subr.mxu0 0.0
    %2118 = vmatpush2.msra.mxu0 0.0
    %2119 = vmatprep.subr.mxu0 0.0
    %2120 = vmatpush2.msra.mxu0 0.0
    %2121 = vmatprep.subr.mxu0 0.0
    %2122 = vmatpush2.msra.mxu0 0.0
    %2123 = vmatprep.subr.mxu0 0.0
    %2124 = vmatpush2.msra.mxu0 0.0
    %2125 = vmatprep.subr.mxu0 0.0
    %2126 = vmatpush2.msra.mxu0 0.0
    %2127 = vmatprep.subr.mxu0 0.0
    %2128 = vmatpush2.msra.mxu0 0.0
    %2129 = vmatprep.mubr.f32.mxu0 0.0
    %2130 = vmatmul.mubr.f32.gmra.mxu0 %v2063
    %v2131 = vpop.f32.mrf.mxu0
    %v2132 = vadd.f32 %v74, %v2131
    %v2133 = vpop.f32.mrf.mxu0
    %2134 = vdwg.mxu0
    %v2135 = vsel %vm587, %v2132, -inf
    %2136 = vmax.xlane.f32.xlu0 %v2135
    %v2137 = vpop.xlane.xlu0 %2136
    %v2138 = vsub.f32 %v2132, %v2137
    %v2139 = vmul.f32 %v2138, 1.442695
    %v2140 = vpow.pop %v2139
    %v2141 = vsel %vm587, %v2140, 0.0
    %2142 = vadd.xlane.f32.xlu0 %v2141
    %v2143 = vpop.xlane.xlu0 %2142
    %v2144 = vlog2.pop %v2143
    %v2145 = vmul.f32 %v2144, 0.6931472
    %v2146 = vsub.f32 %v2138, %v2145
    %2147 = vst.msk [vmem:[#allocation9 + $0x3] sm:$0x1] %vm587, %v2146
    %2148 = vrot.lane.b32.xlu0 %v2059, 32
    %v2149 = vpop.permute.xlu0 %2148
    %2151 = vst.msk [vmem:[#allocation9 + $0x3] sm:$0x1] %vm604, %v2149
    %2152 = vrot.lane.b32.xlu0 %v1803, 96
    %v2153 = vpop.permute.xlu0 %2152
    %2155 = vst.msk [vmem:[#allocation9 + $0x3] sm:$0x1] %vm609, %v2153
    %s2156 = sld [smem:[#allocation3 + $0x4]]
    %p2157 = scmp.gt.s32.totalorder %s2156, 0
    %s2158 = scalar_select %p2157, %s2156, 0
    %p2159 = scmp.lt.s32.totalorder %s2158, 63
    %s2160 = scalar_select %p2159, %s2158, 63
    %s2161 = smul.u32 %s2160, 8
    %s2162 = scalar_lea.vmem [#allocation7], %s2161
    %v2163 = vld [vmem:[%s2162] sm:$0x1]
    %v2165 = vsel %vm84, %v2163, 0
    %2167 = vmatprep.subr.mxu0 0.0
    %2168 = vmatpush1.msra.mxu0 0.0
    %2169 = vmatprep.subr.mxu0 0.0
    %2170 = vmatpush1.msra.mxu0 0.0
    %2171 = vmatprep.subr.mxu0 0.0
    %2172 = vmatpush1.msra.mxu0 0.0
    %2173 = vmatprep.subr.mxu0 0.0
    %2174 = vmatpush1.msra.mxu0 0.0
    %2175 = vmatprep.subr.mxu0 0.0
    %2176 = vmatpush1.msra.mxu0 0.0
    %2177 = vmatprep.subr.mxu0 0.0
    %2178 = vmatpush1.msra.mxu0 0.0
    %2179 = vmatprep.subr.mxu0 0.0
    %2180 = vmatpush1.msra.mxu0 0.0
    %2181 = vmatprep.subr.mxu0 0.0
    %2182 = vmatpush1.msra.mxu0 0.0
    %2183 = vmatprep.subr.mxu0 0.0
    %2184 = vmatpush1.msra.mxu0 0.0
    %2185 = vmatprep.subr.mxu0 0.0
    %2186 = vmatpush1.msra.mxu0 0.0
    %2187 = vmatprep.subr.mxu0 0.0
    %2188 = vmatpush1.msra.mxu0 0.0
    %2189 = vmatprep.subr.mxu0 0.0
    %2190 = vmatpush1.msra.mxu0 0.0
    %2191 = vmatprep.subr.mxu0 0.0
    %2192 = vmatpush1.msra.mxu0 %v58
    %2193 = vmatprep.subr.mxu0 0.0
    %2194 = vmatpush1.msra.mxu0 %v57
    %2195 = vmatprep.subr.mxu0 0.0
    %2196 = vmatpush1.msra.mxu0 %v56
    %2197 = vmatprep.subr.mxu0 0.0
    %2198 = vmatpush1.msra.mxu0 %v55
    %2199 = vmatprep.subr.mxu0 0.0
    %2200 = vmatpush2.msra.mxu0 0.0
    %2201 = vmatprep.subr.mxu0 0.0
    %2202 = vmatpush2.msra.mxu0 0.0
    %2203 = vmatprep.subr.mxu0 0.0
    %2204 = vmatpush2.msra.mxu0 0.0
    %2205 = vmatprep.subr.mxu0 0.0
    %2206 = vmatpush2.msra.mxu0 0.0
    %2207 = vmatprep.subr.mxu0 0.0
    %2208 = vmatpush2.msra.mxu0 0.0
    %2209 = vmatprep.subr.mxu0 0.0
    %2210 = vmatpush2.msra.mxu0 0.0
    %2211 = vmatprep.subr.mxu0 0.0
    %2212 = vmatpush2.msra.mxu0 0.0
    %2213 = vmatprep.subr.mxu0 0.0
    %2214 = vmatpush2.msra.mxu0 0.0
    %2215 = vmatprep.subr.mxu0 0.0
    %2216 = vmatpush2.msra.mxu0 0.0
    %2217 = vmatprep.subr.mxu0 0.0
    %2218 = vmatpush2.msra.mxu0 0.0
    %2219 = vmatprep.subr.mxu0 0.0
    %2220 = vmatpush2.msra.mxu0 0.0
    %2221 = vmatprep.subr.mxu0 0.0
    %2222 = vmatpush2.msra.mxu0 0.0
    %2223 = vmatprep.subr.mxu0 0.0
    %2224 = vmatpush2.msra.mxu0 0.0
    %2225 = vmatprep.subr.mxu0 0.0
    %2226 = vmatpush2.msra.mxu0 0.0
    %2227 = vmatprep.subr.mxu0 0.0
    %2228 = vmatpush2.msra.mxu0 0.0
    %2229 = vmatprep.subr.mxu0 0.0
    %2230 = vmatpush2.msra.mxu0 0.0
    %2231 = vmatprep.mubr.f32.mxu0 0.0
    %2232 = vmatmul.mubr.f32.gmra.mxu0 %v2165
    %v2233 = vpop.f32.mrf.mxu0
    %v2234 = vadd.f32 %v72, %v2233
    %v2235 = vpop.f32.mrf.mxu0
    %2236 = vdwg.mxu0
    %2237 = vmatprep.subr.mxu0 0.0
    %2238 = vmatpush1.msra.mxu0 0.0
    %2239 = vmatprep.subr.mxu0 0.0
    %2240 = vmatpush1.msra.mxu0 0.0
    %2241 = vmatprep.subr.mxu0 0.0
    %2242 = vmatpush1.msra.mxu0 0.0
    %2243 = vmatprep.subr.mxu0 0.0
    %2244 = vmatpush1.msra.mxu0 0.0
    %2245 = vmatprep.subr.mxu0 0.0
    %2246 = vmatpush1.msra.mxu0 0.0
    %2247 = vmatprep.subr.mxu0 0.0
    %2248 = vmatpush1.msra.mxu0 0.0
    %2249 = vmatprep.subr.mxu0 0.0
    %2250 = vmatpush1.msra.mxu0 0.0
    %2251 = vmatprep.subr.mxu0 0.0
    %2252 = vmatpush1.msra.mxu0 0.0
    %2253 = vmatprep.subr.mxu0 0.0
    %2254 = vmatpush1.msra.mxu0 0.0
    %2255 = vmatprep.subr.mxu0 0.0
    %2256 = vmatpush1.msra.mxu0 0.0
    %2257 = vmatprep.subr.mxu0 0.0
    %2258 = vmatpush1.msra.mxu0 0.0
    %2259 = vmatprep.subr.mxu0 0.0
    %2260 = vmatpush1.msra.mxu0 0.0
    %2261 = vmatprep.subr.mxu0 0.0
    %2262 = vmatpush1.msra.mxu0 %v54
    %2263 = vmatprep.subr.mxu0 0.0
    %2264 = vmatpush1.msra.mxu0 %v53
    %2265 = vmatprep.subr.mxu0 0.0
    %2266 = vmatpush1.msra.mxu0 %v52
    %2267 = vmatprep.subr.mxu0 0.0
    %2268 = vmatpush1.msra.mxu0 %v51
    %2269 = vmatprep.subr.mxu0 0.0
    %2270 = vmatpush2.msra.mxu0 0.0
    %2271 = vmatprep.subr.mxu0 0.0
    %2272 = vmatpush2.msra.mxu0 0.0
    %2273 = vmatprep.subr.mxu0 0.0
    %2274 = vmatpush2.msra.mxu0 0.0
    %2275 = vmatprep.subr.mxu0 0.0
    %2276 = vmatpush2.msra.mxu0 0.0
    %2277 = vmatprep.subr.mxu0 0.0
    %2278 = vmatpush2.msra.mxu0 0.0
    %2279 = vmatprep.subr.mxu0 0.0
    %2280 = vmatpush2.msra.mxu0 0.0
    %2281 = vmatprep.subr.mxu0 0.0
    %2282 = vmatpush2.msra.mxu0 0.0
    %2283 = vmatprep.subr.mxu0 0.0
    %2284 = vmatpush2.msra.mxu0 0.0
    %2285 = vmatprep.subr.mxu0 0.0
    %2286 = vmatpush2.msra.mxu0 0.0
    %2287 = vmatprep.subr.mxu0 0.0
    %2288 = vmatpush2.msra.mxu0 0.0
    %2289 = vmatprep.subr.mxu0 0.0
    %2290 = vmatpush2.msra.mxu0 0.0
    %2291 = vmatprep.subr.mxu0 0.0
    %2292 = vmatpush2.msra.mxu0 0.0
    %2293 = vmatprep.subr.mxu0 0.0
    %2294 = vmatpush2.msra.mxu0 0.0
    %2295 = vmatprep.subr.mxu0 0.0
    %2296 = vmatpush2.msra.mxu0 0.0
    %2297 = vmatprep.subr.mxu0 0.0
    %2298 = vmatpush2.msra.mxu0 0.0
    %2299 = vmatprep.subr.mxu0 0.0
    %2300 = vmatpush2.msra.mxu0 0.0
    %2301 = vmatprep.mubr.f32.mxu0 0.0
    %2302 = vmatmul.mubr.f32.gmra.mxu0 %v2063
    %v2303 = vpop.f32.mrf.mxu0
    %v2304 = vadd.f32 %v71, %v2303
    %v2305 = vpop.f32.mrf.mxu0
    %2306 = vdwg.mxu0
    %v2307 = vadd.f32 %v2234, %v2304
    %v2308 = vsel %vm232, %v2307, -inf
    %2309 = vmax.xlane.f32.xlu0 %v2308
    %v2310 = vpop.xlane.xlu0 %2309
    %v2311 = vsub.f32 %v2307, %v2310
    %v2312 = vmul.f32 %v2311, 1.442695
    %v2313 = vpow.pop %v2312
    %v2314 = vsel %vm232, %v2313, 0.0
    %2315 = vadd.xlane.f32.xlu0 %v2314
    %v2316 = vpop.xlane.xlu0 %2315
    %v2317 = vrcp.pop %v2316
    %v2318 = vmul.f32 %v2313, %v2317
    %v2320 = vsel %vm244, %v2318, 0
    %2322 = vmatprep.subr.mxu0 0.0
    %2323 = vmatpush1.msra.mxu0 0.0
    %2324 = vmatprep.subr.mxu0 0.0
    %2325 = vmatpush1.msra.mxu0 0.0
    %2326 = vmatprep.subr.mxu0 0.0
    %2327 = vmatpush1.msra.mxu0 0.0
    %2328 = vmatprep.subr.mxu0 0.0
    %2329 = vmatpush1.msra.mxu0 0.0
    %2330 = vmatprep.subr.mxu0 0.0
    %2331 = vmatpush1.msra.mxu0 0.0
    %2332 = vmatprep.subr.mxu0 0.0
    %2333 = vmatpush1.msra.mxu0 0.0
    %2334 = vmatprep.subr.mxu0 0.0
    %2335 = vmatpush1.msra.mxu0 0.0
    %2336 = vmatprep.subr.mxu0 0.0
    %2337 = vmatpush1.msra.mxu0 0.0
    %2338 = vmatprep.subr.mxu0 0.0
    %2339 = vmatpush1.msra.mxu0 0.0
    %2340 = vmatprep.subr.mxu0 0.0
    %2341 = vmatpush1.msra.mxu0 0.0
    %2342 = vmatprep.subr.mxu0 0.0
    %2343 = vmatpush1.msra.mxu0 0.0
    %2344 = vmatprep.subr.mxu0 0.0
    %2345 = vmatpush1.msra.mxu0 0.0
    %2346 = vmatprep.subr.mxu0 0.0
    %2347 = vmatpush1.msra.mxu0 0.0
    %2348 = vmatprep.subr.mxu0 0.0
    %2349 = vmatpush1.msra.mxu0 0.0
    %2350 = vmatprep.subr.mxu0 0.0
    %2351 = vmatpush1.msra.mxu0 %v250
    %2352 = vmatprep.subr.mxu0 0.0
    %2353 = vmatpush1.msra.mxu0 %v49
    %2354 = vmatprep.subr.mxu0 0.0
    %2355 = vmatpush2.msra.mxu0 0.0
    %2356 = vmatprep.subr.mxu0 0.0
    %2357 = vmatpush2.msra.mxu0 0.0
    %2358 = vmatprep.subr.mxu0 0.0
    %2359 = vmatpush2.msra.mxu0 0.0
    %2360 = vmatprep.subr.mxu0 0.0
    %2361 = vmatpush2.msra.mxu0 0.0
    %2362 = vmatprep.subr.mxu0 0.0
    %2363 = vmatpush2.msra.mxu0 0.0
    %2364 = vmatprep.subr.mxu0 0.0
    %2365 = vmatpush2.msra.mxu0 0.0
    %2366 = vmatprep.subr.mxu0 0.0
    %2367 = vmatpush2.msra.mxu0 0.0
    %2368 = vmatprep.subr.mxu0 0.0
    %2369 = vmatpush2.msra.mxu0 0.0
    %2370 = vmatprep.subr.mxu0 0.0
    %2371 = vmatpush2.msra.mxu0 0.0
    %2372 = vmatprep.subr.mxu0 0.0
    %2373 = vmatpush2.msra.mxu0 0.0
    %2374 = vmatprep.subr.mxu0 0.0
    %2375 = vmatpush2.msra.mxu0 0.0
    %2376 = vmatprep.subr.mxu0 0.0
    %2377 = vmatpush2.msra.mxu0 0.0
    %2378 = vmatprep.subr.mxu0 0.0
    %2379 = vmatpush2.msra.mxu0 0.0
    %2380 = vmatprep.subr.mxu0 0.0
    %2381 = vmatpush2.msra.mxu0 0.0
    %2382 = vmatprep.subr.mxu0 0.0
    %2383 = vmatpush2.msra.mxu0 0.0
    %2384 = vmatprep.subr.mxu0 0.0
    %2385 = vmatpush2.msra.mxu0 0.0
    %2386 = vmatprep.mubr.f32.mxu0 0.0
    %2387 = vmatmul.mubr.f32.gmra.mxu0 %v2320
    %v2388 = vpop.f32.mrf.mxu0
    %v2389 = vadd.f32 0.0, %v2388
    %v2390 = vpop.f32.mrf.mxu0
    %2391 = vdwg.mxu0
    %v2393 = vsel %vm84, %v2389, 0
    %2395 = vmatprep.subr.mxu0 0.0
    %2396 = vmatpush1.msra.mxu0 0.0
    %2397 = vmatprep.subr.mxu0 0.0
    %2398 = vmatpush1.msra.mxu0 0.0
    %2399 = vmatprep.subr.mxu0 0.0
    %2400 = vmatpush1.msra.mxu0 0.0
    %2401 = vmatprep.subr.mxu0 0.0
    %2402 = vmatpush1.msra.mxu0 0.0
    %2403 = vmatprep.subr.mxu0 0.0
    %2404 = vmatpush1.msra.mxu0 0.0
    %2405 = vmatprep.subr.mxu0 0.0
    %2406 = vmatpush1.msra.mxu0 0.0
    %2407 = vmatprep.subr.mxu0 0.0
    %2408 = vmatpush1.msra.mxu0 0.0
    %2409 = vmatprep.subr.mxu0 0.0
    %2410 = vmatpush1.msra.mxu0 0.0
    %2411 = vmatprep.subr.mxu0 0.0
    %2412 = vmatpush1.msra.mxu0 0.0
    %2413 = vmatprep.subr.mxu0 0.0
    %2414 = vmatpush1.msra.mxu0 0.0
    %2415 = vmatprep.subr.mxu0 0.0
    %2416 = vmatpush1.msra.mxu0 0.0
    %2417 = vmatprep.subr.mxu0 0.0
    %2418 = vmatpush1.msra.mxu0 0.0
    %2419 = vmatprep.subr.mxu0 0.0
    %2420 = vmatpush1.msra.mxu0 %v66
    %2421 = vmatprep.subr.mxu0 0.0
    %2422 = vmatpush1.msra.mxu0 %v65
    %2423 = vmatprep.subr.mxu0 0.0
    %2424 = vmatpush1.msra.mxu0 %v64
    %2425 = vmatprep.subr.mxu0 0.0
    %2426 = vmatpush1.msra.mxu0 %v63
    %2427 = vmatprep.subr.mxu0 0.0
    %2428 = vmatpush2.msra.mxu0 0.0
    %2429 = vmatprep.subr.mxu0 0.0
    %2430 = vmatpush2.msra.mxu0 0.0
    %2431 = vmatprep.subr.mxu0 0.0
    %2432 = vmatpush2.msra.mxu0 0.0
    %2433 = vmatprep.subr.mxu0 0.0
    %2434 = vmatpush2.msra.mxu0 0.0
    %2435 = vmatprep.subr.mxu0 0.0
    %2436 = vmatpush2.msra.mxu0 0.0
    %2437 = vmatprep.subr.mxu0 0.0
    %2438 = vmatpush2.msra.mxu0 0.0
    %2439 = vmatprep.subr.mxu0 0.0
    %2440 = vmatpush2.msra.mxu0 0.0
    %2441 = vmatprep.subr.mxu0 0.0
    %2442 = vmatpush2.msra.mxu0 0.0
    %2443 = vmatprep.subr.mxu0 0.0
    %2444 = vmatpush2.msra.mxu0 0.0
    %2445 = vmatprep.subr.mxu0 0.0
    %2446 = vmatpush2.msra.mxu0 0.0
    %2447 = vmatprep.subr.mxu0 0.0
    %2448 = vmatpush2.msra.mxu0 0.0
    %2449 = vmatprep.subr.mxu0 0.0
    %2450 = vmatpush2.msra.mxu0 0.0
    %2451 = vmatprep.subr.mxu0 0.0
    %2452 = vmatpush2.msra.mxu0 0.0
    %2453 = vmatprep.subr.mxu0 0.0
    %2454 = vmatpush2.msra.mxu0 0.0
    %2455 = vmatprep.subr.mxu0 0.0
    %2456 = vmatpush2.msra.mxu0 0.0
    %2457 = vmatprep.subr.mxu0 0.0
    %2458 = vmatpush2.msra.mxu0 0.0
    %2459 = vmatprep.mubr.f32.mxu0 0.0
    %2460 = vmatmul.mubr.f32.gmra.mxu0 %v2393
    %v2461 = vpop.f32.mrf.mxu0
    %v2462 = vadd.f32 0.0, %v2461
    %v2463 = vpop.f32.mrf.mxu0
    %2464 = vdwg.mxu0
    %2466 = vrot.lane.b32.xlu0 %v2462, 32
    %v2467 = vpop.permute.xlu0 %2466
    %v2469 = vadd.f32 %v2234, %v2467
    %v2470 = vmax.f32 %v2469, 0.0
    %2472 = vrot.lane.b32.xlu0 %v2470, 96
    %v2473 = vpop.permute.xlu0 %2472
    %v2474 = vsel %vm84, %v2473, 0
    %2476 = vmatprep.subr.mxu0 0.0
    %2477 = vmatpush1.msra.mxu0 0.0
    %2478 = vmatprep.subr.mxu0 0.0
    %2479 = vmatpush1.msra.mxu0 0.0
    %2480 = vmatprep.subr.mxu0 0.0
    %2481 = vmatpush1.msra.mxu0 0.0
    %2482 = vmatprep.subr.mxu0 0.0
    %2483 = vmatpush1.msra.mxu0 0.0
    %2484 = vmatprep.subr.mxu0 0.0
    %2485 = vmatpush1.msra.mxu0 0.0
    %2486 = vmatprep.subr.mxu0 0.0
    %2487 = vmatpush1.msra.mxu0 0.0
    %2488 = vmatprep.subr.mxu0 0.0
    %2489 = vmatpush1.msra.mxu0 0.0
    %2490 = vmatprep.subr.mxu0 0.0
    %2491 = vmatpush1.msra.mxu0 0.0
    %2492 = vmatprep.subr.mxu0 0.0
    %2493 = vmatpush1.msra.mxu0 0.0
    %2494 = vmatprep.subr.mxu0 0.0
    %2495 = vmatpush1.msra.mxu0 0.0
    %2496 = vmatprep.subr.mxu0 0.0
    %2497 = vmatpush1.msra.mxu0 0.0
    %2498 = vmatprep.subr.mxu0 0.0
    %2499 = vmatpush1.msra.mxu0 0.0
    %2500 = vmatprep.subr.mxu0 0.0
    %2501 = vmatpush1.msra.mxu0 %v62
    %2502 = vmatprep.subr.mxu0 0.0
    %2503 = vmatpush1.msra.mxu0 %v61
    %2504 = vmatprep.subr.mxu0 0.0
    %2505 = vmatpush1.msra.mxu0 %v60
    %2506 = vmatprep.subr.mxu0 0.0
    %2507 = vmatpush1.msra.mxu0 %v59
    %2508 = vmatprep.subr.mxu0 0.0
    %2509 = vmatpush2.msra.mxu0 0.0
    %2510 = vmatprep.subr.mxu0 0.0
    %2511 = vmatpush2.msra.mxu0 0.0
    %2512 = vmatprep.subr.mxu0 0.0
    %2513 = vmatpush2.msra.mxu0 0.0
    %2514 = vmatprep.subr.mxu0 0.0
    %2515 = vmatpush2.msra.mxu0 0.0
    %2516 = vmatprep.subr.mxu0 0.0
    %2517 = vmatpush2.msra.mxu0 0.0
    %2518 = vmatprep.subr.mxu0 0.0
    %2519 = vmatpush2.msra.mxu0 0.0
    %2520 = vmatprep.subr.mxu0 0.0
    %2521 = vmatpush2.msra.mxu0 0.0
    %2522 = vmatprep.subr.mxu0 0.0
    %2523 = vmatpush2.msra.mxu0 0.0
    %2524 = vmatprep.subr.mxu0 0.0
    %2525 = vmatpush2.msra.mxu0 0.0
    %2526 = vmatprep.subr.mxu0 0.0
    %2527 = vmatpush2.msra.mxu0 0.0
    %2528 = vmatprep.subr.mxu0 0.0
    %2529 = vmatpush2.msra.mxu0 0.0
    %2530 = vmatprep.subr.mxu0 0.0
    %2531 = vmatpush2.msra.mxu0 0.0
    %2532 = vmatprep.subr.mxu0 0.0
    %2533 = vmatpush2.msra.mxu0 0.0
    %2534 = vmatprep.subr.mxu0 0.0
    %2535 = vmatpush2.msra.mxu0 0.0
    %2536 = vmatprep.subr.mxu0 0.0
    %2537 = vmatpush2.msra.mxu0 0.0
    %2538 = vmatprep.subr.mxu0 0.0
    %2539 = vmatpush2.msra.mxu0 0.0
    %2540 = vmatprep.mubr.f32.mxu0 0.0
    %2541 = vmatmul.mubr.f32.gmra.mxu0 %v2474
    %v2542 = vpop.f32.mrf.mxu0
    %v2543 = vadd.f32 %v73, %v2542
    %v2544 = vpop.f32.mrf.mxu0
    %2545 = vdwg.mxu0
    %2547 = vrot.lane.b32.xlu0 %v2304, 96
    %v2548 = vpop.permute.xlu0 %2547
    %v2550 = vadd.f32 %v2543, %v2548
    %v2551 = vxor.u32 %v2550, 2147483648
    %v2552 = vmul.f32 %v2551, 1.442695
    %v2553 = vpow.pop %v2552
    %v2554 = vadd.f32 %v2553, 1.0
    %v2555 = vrcp.pop %v2554
    %v2556 = vmul.f32 1.0, %v2555
    %2557 = vrot.lane.b32.xlu0 %v2304, 32
    %v2558 = vpop.permute.xlu0 %2557
    %v2560 = vmul.f32 %v2556, %v2558
    %2562 = vrot.lane.b32.xlu0 %v2560, 64
    %v2563 = vpop.permute.xlu0 %2562
    %v2565 = vadd.f32 %v2543, %v2563
    %v2566 = vtanh.pop %v2565
    %v2567 = vsub.f32 1.0, %v2556
    %2569 = vrot.lane.b32.xlu0 %v2566, 96
    %v2570 = vpop.permute.xlu0 %2569
    %v2572 = vmul.f32 %v2567, %v2570
    %v2573 = vmul.f32 %v2556, %v2059
    %v2574 = vadd.f32 %v2572, %v2573
    %2576 = vrot.lane.b32.xlu0 %v2574, 96
    %v2577 = vpop.permute.xlu0 %2576
    %v2578 = vsel %vm84, %v2577, 0
    %2580 = vmatprep.subr.mxu0 0.0
    %2581 = vmatpush1.msra.mxu0 0.0
    %2582 = vmatprep.subr.mxu0 0.0
    %2583 = vmatpush1.msra.mxu0 0.0
    %2584 = vmatprep.subr.mxu0 0.0
    %2585 = vmatpush1.msra.mxu0 0.0
    %2586 = vmatprep.subr.mxu0 0.0
    %2587 = vmatpush1.msra.mxu0 0.0
    %2588 = vmatprep.subr.mxu0 0.0
    %2589 = vmatpush1.msra.mxu0 0.0
    %2590 = vmatprep.subr.mxu0 0.0
    %2591 = vmatpush1.msra.mxu0 0.0
    %2592 = vmatprep.subr.mxu0 0.0
    %2593 = vmatpush1.msra.mxu0 0.0
    %2594 = vmatprep.subr.mxu0 0.0
    %2595 = vmatpush1.msra.mxu0 0.0
    %2596 = vmatprep.subr.mxu0 0.0
    %2597 = vmatpush1.msra.mxu0 0.0
    %2598 = vmatprep.subr.mxu0 0.0
    %2599 = vmatpush1.msra.mxu0 0.0
    %2600 = vmatprep.subr.mxu0 0.0
    %2601 = vmatpush1.msra.mxu0 0.0
    %2602 = vmatprep.subr.mxu0 0.0
    %2603 = vmatpush1.msra.mxu0 0.0
    %2604 = vmatprep.subr.mxu0 0.0
    %2605 = vmatpush1.msra.mxu0 %v70
    %2606 = vmatprep.subr.mxu0 0.0
    %2607 = vmatpush1.msra.mxu0 %v69
    %2608 = vmatprep.subr.mxu0 0.0
    %2609 = vmatpush1.msra.mxu0 %v68
    %2610 = vmatprep.subr.mxu0 0.0
    %2611 = vmatpush1.msra.mxu0 %v67
    %2612 = vmatprep.subr.mxu0 0.0
    %2613 = vmatpush2.msra.mxu0 0.0
    %2614 = vmatprep.subr.mxu0 0.0
    %2615 = vmatpush2.msra.mxu0 0.0
    %2616 = vmatprep.subr.mxu0 0.0
    %2617 = vmatpush2.msra.mxu0 0.0
    %2618 = vmatprep.subr.mxu0 0.0
    %2619 = vmatpush2.msra.mxu0 0.0
    %2620 = vmatprep.subr.mxu0 0.0
    %2621 = vmatpush2.msra.mxu0 0.0
    %2622 = vmatprep.subr.mxu0 0.0
    %2623 = vmatpush2.msra.mxu0 0.0
    %2624 = vmatprep.subr.mxu0 0.0
    %2625 = vmatpush2.msra.mxu0 0.0
    %2626 = vmatprep.subr.mxu0 0.0
    %2627 = vmatpush2.msra.mxu0 0.0
    %2628 = vmatprep.subr.mxu0 0.0
    %2629 = vmatpush2.msra.mxu0 0.0
    %2630 = vmatprep.subr.mxu0 0.0
    %2631 = vmatpush2.msra.mxu0 0.0
    %2632 = vmatprep.subr.mxu0 0.0
    %2633 = vmatpush2.msra.mxu0 0.0
    %2634 = vmatprep.subr.mxu0 0.0
    %2635 = vmatpush2.msra.mxu0 0.0
    %2636 = vmatprep.subr.mxu0 0.0
    %2637 = vmatpush2.msra.mxu0 0.0
    %2638 = vmatprep.subr.mxu0 0.0
    %2639 = vmatpush2.msra.mxu0 0.0
    %2640 = vmatprep.subr.mxu0 0.0
    %2641 = vmatpush2.msra.mxu0 0.0
    %2642 = vmatprep.subr.mxu0 0.0
    %2643 = vmatpush2.msra.mxu0 0.0
    %2644 = vmatprep.mubr.f32.mxu0 0.0
    %2645 = vmatmul.mubr.f32.gmra.mxu0 %v2578
    %v2646 = vpop.f32.mrf.mxu0
    %v2647 = vadd.f32 %v74, %v2646
    %v2648 = vpop.f32.mrf.mxu0
    %2649 = vdwg.mxu0
    %v2650 = vsel %vm587, %v2647, -inf
    %2651 = vmax.xlane.f32.xlu0 %v2650
    %v2652 = vpop.xlane.xlu0 %2651
    %v2653 = vsub.f32 %v2647, %v2652
    %v2654 = vmul.f32 %v2653, 1.442695
    %v2655 = vpow.pop %v2654
    %v2656 = vsel %vm587, %v2655, 0.0
    %2657 = vadd.xlane.f32.xlu0 %v2656
    %v2658 = vpop.xlane.xlu0 %2657
    %v2659 = vlog2.pop %v2658
    %v2660 = vmul.f32 %v2659, 0.6931472
    %v2661 = vsub.f32 %v2653, %v2660
    %2662 = vst.msk [vmem:[#allocation9 + $0x4] sm:$0x1] %vm587, %v2661
    %2663 = vrot.lane.b32.xlu0 %v2574, 32
    %v2664 = vpop.permute.xlu0 %2663
    %2666 = vst.msk [vmem:[#allocation9 + $0x4] sm:$0x1] %vm604, %v2664
    %2667 = vrot.lane.b32.xlu0 %v2318, 96
    %v2668 = vpop.permute.xlu0 %2667
    %2670 = vst.msk [vmem:[#allocation9 + $0x4] sm:$0x1] %vm609, %v2668
    %s2671 = sld [smem:[#allocation3 + $0x5]]
    %p2672 = scmp.gt.s32.totalorder %s2671, 0
    %s2673 = scalar_select %p2672, %s2671, 0
    %p2674 = scmp.lt.s32.totalorder %s2673, 63
    %s2675 = scalar_select %p2674, %s2673, 63
    %s2676 = smul.u32 %s2675, 8
    %s2677 = scalar_lea.vmem [#allocation7], %s2676
    %v2678 = vld [vmem:[%s2677] sm:$0x1]
    %v2680 = vsel %vm84, %v2678, 0
    %2682 = vmatprep.subr.mxu0 0.0
    %2683 = vmatpush1.msra.mxu0 0.0
    %2684 = vmatprep.subr.mxu0 0.0
    %2685 = vmatpush1.msra.mxu0 0.0
    %2686 = vmatprep.subr.mxu0 0.0
    %2687 = vmatpush1.msra.mxu0 0.0
    %2688 = vmatprep.subr.mxu0 0.0
    %2689 = vmatpush1.msra.mxu0 0.0
    %2690 = vmatprep.subr.mxu0 0.0
    %2691 = vmatpush1.msra.mxu0 0.0
    %2692 = vmatprep.subr.mxu0 0.0
    %2693 = vmatpush1.msra.mxu0 0.0
    %2694 = vmatprep.subr.mxu0 0.0
    %2695 = vmatpush1.msra.mxu0 0.0
    %2696 = vmatprep.subr.mxu0 0.0
    %2697 = vmatpush1.msra.mxu0 0.0
    %2698 = vmatprep.subr.mxu0 0.0
    %2699 = vmatpush1.msra.mxu0 0.0
    %2700 = vmatprep.subr.mxu0 0.0
    %2701 = vmatpush1.msra.mxu0 0.0
    %2702 = vmatprep.subr.mxu0 0.0
    %2703 = vmatpush1.msra.mxu0 0.0
    %2704 = vmatprep.subr.mxu0 0.0
    %2705 = vmatpush1.msra.mxu0 0.0
    %2706 = vmatprep.subr.mxu0 0.0
    %2707 = vmatpush1.msra.mxu0 %v58
    %2708 = vmatprep.subr.mxu0 0.0
    %2709 = vmatpush1.msra.mxu0 %v57
    %2710 = vmatprep.subr.mxu0 0.0
    %2711 = vmatpush1.msra.mxu0 %v56
    %2712 = vmatprep.subr.mxu0 0.0
    %2713 = vmatpush1.msra.mxu0 %v55
    %2714 = vmatprep.subr.mxu0 0.0
    %2715 = vmatpush2.msra.mxu0 0.0
    %2716 = vmatprep.subr.mxu0 0.0
    %2717 = vmatpush2.msra.mxu0 0.0
    %2718 = vmatprep.subr.mxu0 0.0
    %2719 = vmatpush2.msra.mxu0 0.0
    %2720 = vmatprep.subr.mxu0 0.0
    %2721 = vmatpush2.msra.mxu0 0.0
    %2722 = vmatprep.subr.mxu0 0.0
    %2723 = vmatpush2.msra.mxu0 0.0
    %2724 = vmatprep.subr.mxu0 0.0
    %2725 = vmatpush2.msra.mxu0 0.0
    %2726 = vmatprep.subr.mxu0 0.0
    %2727 = vmatpush2.msra.mxu0 0.0
    %2728 = vmatprep.subr.mxu0 0.0
    %2729 = vmatpush2.msra.mxu0 0.0
    %2730 = vmatprep.subr.mxu0 0.0
    %2731 = vmatpush2.msra.mxu0 0.0
    %2732 = vmatprep.subr.mxu0 0.0
    %2733 = vmatpush2.msra.mxu0 0.0
    %2734 = vmatprep.subr.mxu0 0.0
    %2735 = vmatpush2.msra.mxu0 0.0
    %2736 = vmatprep.subr.mxu0 0.0
    %2737 = vmatpush2.msra.mxu0 0.0
    %2738 = vmatprep.subr.mxu0 0.0
    %2739 = vmatpush2.msra.mxu0 0.0
    %2740 = vmatprep.subr.mxu0 0.0
    %2741 = vmatpush2.msra.mxu0 0.0
    %2742 = vmatprep.subr.mxu0 0.0
    %2743 = vmatpush2.msra.mxu0 0.0
    %2744 = vmatprep.subr.mxu0 0.0
    %2745 = vmatpush2.msra.mxu0 0.0
    %2746 = vmatprep.mubr.f32.mxu0 0.0
    %2747 = vmatmul.mubr.f32.gmra.mxu0 %v2680
    %v2748 = vpop.f32.mrf.mxu0
    %v2749 = vadd.f32 %v72, %v2748
    %v2750 = vpop.f32.mrf.mxu0
    %2751 = vdwg.mxu0
    %2752 = vmatprep.subr.mxu0 0.0
    %2753 = vmatpush1.msra.mxu0 0.0
    %2754 = vmatprep.subr.mxu0 0.0
    %2755 = vmatpush1.msra.mxu0 0.0
    %2756 = vmatprep.subr.mxu0 0.0
    %2757 = vmatpush1.msra.mxu0 0.0
    %2758 = vmatprep.subr.mxu0 0.0
    %2759 = vmatpush1.msra.mxu0 0.0
    %2760 = vmatprep.subr.mxu0 0.0
    %2761 = vmatpush1.msra.mxu0 0.0
    %2762 = vmatprep.subr.mxu0 0.0
    %2763 = vmatpush1.msra.mxu0 0.0
    %2764 = vmatprep.subr.mxu0 0.0
    %2765 = vmatpush1.msra.mxu0 0.0
    %2766 = vmatprep.subr.mxu0 0.0
    %2767 = vmatpush1.msra.mxu0 0.0
    %2768 = vmatprep.subr.mxu0 0.0
    %2769 = vmatpush1.msra.mxu0 0.0
    %2770 = vmatprep.subr.mxu0 0.0
    %2771 = vmatpush1.msra.mxu0 0.0
    %2772 = vmatprep.subr.mxu0 0.0
    %2773 = vmatpush1.msra.mxu0 0.0
    %2774 = vmatprep.subr.mxu0 0.0
    %2775 = vmatpush1.msra.mxu0 0.0
    %2776 = vmatprep.subr.mxu0 0.0
    %2777 = vmatpush1.msra.mxu0 %v54
    %2778 = vmatprep.subr.mxu0 0.0
    %2779 = vmatpush1.msra.mxu0 %v53
    %2780 = vmatprep.subr.mxu0 0.0
    %2781 = vmatpush1.msra.mxu0 %v52
    %2782 = vmatprep.subr.mxu0 0.0
    %2783 = vmatpush1.msra.mxu0 %v51
    %2784 = vmatprep.subr.mxu0 0.0
    %2785 = vmatpush2.msra.mxu0 0.0
    %2786 = vmatprep.subr.mxu0 0.0
    %2787 = vmatpush2.msra.mxu0 0.0
    %2788 = vmatprep.subr.mxu0 0.0
    %2789 = vmatpush2.msra.mxu0 0.0
    %2790 = vmatprep.subr.mxu0 0.0
    %2791 = vmatpush2.msra.mxu0 0.0
    %2792 = vmatprep.subr.mxu0 0.0
    %2793 = vmatpush2.msra.mxu0 0.0
    %2794 = vmatprep.subr.mxu0 0.0
    %2795 = vmatpush2.msra.mxu0 0.0
    %2796 = vmatprep.subr.mxu0 0.0
    %2797 = vmatpush2.msra.mxu0 0.0
    %2798 = vmatprep.subr.mxu0 0.0
    %2799 = vmatpush2.msra.mxu0 0.0
    %2800 = vmatprep.subr.mxu0 0.0
    %2801 = vmatpush2.msra.mxu0 0.0
    %2802 = vmatprep.subr.mxu0 0.0
    %2803 = vmatpush2.msra.mxu0 0.0
    %2804 = vmatprep.subr.mxu0 0.0
    %2805 = vmatpush2.msra.mxu0 0.0
    %2806 = vmatprep.subr.mxu0 0.0
    %2807 = vmatpush2.msra.mxu0 0.0
    %2808 = vmatprep.subr.mxu0 0.0
    %2809 = vmatpush2.msra.mxu0 0.0
    %2810 = vmatprep.subr.mxu0 0.0
    %2811 = vmatpush2.msra.mxu0 0.0
    %2812 = vmatprep.subr.mxu0 0.0
    %2813 = vmatpush2.msra.mxu0 0.0
    %2814 = vmatprep.subr.mxu0 0.0
    %2815 = vmatpush2.msra.mxu0 0.0
    %2816 = vmatprep.mubr.f32.mxu0 0.0
    %2817 = vmatmul.mubr.f32.gmra.mxu0 %v2578
    %v2818 = vpop.f32.mrf.mxu0
    %v2819 = vadd.f32 %v71, %v2818
    %v2820 = vpop.f32.mrf.mxu0
    %2821 = vdwg.mxu0
    %v2822 = vadd.f32 %v2749, %v2819
    %v2823 = vsel %vm232, %v2822, -inf
    %2824 = vmax.xlane.f32.xlu0 %v2823
    %v2825 = vpop.xlane.xlu0 %2824
    %v2826 = vsub.f32 %v2822, %v2825
    %v2827 = vmul.f32 %v2826, 1.442695
    %v2828 = vpow.pop %v2827
    %v2829 = vsel %vm232, %v2828, 0.0
    %2830 = vadd.xlane.f32.xlu0 %v2829
    %v2831 = vpop.xlane.xlu0 %2830
    %v2832 = vrcp.pop %v2831
    %v2833 = vmul.f32 %v2828, %v2832
    %v2835 = vsel %vm244, %v2833, 0
    %2837 = vmatprep.subr.mxu0 0.0
    %2838 = vmatpush1.msra.mxu0 0.0
    %2839 = vmatprep.subr.mxu0 0.0
    %2840 = vmatpush1.msra.mxu0 0.0
    %2841 = vmatprep.subr.mxu0 0.0
    %2842 = vmatpush1.msra.mxu0 0.0
    %2843 = vmatprep.subr.mxu0 0.0
    %2844 = vmatpush1.msra.mxu0 0.0
    %2845 = vmatprep.subr.mxu0 0.0
    %2846 = vmatpush1.msra.mxu0 0.0
    %2847 = vmatprep.subr.mxu0 0.0
    %2848 = vmatpush1.msra.mxu0 0.0
    %2849 = vmatprep.subr.mxu0 0.0
    %2850 = vmatpush1.msra.mxu0 0.0
    %2851 = vmatprep.subr.mxu0 0.0
    %2852 = vmatpush1.msra.mxu0 0.0
    %2853 = vmatprep.subr.mxu0 0.0
    %2854 = vmatpush1.msra.mxu0 0.0
    %2855 = vmatprep.subr.mxu0 0.0
    %2856 = vmatpush1.msra.mxu0 0.0
    %2857 = vmatprep.subr.mxu0 0.0
    %2858 = vmatpush1.msra.mxu0 0.0
    %2859 = vmatprep.subr.mxu0 0.0
    %2860 = vmatpush1.msra.mxu0 0.0
    %2861 = vmatprep.subr.mxu0 0.0
    %2862 = vmatpush1.msra.mxu0 0.0
    %2863 = vmatprep.subr.mxu0 0.0
    %2864 = vmatpush1.msra.mxu0 0.0
    %2865 = vmatprep.subr.mxu0 0.0
    %2866 = vmatpush1.msra.mxu0 %v250
    %2867 = vmatprep.subr.mxu0 0.0
    %2868 = vmatpush1.msra.mxu0 %v49
    %2869 = vmatprep.subr.mxu0 0.0
    %2870 = vmatpush2.msra.mxu0 0.0
    %2871 = vmatprep.subr.mxu0 0.0
    %2872 = vmatpush2.msra.mxu0 0.0
    %2873 = vmatprep.subr.mxu0 0.0
    %2874 = vmatpush2.msra.mxu0 0.0
    %2875 = vmatprep.subr.mxu0 0.0
    %2876 = vmatpush2.msra.mxu0 0.0
    %2877 = vmatprep.subr.mxu0 0.0
    %2878 = vmatpush2.msra.mxu0 0.0
    %2879 = vmatprep.subr.mxu0 0.0
    %2880 = vmatpush2.msra.mxu0 0.0
    %2881 = vmatprep.subr.mxu0 0.0
    %2882 = vmatpush2.msra.mxu0 0.0
    %2883 = vmatprep.subr.mxu0 0.0
    %2884 = vmatpush2.msra.mxu0 0.0
    %2885 = vmatprep.subr.mxu0 0.0
    %2886 = vmatpush2.msra.mxu0 0.0
    %2887 = vmatprep.subr.mxu0 0.0
    %2888 = vmatpush2.msra.mxu0 0.0
    %2889 = vmatprep.subr.mxu0 0.0
    %2890 = vmatpush2.msra.mxu0 0.0
    %2891 = vmatprep.subr.mxu0 0.0
    %2892 = vmatpush2.msra.mxu0 0.0
    %2893 = vmatprep.subr.mxu0 0.0
    %2894 = vmatpush2.msra.mxu0 0.0
    %2895 = vmatprep.subr.mxu0 0.0
    %2896 = vmatpush2.msra.mxu0 0.0
    %2897 = vmatprep.subr.mxu0 0.0
    %2898 = vmatpush2.msra.mxu0 0.0
    %2899 = vmatprep.subr.mxu0 0.0
    %2900 = vmatpush2.msra.mxu0 0.0
    %2901 = vmatprep.mubr.f32.mxu0 0.0
    %2902 = vmatmul.mubr.f32.gmra.mxu0 %v2835
    %v2903 = vpop.f32.mrf.mxu0
    %v2904 = vadd.f32 0.0, %v2903
    %v2905 = vpop.f32.mrf.mxu0
    %2906 = vdwg.mxu0
    %v2908 = vsel %vm84, %v2904, 0
    %2910 = vmatprep.subr.mxu0 0.0
    %2911 = vmatpush1.msra.mxu0 0.0
    %2912 = vmatprep.subr.mxu0 0.0
    %2913 = vmatpush1.msra.mxu0 0.0
    %2914 = vmatprep.subr.mxu0 0.0
    %2915 = vmatpush1.msra.mxu0 0.0
    %2916 = vmatprep.subr.mxu0 0.0
    %2917 = vmatpush1.msra.mxu0 0.0
    %2918 = vmatprep.subr.mxu0 0.0
    %2919 = vmatpush1.msra.mxu0 0.0
    %2920 = vmatprep.subr.mxu0 0.0
    %2921 = vmatpush1.msra.mxu0 0.0
    %2922 = vmatprep.subr.mxu0 0.0
    %2923 = vmatpush1.msra.mxu0 0.0
    %2924 = vmatprep.subr.mxu0 0.0
    %2925 = vmatpush1.msra.mxu0 0.0
    %2926 = vmatprep.subr.mxu0 0.0
    %2927 = vmatpush1.msra.mxu0 0.0
    %2928 = vmatprep.subr.mxu0 0.0
    %2929 = vmatpush1.msra.mxu0 0.0
    %2930 = vmatprep.subr.mxu0 0.0
    %2931 = vmatpush1.msra.mxu0 0.0
    %2932 = vmatprep.subr.mxu0 0.0
    %2933 = vmatpush1.msra.mxu0 0.0
    %2934 = vmatprep.subr.mxu0 0.0
    %2935 = vmatpush1.msra.mxu0 %v66
    %2936 = vmatprep.subr.mxu0 0.0
    %2937 = vmatpush1.msra.mxu0 %v65
    %2938 = vmatprep.subr.mxu0 0.0
    %2939 = vmatpush1.msra.mxu0 %v64
    %2940 = vmatprep.subr.mxu0 0.0
    %2941 = vmatpush1.msra.mxu0 %v63
    %2942 = vmatprep.subr.mxu0 0.0
    %2943 = vmatpush2.msra.mxu0 0.0
    %2944 = vmatprep.subr.mxu0 0.0
    %2945 = vmatpush2.msra.mxu0 0.0
    %2946 = vmatprep.subr.mxu0 0.0
    %2947 = vmatpush2.msra.mxu0 0.0
    %2948 = vmatprep.subr.mxu0 0.0
    %2949 = vmatpush2.msra.mxu0 0.0
    %2950 = vmatprep.subr.mxu0 0.0
    %2951 = vmatpush2.msra.mxu0 0.0
    %2952 = vmatprep.subr.mxu0 0.0
    %2953 = vmatpush2.msra.mxu0 0.0
    %2954 = vmatprep.subr.mxu0 0.0
    %2955 = vmatpush2.msra.mxu0 0.0
    %2956 = vmatprep.subr.mxu0 0.0
    %2957 = vmatpush2.msra.mxu0 0.0
    %2958 = vmatprep.subr.mxu0 0.0
    %2959 = vmatpush2.msra.mxu0 0.0
    %2960 = vmatprep.subr.mxu0 0.0
    %2961 = vmatpush2.msra.mxu0 0.0
    %2962 = vmatprep.subr.mxu0 0.0
    %2963 = vmatpush2.msra.mxu0 0.0
    %2964 = vmatprep.subr.mxu0 0.0
    %2965 = vmatpush2.msra.mxu0 0.0
    %2966 = vmatprep.subr.mxu0 0.0
    %2967 = vmatpush2.msra.mxu0 0.0
    %2968 = vmatprep.subr.mxu0 0.0
    %2969 = vmatpush2.msra.mxu0 0.0
    %2970 = vmatprep.subr.mxu0 0.0
    %2971 = vmatpush2.msra.mxu0 0.0
    %2972 = vmatprep.subr.mxu0 0.0
    %2973 = vmatpush2.msra.mxu0 0.0
    %2974 = vmatprep.mubr.f32.mxu0 0.0
    %2975 = vmatmul.mubr.f32.gmra.mxu0 %v2908
    %v2976 = vpop.f32.mrf.mxu0
    %v2977 = vadd.f32 0.0, %v2976
    %v2978 = vpop.f32.mrf.mxu0
    %2979 = vdwg.mxu0
    %2981 = vrot.lane.b32.xlu0 %v2977, 32
    %v2982 = vpop.permute.xlu0 %2981
    %v2984 = vadd.f32 %v2749, %v2982
    %v2985 = vmax.f32 %v2984, 0.0
    %2987 = vrot.lane.b32.xlu0 %v2985, 96
    %v2988 = vpop.permute.xlu0 %2987
    %v2989 = vsel %vm84, %v2988, 0
    %2991 = vmatprep.subr.mxu0 0.0
    %2992 = vmatpush1.msra.mxu0 0.0
    %2993 = vmatprep.subr.mxu0 0.0
    %2994 = vmatpush1.msra.mxu0 0.0
    %2995 = vmatprep.subr.mxu0 0.0
    %2996 = vmatpush1.msra.mxu0 0.0
    %2997 = vmatprep.subr.mxu0 0.0
    %2998 = vmatpush1.msra.mxu0 0.0
    %2999 = vmatprep.subr.mxu0 0.0
    %3000 = vmatpush1.msra.mxu0 0.0
    %3001 = vmatprep.subr.mxu0 0.0
    %3002 = vmatpush1.msra.mxu0 0.0
    %3003 = vmatprep.subr.mxu0 0.0
    %3004 = vmatpush1.msra.mxu0 0.0
    %3005 = vmatprep.subr.mxu0 0.0
    %3006 = vmatpush1.msra.mxu0 0.0
    %3007 = vmatprep.subr.mxu0 0.0
    %3008 = vmatpush1.msra.mxu0 0.0
    %3009 = vmatprep.subr.mxu0 0.0
    %3010 = vmatpush1.msra.mxu0 0.0
    %3011 = vmatprep.subr.mxu0 0.0
    %3012 = vmatpush1.msra.mxu0 0.0
    %3013 = vmatprep.subr.mxu0 0.0
    %3014 = vmatpush1.msra.mxu0 0.0
    %3015 = vmatprep.subr.mxu0 0.0
    %3016 = vmatpush1.msra.mxu0 %v62
    %3017 = vmatprep.subr.mxu0 0.0
    %3018 = vmatpush1.msra.mxu0 %v61
    %3019 = vmatprep.subr.mxu0 0.0
    %3020 = vmatpush1.msra.mxu0 %v60
    %3021 = vmatprep.subr.mxu0 0.0
    %3022 = vmatpush1.msra.mxu0 %v59
    %3023 = vmatprep.subr.mxu0 0.0
    %3024 = vmatpush2.msra.mxu0 0.0
    %3025 = vmatprep.subr.mxu0 0.0
    %3026 = vmatpush2.msra.mxu0 0.0
    %3027 = vmatprep.subr.mxu0 0.0
    %3028 = vmatpush2.msra.mxu0 0.0
    %3029 = vmatprep.subr.mxu0 0.0
    %3030 = vmatpush2.msra.mxu0 0.0
    %3031 = vmatprep.subr.mxu0 0.0
    %3032 = vmatpush2.msra.mxu0 0.0
    %3033 = vmatprep.subr.mxu0 0.0
    %3034 = vmatpush2.msra.mxu0 0.0
    %3035 = vmatprep.subr.mxu0 0.0
    %3036 = vmatpush2.msra.mxu0 0.0
    %3037 = vmatprep.subr.mxu0 0.0
    %3038 = vmatpush2.msra.mxu0 0.0
    %3039 = vmatprep.subr.mxu0 0.0
    %3040 = vmatpush2.msra.mxu0 0.0
    %3041 = vmatprep.subr.mxu0 0.0
    %3042 = vmatpush2.msra.mxu0 0.0
    %3043 = vmatprep.subr.mxu0 0.0
    %3044 = vmatpush2.msra.mxu0 0.0
    %3045 = vmatprep.subr.mxu0 0.0
    %3046 = vmatpush2.msra.mxu0 0.0
    %3047 = vmatprep.subr.mxu0 0.0
    %3048 = vmatpush2.msra.mxu0 0.0
    %3049 = vmatprep.subr.mxu0 0.0
    %3050 = vmatpush2.msra.mxu0 0.0
    %3051 = vmatprep.subr.mxu0 0.0
    %3052 = vmatpush2.msra.mxu0 0.0
    %3053 = vmatprep.subr.mxu0 0.0
    %3054 = vmatpush2.msra.mxu0 0.0
    %3055 = vmatprep.mubr.f32.mxu0 0.0
    %3056 = vmatmul.mubr.f32.gmra.mxu0 %v2989
    %v3057 = vpop.f32.mrf.mxu0
    %v3058 = vadd.f32 %v73, %v3057
    %v3059 = vpop.f32.mrf.mxu0
    %3060 = vdwg.mxu0
    %3062 = vrot.lane.b32.xlu0 %v2819, 96
    %v3063 = vpop.permute.xlu0 %3062
    %v3065 = vadd.f32 %v3058, %v3063
    %v3066 = vxor.u32 %v3065, 2147483648
    %v3067 = vmul.f32 %v3066, 1.442695
    %v3068 = vpow.pop %v3067
    %v3069 = vadd.f32 %v3068, 1.0
    %v3070 = vrcp.pop %v3069
    %v3071 = vmul.f32 1.0, %v3070
    %3072 = vrot.lane.b32.xlu0 %v2819, 32
    %v3073 = vpop.permute.xlu0 %3072
    %v3075 = vmul.f32 %v3071, %v3073
    %3077 = vrot.lane.b32.xlu0 %v3075, 64
    %v3078 = vpop.permute.xlu0 %3077
    %v3080 = vadd.f32 %v3058, %v3078
    %v3081 = vtanh.pop %v3080
    %v3082 = vsub.f32 1.0, %v3071
    %3084 = vrot.lane.b32.xlu0 %v3081, 96
    %v3085 = vpop.permute.xlu0 %3084
    %v3087 = vmul.f32 %v3082, %v3085
    %v3088 = vmul.f32 %v3071, %v2574
    %v3089 = vadd.f32 %v3087, %v3088
    %3091 = vrot.lane.b32.xlu0 %v3089, 96
    %v3092 = vpop.permute.xlu0 %3091
    %v3093 = vsel %vm84, %v3092, 0
    %3095 = vmatprep.subr.mxu0 0.0
    %3096 = vmatpush1.msra.mxu0 0.0
    %3097 = vmatprep.subr.mxu0 0.0
    %3098 = vmatpush1.msra.mxu0 0.0
    %3099 = vmatprep.subr.mxu0 0.0
    %3100 = vmatpush1.msra.mxu0 0.0
    %3101 = vmatprep.subr.mxu0 0.0
    %3102 = vmatpush1.msra.mxu0 0.0
    %3103 = vmatprep.subr.mxu0 0.0
    %3104 = vmatpush1.msra.mxu0 0.0
    %3105 = vmatprep.subr.mxu0 0.0
    %3106 = vmatpush1.msra.mxu0 0.0
    %3107 = vmatprep.subr.mxu0 0.0
    %3108 = vmatpush1.msra.mxu0 0.0
    %3109 = vmatprep.subr.mxu0 0.0
    %3110 = vmatpush1.msra.mxu0 0.0
    %3111 = vmatprep.subr.mxu0 0.0
    %3112 = vmatpush1.msra.mxu0 0.0
    %3113 = vmatprep.subr.mxu0 0.0
    %3114 = vmatpush1.msra.mxu0 0.0
    %3115 = vmatprep.subr.mxu0 0.0
    %3116 = vmatpush1.msra.mxu0 0.0
    %3117 = vmatprep.subr.mxu0 0.0
    %3118 = vmatpush1.msra.mxu0 0.0
    %3119 = vmatprep.subr.mxu0 0.0
    %3120 = vmatpush1.msra.mxu0 %v70
    %3121 = vmatprep.subr.mxu0 0.0
    %3122 = vmatpush1.msra.mxu0 %v69
    %3123 = vmatprep.subr.mxu0 0.0
    %3124 = vmatpush1.msra.mxu0 %v68
    %3125 = vmatprep.subr.mxu0 0.0
    %3126 = vmatpush1.msra.mxu0 %v67
    %3127 = vmatprep.subr.mxu0 0.0
    %3128 = vmatpush2.msra.mxu0 0.0
    %3129 = vmatprep.subr.mxu0 0.0
    %3130 = vmatpush2.msra.mxu0 0.0
    %3131 = vmatprep.subr.mxu0 0.0
    %3132 = vmatpush2.msra.mxu0 0.0
    %3133 = vmatprep.subr.mxu0 0.0
    %3134 = vmatpush2.msra.mxu0 0.0
    %3135 = vmatprep.subr.mxu0 0.0
    %3136 = vmatpush2.msra.mxu0 0.0
    %3137 = vmatprep.subr.mxu0 0.0
    %3138 = vmatpush2.msra.mxu0 0.0
    %3139 = vmatprep.subr.mxu0 0.0
    %3140 = vmatpush2.msra.mxu0 0.0
    %3141 = vmatprep.subr.mxu0 0.0
    %3142 = vmatpush2.msra.mxu0 0.0
    %3143 = vmatprep.subr.mxu0 0.0
    %3144 = vmatpush2.msra.mxu0 0.0
    %3145 = vmatprep.subr.mxu0 0.0
    %3146 = vmatpush2.msra.mxu0 0.0
    %3147 = vmatprep.subr.mxu0 0.0
    %3148 = vmatpush2.msra.mxu0 0.0
    %3149 = vmatprep.subr.mxu0 0.0
    %3150 = vmatpush2.msra.mxu0 0.0
    %3151 = vmatprep.subr.mxu0 0.0
    %3152 = vmatpush2.msra.mxu0 0.0
    %3153 = vmatprep.subr.mxu0 0.0
    %3154 = vmatpush2.msra.mxu0 0.0
    %3155 = vmatprep.subr.mxu0 0.0
    %3156 = vmatpush2.msra.mxu0 0.0
    %3157 = vmatprep.subr.mxu0 0.0
    %3158 = vmatpush2.msra.mxu0 0.0
    %3159 = vmatprep.mubr.f32.mxu0 0.0
    %3160 = vmatmul.mubr.f32.gmra.mxu0 %v3093
    %v3161 = vpop.f32.mrf.mxu0
    %v3162 = vadd.f32 %v74, %v3161
    %v3163 = vpop.f32.mrf.mxu0
    %3164 = vdwg.mxu0
    %v3165 = vsel %vm587, %v3162, -inf
    %3166 = vmax.xlane.f32.xlu0 %v3165
    %v3167 = vpop.xlane.xlu0 %3166
    %v3168 = vsub.f32 %v3162, %v3167
    %v3169 = vmul.f32 %v3168, 1.442695
    %v3170 = vpow.pop %v3169
    %v3171 = vsel %vm587, %v3170, 0.0
    %3172 = vadd.xlane.f32.xlu0 %v3171
    %v3173 = vpop.xlane.xlu0 %3172
    %v3174 = vlog2.pop %v3173
    %v3175 = vmul.f32 %v3174, 0.6931472
    %v3176 = vsub.f32 %v3168, %v3175
    %3177 = vst.msk [vmem:[#allocation9 + $0x5] sm:$0x1] %vm587, %v3176
    %3178 = vrot.lane.b32.xlu0 %v3089, 32
    %v3179 = vpop.permute.xlu0 %3178
    %3181 = vst.msk [vmem:[#allocation9 + $0x5] sm:$0x1] %vm604, %v3179
    %3182 = vrot.lane.b32.xlu0 %v2833, 96
    %v3183 = vpop.permute.xlu0 %3182
    %3185 = vst.msk [vmem:[#allocation9 + $0x5] sm:$0x1] %vm609, %v3183
    %s3186 = sld [smem:[#allocation3 + $0x6]]
    %p3187 = scmp.gt.s32.totalorder %s3186, 0
    %s3188 = scalar_select %p3187, %s3186, 0
    %p3189 = scmp.lt.s32.totalorder %s3188, 63
    %s3190 = scalar_select %p3189, %s3188, 63
    %s3191 = smul.u32 %s3190, 8
    %s3192 = scalar_lea.vmem [#allocation7], %s3191
    %v3193 = vld [vmem:[%s3192] sm:$0x1]
    %v3195 = vsel %vm84, %v3193, 0
    %3197 = vmatprep.subr.mxu0 0.0
    %3198 = vmatpush1.msra.mxu0 0.0
    %3199 = vmatprep.subr.mxu0 0.0
    %3200 = vmatpush1.msra.mxu0 0.0
    %3201 = vmatprep.subr.mxu0 0.0
    %3202 = vmatpush1.msra.mxu0 0.0
    %3203 = vmatprep.subr.mxu0 0.0
    %3204 = vmatpush1.msra.mxu0 0.0
    %3205 = vmatprep.subr.mxu0 0.0
    %3206 = vmatpush1.msra.mxu0 0.0
    %3207 = vmatprep.subr.mxu0 0.0
    %3208 = vmatpush1.msra.mxu0 0.0
    %3209 = vmatprep.subr.mxu0 0.0
    %3210 = vmatpush1.msra.mxu0 0.0
    %3211 = vmatprep.subr.mxu0 0.0
    %3212 = vmatpush1.msra.mxu0 0.0
    %3213 = vmatprep.subr.mxu0 0.0
    %3214 = vmatpush1.msra.mxu0 0.0
    %3215 = vmatprep.subr.mxu0 0.0
    %3216 = vmatpush1.msra.mxu0 0.0
    %3217 = vmatprep.subr.mxu0 0.0
    %3218 = vmatpush1.msra.mxu0 0.0
    %3219 = vmatprep.subr.mxu0 0.0
    %3220 = vmatpush1.msra.mxu0 0.0
    %3221 = vmatprep.subr.mxu0 0.0
    %3222 = vmatpush1.msra.mxu0 %v58
    %3223 = vmatprep.subr.mxu0 0.0
    %3224 = vmatpush1.msra.mxu0 %v57
    %3225 = vmatprep.subr.mxu0 0.0
    %3226 = vmatpush1.msra.mxu0 %v56
    %3227 = vmatprep.subr.mxu0 0.0
    %3228 = vmatpush1.msra.mxu0 %v55
    %3229 = vmatprep.subr.mxu0 0.0
    %3230 = vmatpush2.msra.mxu0 0.0
    %3231 = vmatprep.subr.mxu0 0.0
    %3232 = vmatpush2.msra.mxu0 0.0
    %3233 = vmatprep.subr.mxu0 0.0
    %3234 = vmatpush2.msra.mxu0 0.0
    %3235 = vmatprep.subr.mxu0 0.0
    %3236 = vmatpush2.msra.mxu0 0.0
    %3237 = vmatprep.subr.mxu0 0.0
    %3238 = vmatpush2.msra.mxu0 0.0
    %3239 = vmatprep.subr.mxu0 0.0
    %3240 = vmatpush2.msra.mxu0 0.0
    %3241 = vmatprep.subr.mxu0 0.0
    %3242 = vmatpush2.msra.mxu0 0.0
    %3243 = vmatprep.subr.mxu0 0.0
    %3244 = vmatpush2.msra.mxu0 0.0
    %3245 = vmatprep.subr.mxu0 0.0
    %3246 = vmatpush2.msra.mxu0 0.0
    %3247 = vmatprep.subr.mxu0 0.0
    %3248 = vmatpush2.msra.mxu0 0.0
    %3249 = vmatprep.subr.mxu0 0.0
    %3250 = vmatpush2.msra.mxu0 0.0
    %3251 = vmatprep.subr.mxu0 0.0
    %3252 = vmatpush2.msra.mxu0 0.0
    %3253 = vmatprep.subr.mxu0 0.0
    %3254 = vmatpush2.msra.mxu0 0.0
    %3255 = vmatprep.subr.mxu0 0.0
    %3256 = vmatpush2.msra.mxu0 0.0
    %3257 = vmatprep.subr.mxu0 0.0
    %3258 = vmatpush2.msra.mxu0 0.0
    %3259 = vmatprep.subr.mxu0 0.0
    %3260 = vmatpush2.msra.mxu0 0.0
    %3261 = vmatprep.mubr.f32.mxu0 0.0
    %3262 = vmatmul.mubr.f32.gmra.mxu0 %v3195
    %v3263 = vpop.f32.mrf.mxu0
    %v3264 = vadd.f32 %v72, %v3263
    %v3265 = vpop.f32.mrf.mxu0
    %3266 = vdwg.mxu0
    %3267 = vmatprep.subr.mxu0 0.0
    %3268 = vmatpush1.msra.mxu0 0.0
    %3269 = vmatprep.subr.mxu0 0.0
    %3270 = vmatpush1.msra.mxu0 0.0
    %3271 = vmatprep.subr.mxu0 0.0
    %3272 = vmatpush1.msra.mxu0 0.0
    %3273 = vmatprep.subr.mxu0 0.0
    %3274 = vmatpush1.msra.mxu0 0.0
    %3275 = vmatprep.subr.mxu0 0.0
    %3276 = vmatpush1.msra.mxu0 0.0
    %3277 = vmatprep.subr.mxu0 0.0
    %3278 = vmatpush1.msra.mxu0 0.0
    %3279 = vmatprep.subr.mxu0 0.0
    %3280 = vmatpush1.msra.mxu0 0.0
    %3281 = vmatprep.subr.mxu0 0.0
    %3282 = vmatpush1.msra.mxu0 0.0
    %3283 = vmatprep.subr.mxu0 0.0
    %3284 = vmatpush1.msra.mxu0 0.0
    %3285 = vmatprep.subr.mxu0 0.0
    %3286 = vmatpush1.msra.mxu0 0.0
    %3287 = vmatprep.subr.mxu0 0.0
    %3288 = vmatpush1.msra.mxu0 0.0
    %3289 = vmatprep.subr.mxu0 0.0
    %3290 = vmatpush1.msra.mxu0 0.0
    %3291 = vmatprep.subr.mxu0 0.0
    %3292 = vmatpush1.msra.mxu0 %v54
    %3293 = vmatprep.subr.mxu0 0.0
    %3294 = vmatpush1.msra.mxu0 %v53
    %3295 = vmatprep.subr.mxu0 0.0
    %3296 = vmatpush1.msra.mxu0 %v52
    %3297 = vmatprep.subr.mxu0 0.0
    %3298 = vmatpush1.msra.mxu0 %v51
    %3299 = vmatprep.subr.mxu0 0.0
    %3300 = vmatpush2.msra.mxu0 0.0
    %3301 = vmatprep.subr.mxu0 0.0
    %3302 = vmatpush2.msra.mxu0 0.0
    %3303 = vmatprep.subr.mxu0 0.0
    %3304 = vmatpush2.msra.mxu0 0.0
    %3305 = vmatprep.subr.mxu0 0.0
    %3306 = vmatpush2.msra.mxu0 0.0
    %3307 = vmatprep.subr.mxu0 0.0
    %3308 = vmatpush2.msra.mxu0 0.0
    %3309 = vmatprep.subr.mxu0 0.0
    %3310 = vmatpush2.msra.mxu0 0.0
    %3311 = vmatprep.subr.mxu0 0.0
    %3312 = vmatpush2.msra.mxu0 0.0
    %3313 = vmatprep.subr.mxu0 0.0
    %3314 = vmatpush2.msra.mxu0 0.0
    %3315 = vmatprep.subr.mxu0 0.0
    %3316 = vmatpush2.msra.mxu0 0.0
    %3317 = vmatprep.subr.mxu0 0.0
    %3318 = vmatpush2.msra.mxu0 0.0
    %3319 = vmatprep.subr.mxu0 0.0
    %3320 = vmatpush2.msra.mxu0 0.0
    %3321 = vmatprep.subr.mxu0 0.0
    %3322 = vmatpush2.msra.mxu0 0.0
    %3323 = vmatprep.subr.mxu0 0.0
    %3324 = vmatpush2.msra.mxu0 0.0
    %3325 = vmatprep.subr.mxu0 0.0
    %3326 = vmatpush2.msra.mxu0 0.0
    %3327 = vmatprep.subr.mxu0 0.0
    %3328 = vmatpush2.msra.mxu0 0.0
    %3329 = vmatprep.subr.mxu0 0.0
    %3330 = vmatpush2.msra.mxu0 0.0
    %3331 = vmatprep.mubr.f32.mxu0 0.0
    %3332 = vmatmul.mubr.f32.gmra.mxu0 %v3093
    %v3333 = vpop.f32.mrf.mxu0
    %v3334 = vadd.f32 %v71, %v3333
    %v3335 = vpop.f32.mrf.mxu0
    %3336 = vdwg.mxu0
    %v3337 = vadd.f32 %v3264, %v3334
    %v3338 = vsel %vm232, %v3337, -inf
    %3339 = vmax.xlane.f32.xlu0 %v3338
    %v3340 = vpop.xlane.xlu0 %3339
    %v3341 = vsub.f32 %v3337, %v3340
    %v3342 = vmul.f32 %v3341, 1.442695
    %v3343 = vpow.pop %v3342
    %v3344 = vsel %vm232, %v3343, 0.0
    %3345 = vadd.xlane.f32.xlu0 %v3344
    %v3346 = vpop.xlane.xlu0 %3345
    %v3347 = vrcp.pop %v3346
    %v3348 = vmul.f32 %v3343, %v3347
    %v3350 = vsel %vm244, %v3348, 0
    %3352 = vmatprep.subr.mxu0 0.0
    %3353 = vmatpush1.msra.mxu0 0.0
    %3354 = vmatprep.subr.mxu0 0.0
    %3355 = vmatpush1.msra.mxu0 0.0
    %3356 = vmatprep.subr.mxu0 0.0
    %3357 = vmatpush1.msra.mxu0 0.0
    %3358 = vmatprep.subr.mxu0 0.0
    %3359 = vmatpush1.msra.mxu0 0.0
    %3360 = vmatprep.subr.mxu0 0.0
    %3361 = vmatpush1.msra.mxu0 0.0
    %3362 = vmatprep.subr.mxu0 0.0
    %3363 = vmatpush1.msra.mxu0 0.0
    %3364 = vmatprep.subr.mxu0 0.0
    %3365 = vmatpush1.msra.mxu0 0.0
    %3366 = vmatprep.subr.mxu0 0.0
    %3367 = vmatpush1.msra.mxu0 0.0
    %3368 = vmatprep.subr.mxu0 0.0
    %3369 = vmatpush1.msra.mxu0 0.0
    %3370 = vmatprep.subr.mxu0 0.0
    %3371 = vmatpush1.msra.mxu0 0.0
    %3372 = vmatprep.subr.mxu0 0.0
    %3373 = vmatpush1.msra.mxu0 0.0
    %3374 = vmatprep.subr.mxu0 0.0
    %3375 = vmatpush1.msra.mxu0 0.0
    %3376 = vmatprep.subr.mxu0 0.0
    %3377 = vmatpush1.msra.mxu0 0.0
    %3378 = vmatprep.subr.mxu0 0.0
    %3379 = vmatpush1.msra.mxu0 0.0
    %3380 = vmatprep.subr.mxu0 0.0
    %3381 = vmatpush1.msra.mxu0 %v250
    %3382 = vmatprep.subr.mxu0 0.0
    %3383 = vmatpush1.msra.mxu0 %v49
    %3384 = vmatprep.subr.mxu0 0.0
    %3385 = vmatpush2.msra.mxu0 0.0
    %3386 = vmatprep.subr.mxu0 0.0
    %3387 = vmatpush2.msra.mxu0 0.0
    %3388 = vmatprep.subr.mxu0 0.0
    %3389 = vmatpush2.msra.mxu0 0.0
    %3390 = vmatprep.subr.mxu0 0.0
    %3391 = vmatpush2.msra.mxu0 0.0
    %3392 = vmatprep.subr.mxu0 0.0
    %3393 = vmatpush2.msra.mxu0 0.0
    %3394 = vmatprep.subr.mxu0 0.0
    %3395 = vmatpush2.msra.mxu0 0.0
    %3396 = vmatprep.subr.mxu0 0.0
    %3397 = vmatpush2.msra.mxu0 0.0
    %3398 = vmatprep.subr.mxu0 0.0
    %3399 = vmatpush2.msra.mxu0 0.0
    %3400 = vmatprep.subr.mxu0 0.0
    %3401 = vmatpush2.msra.mxu0 0.0
    %3402 = vmatprep.subr.mxu0 0.0
    %3403 = vmatpush2.msra.mxu0 0.0
    %3404 = vmatprep.subr.mxu0 0.0
    %3405 = vmatpush2.msra.mxu0 0.0
    %3406 = vmatprep.subr.mxu0 0.0
    %3407 = vmatpush2.msra.mxu0 0.0
    %3408 = vmatprep.subr.mxu0 0.0
    %3409 = vmatpush2.msra.mxu0 0.0
    %3410 = vmatprep.subr.mxu0 0.0
    %3411 = vmatpush2.msra.mxu0 0.0
    %3412 = vmatprep.subr.mxu0 0.0
    %3413 = vmatpush2.msra.mxu0 0.0
    %3414 = vmatprep.subr.mxu0 0.0
    %3415 = vmatpush2.msra.mxu0 0.0
    %3416 = vmatprep.mubr.f32.mxu0 0.0
    %3417 = vmatmul.mubr.f32.gmra.mxu0 %v3350
    %v3418 = vpop.f32.mrf.mxu0
    %v3419 = vadd.f32 0.0, %v3418
    %v3420 = vpop.f32.mrf.mxu0
    %3421 = vdwg.mxu0
    %v3423 = vsel %vm84, %v3419, 0
    %3425 = vmatprep.subr.mxu0 0.0
    %3426 = vmatpush1.msra.mxu0 0.0
    %3427 = vmatprep.subr.mxu0 0.0
    %3428 = vmatpush1.msra.mxu0 0.0
    %3429 = vmatprep.subr.mxu0 0.0
    %3430 = vmatpush1.msra.mxu0 0.0
    %3431 = vmatprep.subr.mxu0 0.0
    %3432 = vmatpush1.msra.mxu0 0.0
    %3433 = vmatprep.subr.mxu0 0.0
    %3434 = vmatpush1.msra.mxu0 0.0
    %3435 = vmatprep.subr.mxu0 0.0
    %3436 = vmatpush1.msra.mxu0 0.0
    %3437 = vmatprep.subr.mxu0 0.0
    %3438 = vmatpush1.msra.mxu0 0.0
    %3439 = vmatprep.subr.mxu0 0.0
    %3440 = vmatpush1.msra.mxu0 0.0
    %3441 = vmatprep.subr.mxu0 0.0
    %3442 = vmatpush1.msra.mxu0 0.0
    %3443 = vmatprep.subr.mxu0 0.0
    %3444 = vmatpush1.msra.mxu0 0.0
    %3445 = vmatprep.subr.mxu0 0.0
    %3446 = vmatpush1.msra.mxu0 0.0
    %3447 = vmatprep.subr.mxu0 0.0
    %3448 = vmatpush1.msra.mxu0 0.0
    %3449 = vmatprep.subr.mxu0 0.0
    %3450 = vmatpush1.msra.mxu0 %v66
    %3451 = vmatprep.subr.mxu0 0.0
    %3452 = vmatpush1.msra.mxu0 %v65
    %3453 = vmatprep.subr.mxu0 0.0
    %3454 = vmatpush1.msra.mxu0 %v64
    %3455 = vmatprep.subr.mxu0 0.0
    %3456 = vmatpush1.msra.mxu0 %v63
    %3457 = vmatprep.subr.mxu0 0.0
    %3458 = vmatpush2.msra.mxu0 0.0
    %3459 = vmatprep.subr.mxu0 0.0
    %3460 = vmatpush2.msra.mxu0 0.0
    %3461 = vmatprep.subr.mxu0 0.0
    %3462 = vmatpush2.msra.mxu0 0.0
    %3463 = vmatprep.subr.mxu0 0.0
    %3464 = vmatpush2.msra.mxu0 0.0
    %3465 = vmatprep.subr.mxu0 0.0
    %3466 = vmatpush2.msra.mxu0 0.0
    %3467 = vmatprep.subr.mxu0 0.0
    %3468 = vmatpush2.msra.mxu0 0.0
    %3469 = vmatprep.subr.mxu0 0.0
    %3470 = vmatpush2.msra.mxu0 0.0
    %3471 = vmatprep.subr.mxu0 0.0
    %3472 = vmatpush2.msra.mxu0 0.0
    %3473 = vmatprep.subr.mxu0 0.0
    %3474 = vmatpush2.msra.mxu0 0.0
    %3475 = vmatprep.subr.mxu0 0.0
    %3476 = vmatpush2.msra.mxu0 0.0
    %3477 = vmatprep.subr.mxu0 0.0
    %3478 = vmatpush2.msra.mxu0 0.0
    %3479 = vmatprep.subr.mxu0 0.0
    %3480 = vmatpush2.msra.mxu0 0.0
    %3481 = vmatprep.subr.mxu0 0.0
    %3482 = vmatpush2.msra.mxu0 0.0
    %3483 = vmatprep.subr.mxu0 0.0
    %3484 = vmatpush2.msra.mxu0 0.0
    %3485 = vmatprep.subr.mxu0 0.0
    %3486 = vmatpush2.msra.mxu0 0.0
    %3487 = vmatprep.subr.mxu0 0.0
    %3488 = vmatpush2.msra.mxu0 0.0
    %3489 = vmatprep.mubr.f32.mxu0 0.0
    %3490 = vmatmul.mubr.f32.gmra.mxu0 %v3423
    %v3491 = vpop.f32.mrf.mxu0
    %v3492 = vadd.f32 0.0, %v3491
    %v3493 = vpop.f32.mrf.mxu0
    %3494 = vdwg.mxu0
    %3496 = vrot.lane.b32.xlu0 %v3492, 32
    %v3497 = vpop.permute.xlu0 %3496
    %v3499 = vadd.f32 %v3264, %v3497
    %v3500 = vmax.f32 %v3499, 0.0
    %3502 = vrot.lane.b32.xlu0 %v3500, 96
    %v3503 = vpop.permute.xlu0 %3502
    %v3504 = vsel %vm84, %v3503, 0
    %3506 = vmatprep.subr.mxu0 0.0
    %3507 = vmatpush1.msra.mxu0 0.0
    %3508 = vmatprep.subr.mxu0 0.0
    %3509 = vmatpush1.msra.mxu0 0.0
    %3510 = vmatprep.subr.mxu0 0.0
    %3511 = vmatpush1.msra.mxu0 0.0
    %3512 = vmatprep.subr.mxu0 0.0
    %3513 = vmatpush1.msra.mxu0 0.0
    %3514 = vmatprep.subr.mxu0 0.0
    %3515 = vmatpush1.msra.mxu0 0.0
    %3516 = vmatprep.subr.mxu0 0.0
    %3517 = vmatpush1.msra.mxu0 0.0
    %3518 = vmatprep.subr.mxu0 0.0
    %3519 = vmatpush1.msra.mxu0 0.0
    %3520 = vmatprep.subr.mxu0 0.0
    %3521 = vmatpush1.msra.mxu0 0.0
    %3522 = vmatprep.subr.mxu0 0.0
    %3523 = vmatpush1.msra.mxu0 0.0
    %3524 = vmatprep.subr.mxu0 0.0
    %3525 = vmatpush1.msra.mxu0 0.0
    %3526 = vmatprep.subr.mxu0 0.0
    %3527 = vmatpush1.msra.mxu0 0.0
    %3528 = vmatprep.subr.mxu0 0.0
    %3529 = vmatpush1.msra.mxu0 0.0
    %3530 = vmatprep.subr.mxu0 0.0
    %3531 = vmatpush1.msra.mxu0 %v62
    %3532 = vmatprep.subr.mxu0 0.0
    %3533 = vmatpush1.msra.mxu0 %v61
    %3534 = vmatprep.subr.mxu0 0.0
    %3535 = vmatpush1.msra.mxu0 %v60
    %3536 = vmatprep.subr.mxu0 0.0
    %3537 = vmatpush1.msra.mxu0 %v59
    %3538 = vmatprep.subr.mxu0 0.0
    %3539 = vmatpush2.msra.mxu0 0.0
    %3540 = vmatprep.subr.mxu0 0.0
    %3541 = vmatpush2.msra.mxu0 0.0
    %3542 = vmatprep.subr.mxu0 0.0
    %3543 = vmatpush2.msra.mxu0 0.0
    %3544 = vmatprep.subr.mxu0 0.0
    %3545 = vmatpush2.msra.mxu0 0.0
    %3546 = vmatprep.subr.mxu0 0.0
    %3547 = vmatpush2.msra.mxu0 0.0
    %3548 = vmatprep.subr.mxu0 0.0
    %3549 = vmatpush2.msra.mxu0 0.0
    %3550 = vmatprep.subr.mxu0 0.0
    %3551 = vmatpush2.msra.mxu0 0.0
    %3552 = vmatprep.subr.mxu0 0.0
    %3553 = vmatpush2.msra.mxu0 0.0
    %3554 = vmatprep.subr.mxu0 0.0
    %3555 = vmatpush2.msra.mxu0 0.0
    %3556 = vmatprep.subr.mxu0 0.0
    %3557 = vmatpush2.msra.mxu0 0.0
    %3558 = vmatprep.subr.mxu0 0.0
    %3559 = vmatpush2.msra.mxu0 0.0
    %3560 = vmatprep.subr.mxu0 0.0
    %3561 = vmatpush2.msra.mxu0 0.0
    %3562 = vmatprep.subr.mxu0 0.0
    %3563 = vmatpush2.msra.mxu0 0.0
    %3564 = vmatprep.subr.mxu0 0.0
    %3565 = vmatpush2.msra.mxu0 0.0
    %3566 = vmatprep.subr.mxu0 0.0
    %3567 = vmatpush2.msra.mxu0 0.0
    %3568 = vmatprep.subr.mxu0 0.0
    %3569 = vmatpush2.msra.mxu0 0.0
    %3570 = vmatprep.mubr.f32.mxu0 0.0
    %3571 = vmatmul.mubr.f32.gmra.mxu0 %v3504
    %v3572 = vpop.f32.mrf.mxu0
    %v3573 = vadd.f32 %v73, %v3572
    %v3574 = vpop.f32.mrf.mxu0
    %3575 = vdwg.mxu0
    %3577 = vrot.lane.b32.xlu0 %v3334, 96
    %v3578 = vpop.permute.xlu0 %3577
    %v3580 = vadd.f32 %v3573, %v3578
    %v3581 = vxor.u32 %v3580, 2147483648
    %v3582 = vmul.f32 %v3581, 1.442695
    %v3583 = vpow.pop %v3582
    %v3584 = vadd.f32 %v3583, 1.0
    %v3585 = vrcp.pop %v3584
    %v3586 = vmul.f32 1.0, %v3585
    %3587 = vrot.lane.b32.xlu0 %v3334, 32
    %v3588 = vpop.permute.xlu0 %3587
    %v3590 = vmul.f32 %v3586, %v3588
    %3592 = vrot.lane.b32.xlu0 %v3590, 64
    %v3593 = vpop.permute.xlu0 %3592
    %v3595 = vadd.f32 %v3573, %v3593
    %v3596 = vtanh.pop %v3595
    %v3597 = vsub.f32 1.0, %v3586
    %3599 = vrot.lane.b32.xlu0 %v3596, 96
    %v3600 = vpop.permute.xlu0 %3599
    %v3602 = vmul.f32 %v3597, %v3600
    %v3603 = vmul.f32 %v3586, %v3089
    %v3604 = vadd.f32 %v3602, %v3603
    %3606 = vrot.lane.b32.xlu0 %v3604, 96
    %v3607 = vpop.permute.xlu0 %3606
    %v3608 = vsel %vm84, %v3607, 0
    %3610 = vmatprep.subr.mxu0 0.0
    %3611 = vmatpush1.msra.mxu0 0.0
    %3612 = vmatprep.subr.mxu0 0.0
    %3613 = vmatpush1.msra.mxu0 0.0
    %3614 = vmatprep.subr.mxu0 0.0
    %3615 = vmatpush1.msra.mxu0 0.0
    %3616 = vmatprep.subr.mxu0 0.0
    %3617 = vmatpush1.msra.mxu0 0.0
    %3618 = vmatprep.subr.mxu0 0.0
    %3619 = vmatpush1.msra.mxu0 0.0
    %3620 = vmatprep.subr.mxu0 0.0
    %3621 = vmatpush1.msra.mxu0 0.0
    %3622 = vmatprep.subr.mxu0 0.0
    %3623 = vmatpush1.msra.mxu0 0.0
    %3624 = vmatprep.subr.mxu0 0.0
    %3625 = vmatpush1.msra.mxu0 0.0
    %3626 = vmatprep.subr.mxu0 0.0
    %3627 = vmatpush1.msra.mxu0 0.0
    %3628 = vmatprep.subr.mxu0 0.0
    %3629 = vmatpush1.msra.mxu0 0.0
    %3630 = vmatprep.subr.mxu0 0.0
    %3631 = vmatpush1.msra.mxu0 0.0
    %3632 = vmatprep.subr.mxu0 0.0
    %3633 = vmatpush1.msra.mxu0 0.0
    %3634 = vmatprep.subr.mxu0 0.0
    %3635 = vmatpush1.msra.mxu0 %v70
    %3636 = vmatprep.subr.mxu0 0.0
    %3637 = vmatpush1.msra.mxu0 %v69
    %3638 = vmatprep.subr.mxu0 0.0
    %3639 = vmatpush1.msra.mxu0 %v68
    %3640 = vmatprep.subr.mxu0 0.0
    %3641 = vmatpush1.msra.mxu0 %v67
    %3642 = vmatprep.subr.mxu0 0.0
    %3643 = vmatpush2.msra.mxu0 0.0
    %3644 = vmatprep.subr.mxu0 0.0
    %3645 = vmatpush2.msra.mxu0 0.0
    %3646 = vmatprep.subr.mxu0 0.0
    %3647 = vmatpush2.msra.mxu0 0.0
    %3648 = vmatprep.subr.mxu0 0.0
    %3649 = vmatpush2.msra.mxu0 0.0
    %3650 = vmatprep.subr.mxu0 0.0
    %3651 = vmatpush2.msra.mxu0 0.0
    %3652 = vmatprep.subr.mxu0 0.0
    %3653 = vmatpush2.msra.mxu0 0.0
    %3654 = vmatprep.subr.mxu0 0.0
    %3655 = vmatpush2.msra.mxu0 0.0
    %3656 = vmatprep.subr.mxu0 0.0
    %3657 = vmatpush2.msra.mxu0 0.0
    %3658 = vmatprep.subr.mxu0 0.0
    %3659 = vmatpush2.msra.mxu0 0.0
    %3660 = vmatprep.subr.mxu0 0.0
    %3661 = vmatpush2.msra.mxu0 0.0
    %3662 = vmatprep.subr.mxu0 0.0
    %3663 = vmatpush2.msra.mxu0 0.0
    %3664 = vmatprep.subr.mxu0 0.0
    %3665 = vmatpush2.msra.mxu0 0.0
    %3666 = vmatprep.subr.mxu0 0.0
    %3667 = vmatpush2.msra.mxu0 0.0
    %3668 = vmatprep.subr.mxu0 0.0
    %3669 = vmatpush2.msra.mxu0 0.0
    %3670 = vmatprep.subr.mxu0 0.0
    %3671 = vmatpush2.msra.mxu0 0.0
    %3672 = vmatprep.subr.mxu0 0.0
    %3673 = vmatpush2.msra.mxu0 0.0
    %3674 = vmatprep.mubr.f32.mxu0 0.0
    %3675 = vmatmul.mubr.f32.gmra.mxu0 %v3608
    %v3676 = vpop.f32.mrf.mxu0
    %v3677 = vadd.f32 %v74, %v3676
    %v3678 = vpop.f32.mrf.mxu0
    %3679 = vdwg.mxu0
    %v3680 = vsel %vm587, %v3677, -inf
    %3681 = vmax.xlane.f32.xlu0 %v3680
    %v3682 = vpop.xlane.xlu0 %3681
    %v3683 = vsub.f32 %v3677, %v3682
    %v3684 = vmul.f32 %v3683, 1.442695
    %v3685 = vpow.pop %v3684
    %v3686 = vsel %vm587, %v3685, 0.0
    %3687 = vadd.xlane.f32.xlu0 %v3686
    %v3688 = vpop.xlane.xlu0 %3687
    %v3689 = vlog2.pop %v3688
    %v3690 = vmul.f32 %v3689, 0.6931472
    %v3691 = vsub.f32 %v3683, %v3690
    %3692 = vst.msk [vmem:[#allocation9 + $0x6] sm:$0x1] %vm587, %v3691
    %3693 = vrot.lane.b32.xlu0 %v3604, 32
    %v3694 = vpop.permute.xlu0 %3693
    %3696 = vst.msk [vmem:[#allocation9 + $0x6] sm:$0x1] %vm604, %v3694
    %3697 = vrot.lane.b32.xlu0 %v3348, 96
    %v3698 = vpop.permute.xlu0 %3697
    %3700 = vst.msk [vmem:[#allocation9 + $0x6] sm:$0x1] %vm609, %v3698
    %s3701 = sld [smem:[#allocation3 + $0x7]]
    %p3702 = scmp.gt.s32.totalorder %s3701, 0
    %s3703 = scalar_select %p3702, %s3701, 0
    %p3704 = scmp.lt.s32.totalorder %s3703, 63
    %s3705 = scalar_select %p3704, %s3703, 63
    %s3706 = smul.u32 %s3705, 8
    %s3707 = scalar_lea.vmem [#allocation7], %s3706
    %v3708 = vld [vmem:[%s3707] sm:$0x1]
    %v3710 = vsel %vm84, %v3708, 0
    %3712 = vmatprep.subr.mxu0 0.0
    %3713 = vmatpush1.msra.mxu0 0.0
    %3714 = vmatprep.subr.mxu0 0.0
    %3715 = vmatpush1.msra.mxu0 0.0
    %3716 = vmatprep.subr.mxu0 0.0
    %3717 = vmatpush1.msra.mxu0 0.0
    %3718 = vmatprep.subr.mxu0 0.0
    %3719 = vmatpush1.msra.mxu0 0.0
    %3720 = vmatprep.subr.mxu0 0.0
    %3721 = vmatpush1.msra.mxu0 0.0
    %3722 = vmatprep.subr.mxu0 0.0
    %3723 = vmatpush1.msra.mxu0 0.0
    %3724 = vmatprep.subr.mxu0 0.0
    %3725 = vmatpush1.msra.mxu0 0.0
    %3726 = vmatprep.subr.mxu0 0.0
    %3727 = vmatpush1.msra.mxu0 0.0
    %3728 = vmatprep.subr.mxu0 0.0
    %3729 = vmatpush1.msra.mxu0 0.0
    %3730 = vmatprep.subr.mxu0 0.0
    %3731 = vmatpush1.msra.mxu0 0.0
    %3732 = vmatprep.subr.mxu0 0.0
    %3733 = vmatpush1.msra.mxu0 0.0
    %3734 = vmatprep.subr.mxu0 0.0
    %3735 = vmatpush1.msra.mxu0 0.0
    %3736 = vmatprep.subr.mxu0 0.0
    %3737 = vmatpush1.msra.mxu0 %v58
    %3738 = vmatprep.subr.mxu0 0.0
    %3739 = vmatpush1.msra.mxu0 %v57
    %3740 = vmatprep.subr.mxu0 0.0
    %3741 = vmatpush1.msra.mxu0 %v56
    %3742 = vmatprep.subr.mxu0 0.0
    %3743 = vmatpush1.msra.mxu0 %v55
    %3744 = vmatprep.subr.mxu0 0.0
    %3745 = vmatpush2.msra.mxu0 0.0
    %3746 = vmatprep.subr.mxu0 0.0
    %3747 = vmatpush2.msra.mxu0 0.0
    %3748 = vmatprep.subr.mxu0 0.0
    %3749 = vmatpush2.msra.mxu0 0.0
    %3750 = vmatprep.subr.mxu0 0.0
    %3751 = vmatpush2.msra.mxu0 0.0
    %3752 = vmatprep.subr.mxu0 0.0
    %3753 = vmatpush2.msra.mxu0 0.0
    %3754 = vmatprep.subr.mxu0 0.0
    %3755 = vmatpush2.msra.mxu0 0.0
    %3756 = vmatprep.subr.mxu0 0.0
    %3757 = vmatpush2.msra.mxu0 0.0
    %3758 = vmatprep.subr.mxu0 0.0
    %3759 = vmatpush2.msra.mxu0 0.0
    %3760 = vmatprep.subr.mxu0 0.0
    %3761 = vmatpush2.msra.mxu0 0.0
    %3762 = vmatprep.subr.mxu0 0.0
    %3763 = vmatpush2.msra.mxu0 0.0
    %3764 = vmatprep.subr.mxu0 0.0
    %3765 = vmatpush2.msra.mxu0 0.0
    %3766 = vmatprep.subr.mxu0 0.0
    %3767 = vmatpush2.msra.mxu0 0.0
    %3768 = vmatprep.subr.mxu0 0.0
    %3769 = vmatpush2.msra.mxu0 0.0
    %3770 = vmatprep.subr.mxu0 0.0
    %3771 = vmatpush2.msra.mxu0 0.0
    %3772 = vmatprep.subr.mxu0 0.0
    %3773 = vmatpush2.msra.mxu0 0.0
    %3774 = vmatprep.subr.mxu0 0.0
    %3775 = vmatpush2.msra.mxu0 0.0
    %3776 = vmatprep.mubr.f32.mxu0 0.0
    %3777 = vmatmul.mubr.f32.gmra.mxu0 %v3710
    %v3778 = vpop.f32.mrf.mxu0
    %v3779 = vadd.f32 %v72, %v3778
    %v3780 = vpop.f32.mrf.mxu0
    %3781 = vdwg.mxu0
    %3782 = vmatprep.subr.mxu0 0.0
    %3783 = vmatpush1.msra.mxu0 0.0
    %3784 = vmatprep.subr.mxu0 0.0
    %3785 = vmatpush1.msra.mxu0 0.0
    %3786 = vmatprep.subr.mxu0 0.0
    %3787 = vmatpush1.msra.mxu0 0.0
    %3788 = vmatprep.subr.mxu0 0.0
    %3789 = vmatpush1.msra.mxu0 0.0
    %3790 = vmatprep.subr.mxu0 0.0
    %3791 = vmatpush1.msra.mxu0 0.0
    %3792 = vmatprep.subr.mxu0 0.0
    %3793 = vmatpush1.msra.mxu0 0.0
    %3794 = vmatprep.subr.mxu0 0.0
    %3795 = vmatpush1.msra.mxu0 0.0
    %3796 = vmatprep.subr.mxu0 0.0
    %3797 = vmatpush1.msra.mxu0 0.0
    %3798 = vmatprep.subr.mxu0 0.0
    %3799 = vmatpush1.msra.mxu0 0.0
    %3800 = vmatprep.subr.mxu0 0.0
    %3801 = vmatpush1.msra.mxu0 0.0
    %3802 = vmatprep.subr.mxu0 0.0
    %3803 = vmatpush1.msra.mxu0 0.0
    %3804 = vmatprep.subr.mxu0 0.0
    %3805 = vmatpush1.msra.mxu0 0.0
    %3806 = vmatprep.subr.mxu0 0.0
    %3807 = vmatpush1.msra.mxu0 %v54
    %3808 = vmatprep.subr.mxu0 0.0
    %3809 = vmatpush1.msra.mxu0 %v53
    %3810 = vmatprep.subr.mxu0 0.0
    %3811 = vmatpush1.msra.mxu0 %v52
    %3812 = vmatprep.subr.mxu0 0.0
    %3813 = vmatpush1.msra.mxu0 %v51
    %3814 = vmatprep.subr.mxu0 0.0
    %3815 = vmatpush2.msra.mxu0 0.0
    %3816 = vmatprep.subr.mxu0 0.0
    %3817 = vmatpush2.msra.mxu0 0.0
    %3818 = vmatprep.subr.mxu0 0.0
    %3819 = vmatpush2.msra.mxu0 0.0
    %3820 = vmatprep.subr.mxu0 0.0
    %3821 = vmatpush2.msra.mxu0 0.0
    %3822 = vmatprep.subr.mxu0 0.0
    %3823 = vmatpush2.msra.mxu0 0.0
    %3824 = vmatprep.subr.mxu0 0.0
    %3825 = vmatpush2.msra.mxu0 0.0
    %3826 = vmatprep.subr.mxu0 0.0
    %3827 = vmatpush2.msra.mxu0 0.0
    %3828 = vmatprep.subr.mxu0 0.0
    %3829 = vmatpush2.msra.mxu0 0.0
    %3830 = vmatprep.subr.mxu0 0.0
    %3831 = vmatpush2.msra.mxu0 0.0
    %3832 = vmatprep.subr.mxu0 0.0
    %3833 = vmatpush2.msra.mxu0 0.0
    %3834 = vmatprep.subr.mxu0 0.0
    %3835 = vmatpush2.msra.mxu0 0.0
    %3836 = vmatprep.subr.mxu0 0.0
    %3837 = vmatpush2.msra.mxu0 0.0
    %3838 = vmatprep.subr.mxu0 0.0
    %3839 = vmatpush2.msra.mxu0 0.0
    %3840 = vmatprep.subr.mxu0 0.0
    %3841 = vmatpush2.msra.mxu0 0.0
    %3842 = vmatprep.subr.mxu0 0.0
    %3843 = vmatpush2.msra.mxu0 0.0
    %3844 = vmatprep.subr.mxu0 0.0
    %3845 = vmatpush2.msra.mxu0 0.0
    %3846 = vmatprep.mubr.f32.mxu0 0.0
    %3847 = vmatmul.mubr.f32.gmra.mxu0 %v3608
    %v3848 = vpop.f32.mrf.mxu0
    %v3849 = vadd.f32 %v71, %v3848
    %v3850 = vpop.f32.mrf.mxu0
    %3851 = vdwg.mxu0
    %v3852 = vadd.f32 %v3779, %v3849
    %v3853 = vsel %vm232, %v3852, -inf
    %3854 = vmax.xlane.f32.xlu0 %v3853
    %v3855 = vpop.xlane.xlu0 %3854
    %v3856 = vsub.f32 %v3852, %v3855
    %v3857 = vmul.f32 %v3856, 1.442695
    %v3858 = vpow.pop %v3857
    %v3859 = vsel %vm232, %v3858, 0.0
    %3860 = vadd.xlane.f32.xlu0 %v3859
    %v3861 = vpop.xlane.xlu0 %3860
    %v3862 = vrcp.pop %v3861
    %v3863 = vmul.f32 %v3858, %v3862
    %v3865 = vsel %vm244, %v3863, 0
    %3867 = vmatprep.subr.mxu0 0.0
    %3868 = vmatpush1.msra.mxu0 0.0
    %3869 = vmatprep.subr.mxu0 0.0
    %3870 = vmatpush1.msra.mxu0 0.0
    %3871 = vmatprep.subr.mxu0 0.0
    %3872 = vmatpush1.msra.mxu0 0.0
    %3873 = vmatprep.subr.mxu0 0.0
    %3874 = vmatpush1.msra.mxu0 0.0
    %3875 = vmatprep.subr.mxu0 0.0
    %3876 = vmatpush1.msra.mxu0 0.0
    %3877 = vmatprep.subr.mxu0 0.0
    %3878 = vmatpush1.msra.mxu0 0.0
    %3879 = vmatprep.subr.mxu0 0.0
    %3880 = vmatpush1.msra.mxu0 0.0
    %3881 = vmatprep.subr.mxu0 0.0
    %3882 = vmatpush1.msra.mxu0 0.0
    %3883 = vmatprep.subr.mxu0 0.0
    %3884 = vmatpush1.msra.mxu0 0.0
    %3885 = vmatprep.subr.mxu0 0.0
    %3886 = vmatpush1.msra.mxu0 0.0
    %3887 = vmatprep.subr.mxu0 0.0
    %3888 = vmatpush1.msra.mxu0 0.0
    %3889 = vmatprep.subr.mxu0 0.0
    %3890 = vmatpush1.msra.mxu0 0.0
    %3891 = vmatprep.subr.mxu0 0.0
    %3892 = vmatpush1.msra.mxu0 0.0
    %3893 = vmatprep.subr.mxu0 0.0
    %3894 = vmatpush1.msra.mxu0 0.0
    %3895 = vmatprep.subr.mxu0 0.0
    %3896 = vmatpush1.msra.mxu0 %v250
    %3897 = vmatprep.subr.mxu0 0.0
    %3898 = vmatpush1.msra.mxu0 %v49
    %3899 = vmatprep.subr.mxu0 0.0
    %3900 = vmatpush2.msra.mxu0 0.0
    %3901 = vmatprep.subr.mxu0 0.0
    %3902 = vmatpush2.msra.mxu0 0.0
    %3903 = vmatprep.subr.mxu0 0.0
    %3904 = vmatpush2.msra.mxu0 0.0
    %3905 = vmatprep.subr.mxu0 0.0
    %3906 = vmatpush2.msra.mxu0 0.0
    %3907 = vmatprep.subr.mxu0 0.0
    %3908 = vmatpush2.msra.mxu0 0.0
    %3909 = vmatprep.subr.mxu0 0.0
    %3910 = vmatpush2.msra.mxu0 0.0
    %3911 = vmatprep.subr.mxu0 0.0
    %3912 = vmatpush2.msra.mxu0 0.0
    %3913 = vmatprep.subr.mxu0 0.0
    %3914 = vmatpush2.msra.mxu0 0.0
    %3915 = vmatprep.subr.mxu0 0.0
    %3916 = vmatpush2.msra.mxu0 0.0
    %3917 = vmatprep.subr.mxu0 0.0
    %3918 = vmatpush2.msra.mxu0 0.0
    %3919 = vmatprep.subr.mxu0 0.0
    %3920 = vmatpush2.msra.mxu0 0.0
    %3921 = vmatprep.subr.mxu0 0.0
    %3922 = vmatpush2.msra.mxu0 0.0
    %3923 = vmatprep.subr.mxu0 0.0
    %3924 = vmatpush2.msra.mxu0 0.0
    %3925 = vmatprep.subr.mxu0 0.0
    %3926 = vmatpush2.msra.mxu0 0.0
    %3927 = vmatprep.subr.mxu0 0.0
    %3928 = vmatpush2.msra.mxu0 0.0
    %3929 = vmatprep.subr.mxu0 0.0
    %3930 = vmatpush2.msra.mxu0 0.0
    %3931 = vmatprep.mubr.f32.mxu0 0.0
    %3932 = vmatmul.mubr.f32.gmra.mxu0 %v3865
    %v3933 = vpop.f32.mrf.mxu0
    %v3934 = vadd.f32 0.0, %v3933
    %v3935 = vpop.f32.mrf.mxu0
    %3936 = vdwg.mxu0
    %v3938 = vsel %vm84, %v3934, 0
    %3940 = vmatprep.subr.mxu0 0.0
    %3941 = vmatpush1.msra.mxu0 0.0
    %3942 = vmatprep.subr.mxu0 0.0
    %3943 = vmatpush1.msra.mxu0 0.0
    %3944 = vmatprep.subr.mxu0 0.0
    %3945 = vmatpush1.msra.mxu0 0.0
    %3946 = vmatprep.subr.mxu0 0.0
    %3947 = vmatpush1.msra.mxu0 0.0
    %3948 = vmatprep.subr.mxu0 0.0
    %3949 = vmatpush1.msra.mxu0 0.0
    %3950 = vmatprep.subr.mxu0 0.0
    %3951 = vmatpush1.msra.mxu0 0.0
    %3952 = vmatprep.subr.mxu0 0.0
    %3953 = vmatpush1.msra.mxu0 0.0
    %3954 = vmatprep.subr.mxu0 0.0
    %3955 = vmatpush1.msra.mxu0 0.0
    %3956 = vmatprep.subr.mxu0 0.0
    %3957 = vmatpush1.msra.mxu0 0.0
    %3958 = vmatprep.subr.mxu0 0.0
    %3959 = vmatpush1.msra.mxu0 0.0
    %3960 = vmatprep.subr.mxu0 0.0
    %3961 = vmatpush1.msra.mxu0 0.0
    %3962 = vmatprep.subr.mxu0 0.0
    %3963 = vmatpush1.msra.mxu0 0.0
    %3964 = vmatprep.subr.mxu0 0.0
    %3965 = vmatpush1.msra.mxu0 %v66
    %3966 = vmatprep.subr.mxu0 0.0
    %3967 = vmatpush1.msra.mxu0 %v65
    %3968 = vmatprep.subr.mxu0 0.0
    %3969 = vmatpush1.msra.mxu0 %v64
    %3970 = vmatprep.subr.mxu0 0.0
    %3971 = vmatpush1.msra.mxu0 %v63
    %3972 = vmatprep.subr.mxu0 0.0
    %3973 = vmatpush2.msra.mxu0 0.0
    %3974 = vmatprep.subr.mxu0 0.0
    %3975 = vmatpush2.msra.mxu0 0.0
    %3976 = vmatprep.subr.mxu0 0.0
    %3977 = vmatpush2.msra.mxu0 0.0
    %3978 = vmatprep.subr.mxu0 0.0
    %3979 = vmatpush2.msra.mxu0 0.0
    %3980 = vmatprep.subr.mxu0 0.0
    %3981 = vmatpush2.msra.mxu0 0.0
    %3982 = vmatprep.subr.mxu0 0.0
    %3983 = vmatpush2.msra.mxu0 0.0
    %3984 = vmatprep.subr.mxu0 0.0
    %3985 = vmatpush2.msra.mxu0 0.0
    %3986 = vmatprep.subr.mxu0 0.0
    %3987 = vmatpush2.msra.mxu0 0.0
    %3988 = vmatprep.subr.mxu0 0.0
    %3989 = vmatpush2.msra.mxu0 0.0
    %3990 = vmatprep.subr.mxu0 0.0
    %3991 = vmatpush2.msra.mxu0 0.0
    %3992 = vmatprep.subr.mxu0 0.0
    %3993 = vmatpush2.msra.mxu0 0.0
    %3994 = vmatprep.subr.mxu0 0.0
    %3995 = vmatpush2.msra.mxu0 0.0
    %3996 = vmatprep.subr.mxu0 0.0
    %3997 = vmatpush2.msra.mxu0 0.0
    %3998 = vmatprep.subr.mxu0 0.0
    %3999 = vmatpush2.msra.mxu0 0.0
    %4000 = vmatprep.subr.mxu0 0.0
    %4001 = vmatpush2.msra.mxu0 0.0
    %4002 = vmatprep.subr.mxu0 0.0
    %4003 = vmatpush2.msra.mxu0 0.0
    %4004 = vmatprep.mubr.f32.mxu0 0.0
    %4005 = vmatmul.mubr.f32.gmra.mxu0 %v3938
    %v4006 = vpop.f32.mrf.mxu0
    %v4007 = vadd.f32 0.0, %v4006
    %v4008 = vpop.f32.mrf.mxu0
    %4009 = vdwg.mxu0
    %4011 = vrot.lane.b32.xlu0 %v4007, 32
    %v4012 = vpop.permute.xlu0 %4011
    %v4014 = vadd.f32 %v3779, %v4012
    %v4015 = vmax.f32 %v4014, 0.0
    %4017 = vrot.lane.b32.xlu0 %v4015, 96
    %v4018 = vpop.permute.xlu0 %4017
    %v4019 = vsel %vm84, %v4018, 0
    %4021 = vmatprep.subr.mxu0 0.0
    %4022 = vmatpush1.msra.mxu0 0.0
    %4023 = vmatprep.subr.mxu0 0.0
    %4024 = vmatpush1.msra.mxu0 0.0
    %4025 = vmatprep.subr.mxu0 0.0
    %4026 = vmatpush1.msra.mxu0 0.0
    %4027 = vmatprep.subr.mxu0 0.0
    %4028 = vmatpush1.msra.mxu0 0.0
    %4029 = vmatprep.subr.mxu0 0.0
    %4030 = vmatpush1.msra.mxu0 0.0
    %4031 = vmatprep.subr.mxu0 0.0
    %4032 = vmatpush1.msra.mxu0 0.0
    %4033 = vmatprep.subr.mxu0 0.0
    %4034 = vmatpush1.msra.mxu0 0.0
    %4035 = vmatprep.subr.mxu0 0.0
    %4036 = vmatpush1.msra.mxu0 0.0
    %4037 = vmatprep.subr.mxu0 0.0
    %4038 = vmatpush1.msra.mxu0 0.0
    %4039 = vmatprep.subr.mxu0 0.0
    %4040 = vmatpush1.msra.mxu0 0.0
    %4041 = vmatprep.subr.mxu0 0.0
    %4042 = vmatpush1.msra.mxu0 0.0
    %4043 = vmatprep.subr.mxu0 0.0
    %4044 = vmatpush1.msra.mxu0 0.0
    %4045 = vmatprep.subr.mxu0 0.0
    %4046 = vmatpush1.msra.mxu0 %v62
    %4047 = vmatprep.subr.mxu0 0.0
    %4048 = vmatpush1.msra.mxu0 %v61
    %4049 = vmatprep.subr.mxu0 0.0
    %4050 = vmatpush1.msra.mxu0 %v60
    %4051 = vmatprep.subr.mxu0 0.0
    %4052 = vmatpush1.msra.mxu0 %v59
    %4053 = vmatprep.subr.mxu0 0.0
    %4054 = vmatpush2.msra.mxu0 0.0
    %4055 = vmatprep.subr.mxu0 0.0
    %4056 = vmatpush2.msra.mxu0 0.0
    %4057 = vmatprep.subr.mxu0 0.0
    %4058 = vmatpush2.msra.mxu0 0.0
    %4059 = vmatprep.subr.mxu0 0.0
    %4060 = vmatpush2.msra.mxu0 0.0
    %4061 = vmatprep.subr.mxu0 0.0
    %4062 = vmatpush2.msra.mxu0 0.0
    %4063 = vmatprep.subr.mxu0 0.0
    %4064 = vmatpush2.msra.mxu0 0.0
    %4065 = vmatprep.subr.mxu0 0.0
    %4066 = vmatpush2.msra.mxu0 0.0
    %4067 = vmatprep.subr.mxu0 0.0
    %4068 = vmatpush2.msra.mxu0 0.0
    %4069 = vmatprep.subr.mxu0 0.0
    %4070 = vmatpush2.msra.mxu0 0.0
    %4071 = vmatprep.subr.mxu0 0.0
    %4072 = vmatpush2.msra.mxu0 0.0
    %4073 = vmatprep.subr.mxu0 0.0
    %4074 = vmatpush2.msra.mxu0 0.0
    %4075 = vmatprep.subr.mxu0 0.0
    %4076 = vmatpush2.msra.mxu0 0.0
    %4077 = vmatprep.subr.mxu0 0.0
    %4078 = vmatpush2.msra.mxu0 0.0
    %4079 = vmatprep.subr.mxu0 0.0
    %4080 = vmatpush2.msra.mxu0 0.0
    %4081 = vmatprep.subr.mxu0 0.0
    %4082 = vmatpush2.msra.mxu0 0.0
    %4083 = vmatprep.subr.mxu0 0.0
    %4084 = vmatpush2.msra.mxu0 0.0
    %4085 = vmatprep.mubr.f32.mxu0 0.0
    %4086 = vmatmul.mubr.f32.gmra.mxu0 %v4019
    %v4087 = vpop.f32.mrf.mxu0
    %v4088 = vadd.f32 %v73, %v4087
    %v4089 = vpop.f32.mrf.mxu0
    %4090 = vdwg.mxu0
    %4092 = vrot.lane.b32.xlu0 %v3849, 96
    %v4093 = vpop.permute.xlu0 %4092
    %v4095 = vadd.f32 %v4088, %v4093
    %v4096 = vxor.u32 %v4095, 2147483648
    %v4097 = vmul.f32 %v4096, 1.442695
    %v4098 = vpow.pop %v4097
    %v4099 = vadd.f32 %v4098, 1.0
    %v4100 = vrcp.pop %v4099
    %v4101 = vmul.f32 1.0, %v4100
    %4102 = vrot.lane.b32.xlu0 %v3849, 32
    %v4103 = vpop.permute.xlu0 %4102
    %v4105 = vmul.f32 %v4101, %v4103
    %4107 = vrot.lane.b32.xlu0 %v4105, 64
    %v4108 = vpop.permute.xlu0 %4107
    %v4110 = vadd.f32 %v4088, %v4108
    %v4111 = vtanh.pop %v4110
    %v4112 = vsub.f32 1.0, %v4101
    %4114 = vrot.lane.b32.xlu0 %v4111, 96
    %v4115 = vpop.permute.xlu0 %4114
    %v4117 = vmul.f32 %v4112, %v4115
    %v4118 = vmul.f32 %v4101, %v3604
    %v4119 = vadd.f32 %v4117, %v4118
    %4121 = vrot.lane.b32.xlu0 %v4119, 96
    %v4122 = vpop.permute.xlu0 %4121
    %v4123 = vsel %vm84, %v4122, 0
    %4125 = vmatprep.subr.mxu0 0.0
    %4126 = vmatpush1.msra.mxu0 0.0
    %4127 = vmatprep.subr.mxu0 0.0
    %4128 = vmatpush1.msra.mxu0 0.0
    %4129 = vmatprep.subr.mxu0 0.0
    %4130 = vmatpush1.msra.mxu0 0.0
    %4131 = vmatprep.subr.mxu0 0.0
    %4132 = vmatpush1.msra.mxu0 0.0
    %4133 = vmatprep.subr.mxu0 0.0
    %4134 = vmatpush1.msra.mxu0 0.0
    %4135 = vmatprep.subr.mxu0 0.0
    %4136 = vmatpush1.msra.mxu0 0.0
    %4137 = vmatprep.subr.mxu0 0.0
    %4138 = vmatpush1.msra.mxu0 0.0
    %4139 = vmatprep.subr.mxu0 0.0
    %4140 = vmatpush1.msra.mxu0 0.0
    %4141 = vmatprep.subr.mxu0 0.0
    %4142 = vmatpush1.msra.mxu0 0.0
    %4143 = vmatprep.subr.mxu0 0.0
    %4144 = vmatpush1.msra.mxu0 0.0
    %4145 = vmatprep.subr.mxu0 0.0
    %4146 = vmatpush1.msra.mxu0 0.0
    %4147 = vmatprep.subr.mxu0 0.0
    %4148 = vmatpush1.msra.mxu0 0.0
    %4149 = vmatprep.subr.mxu0 0.0
    %4150 = vmatpush1.msra.mxu0 %v70
    %4151 = vmatprep.subr.mxu0 0.0
    %4152 = vmatpush1.msra.mxu0 %v69
    %4153 = vmatprep.subr.mxu0 0.0
    %4154 = vmatpush1.msra.mxu0 %v68
    %4155 = vmatprep.subr.mxu0 0.0
    %4156 = vmatpush1.msra.mxu0 %v67
    %4157 = vmatprep.subr.mxu0 0.0
    %4158 = vmatpush2.msra.mxu0 0.0
    %4159 = vmatprep.subr.mxu0 0.0
    %4160 = vmatpush2.msra.mxu0 0.0
    %4161 = vmatprep.subr.mxu0 0.0
    %4162 = vmatpush2.msra.mxu0 0.0
    %4163 = vmatprep.subr.mxu0 0.0
    %4164 = vmatpush2.msra.mxu0 0.0
    %4165 = vmatprep.subr.mxu0 0.0
    %4166 = vmatpush2.msra.mxu0 0.0
    %4167 = vmatprep.subr.mxu0 0.0
    %4168 = vmatpush2.msra.mxu0 0.0
    %4169 = vmatprep.subr.mxu0 0.0
    %4170 = vmatpush2.msra.mxu0 0.0
    %4171 = vmatprep.subr.mxu0 0.0
    %4172 = vmatpush2.msra.mxu0 0.0
    %4173 = vmatprep.subr.mxu0 0.0
    %4174 = vmatpush2.msra.mxu0 0.0
    %4175 = vmatprep.subr.mxu0 0.0
    %4176 = vmatpush2.msra.mxu0 0.0
    %4177 = vmatprep.subr.mxu0 0.0
    %4178 = vmatpush2.msra.mxu0 0.0
    %4179 = vmatprep.subr.mxu0 0.0
    %4180 = vmatpush2.msra.mxu0 0.0
    %4181 = vmatprep.subr.mxu0 0.0
    %4182 = vmatpush2.msra.mxu0 0.0
    %4183 = vmatprep.subr.mxu0 0.0
    %4184 = vmatpush2.msra.mxu0 0.0
    %4185 = vmatprep.subr.mxu0 0.0
    %4186 = vmatpush2.msra.mxu0 0.0
    %4187 = vmatprep.subr.mxu0 0.0
    %4188 = vmatpush2.msra.mxu0 0.0
    %4189 = vmatprep.mubr.f32.mxu0 0.0
    %4190 = vmatmul.mubr.f32.gmra.mxu0 %v4123
    %v4191 = vpop.f32.mrf.mxu0
    %v4192 = vadd.f32 %v74, %v4191
    %v4193 = vpop.f32.mrf.mxu0
    %4194 = vdwg.mxu0
    %v4195 = vsel %vm587, %v4192, -inf
    %4196 = vmax.xlane.f32.xlu0 %v4195
    %v4197 = vpop.xlane.xlu0 %4196
    %v4198 = vsub.f32 %v4192, %v4197
    %v4199 = vmul.f32 %v4198, 1.442695
    %v4200 = vpow.pop %v4199
    %v4201 = vsel %vm587, %v4200, 0.0
    %4202 = vadd.xlane.f32.xlu0 %v4201
    %v4203 = vpop.xlane.xlu0 %4202
    %v4204 = vlog2.pop %v4203
    %v4205 = vmul.f32 %v4204, 0.6931472
    %v4206 = vsub.f32 %v4198, %v4205
    %4207 = vst.msk [vmem:[#allocation9 + $0x7] sm:$0x1] %vm587, %v4206
    %4208 = vrot.lane.b32.xlu0 %v4119, 32
    %v4209 = vpop.permute.xlu0 %4208
    %4211 = vst.msk [vmem:[#allocation9 + $0x7] sm:$0x1] %vm604, %v4209
    %4212 = vrot.lane.b32.xlu0 %v3863, 96
    %v4213 = vpop.permute.xlu0 %4212
    %4215 = vst.msk [vmem:[#allocation9 + $0x7] sm:$0x1] %vm609, %v4213
    // Predicated region
    $region22: #{tpu_custom_call.1} parent=1 // pred_check
      _
    $region23: #{tpu_custom_call.1} parent=1 // pred_check_branch
      %4217 = sbr.rel (0) target = $region25
    $region24: #{tpu_custom_call.1} parent=1 // pred_region
      %s4219 = ssub.s32 128, 128
      %4220 = vsyncadd [#allocation6], %s4219
      %s4222 = sshll.u32 [#allocation9], 4
      %s4223 = int_to_ptr.vmem [resolvable:$true] %s4222
      %4225 = dma.vmem_to_hbm [thread:$0]  %s4223, 128, %s4, [#allocation6]
    $region25: #{tpu_custom_call.1} parent=1 // pred_fallthru
      _
    // Predicated region
    $region26: #{tpu_custom_call.1} parent=1 // pred_check
      _
    $region27: #{tpu_custom_call.1} parent=1 // pred_check_branch
      %4227 = sbr.rel (0) target = $region29
    $region28: #{tpu_custom_call.1} parent=1 // pred_region
      %4228 = dma.done [#allocation6], 128
    $region29: #{tpu_custom_call.1} parent=1 // pred_fallthru
      _
    %4229 = vsyncpa [#allocation5], 1
    %4230 = vsyncpa [#allocation8], 1
    %4231 = vsyncpa [#allocation6], 1

</llo_original>
